<compile_context>
chip_gen: v6e
topology: v6e:2x2x1
jax: 0.10.0
libtpu: 0.0.40
codegen_flags: <defaults>
</compile_context>

<pallas_src>
import math
from functools import partial

import jax
import jax.numpy as jnp
from jax.experimental import pallas as pl
from jax.experimental.pallas import tpu as pltpu


def _ds(start, size, stride):
    return pl.ds(start, size) if stride == 1 else pl.ds(start, size, stride)


# --------------------------------------------------------------------------
# Kernel A: fused  Conv3x3x3(stride)+BN1+ReLU  and  Conv5x5x5(stride)+BN3
# over one shared pad=2 input slab.  Outputs h (left-branch input to conv2)
# and sc (shortcut), both lane-dense (rows, Wo*Cout).
# --------------------------------------------------------------------------
def _conv1_shortcut_kernel(x_ref, w1_ref, wsc_ref, b1_ref, b3_ref,
                           h_ref, sc_ref, *, td, ho, stride, wpcin, lanes):
    i = pl.program_id(1)
    rows = td * ho
    d_base = pl.multiple_of(i * (td * stride), td * stride)

    def conv(w_ref, k, off):
        # Accumulate in registers: rows*lanes is kept small by the D tiling,
        # and only k*k (9 / 25) fat matmuls are issued (taps packed into K).
        acc = jnp.zeros((rows, lanes), jnp.float32)
        t = 0
        for kd in range(k):
            for kh in range(k):
                slab = x_ref[_ds(d_base + kd + off, td, stride),
                             _ds(kh + off, ho, stride), :]
                acc = acc + jnp.dot(slab.reshape(rows, wpcin), w_ref[t],
                                    preferred_element_type=jnp.float32)
                t += 1
        return acc

    # left branch, first conv: 3x3x3 (pad=1 -> +1 offset inside the pad=2 slab)
    h = conv(w1_ref, 3, 1) + b1_ref[...]
    h_ref[...] = jnp.maximum(h, 0.0).astype(h_ref.dtype)

    # shortcut: 5x5x5 (pad=2 -> offset 0)
    sc = conv(wsc_ref, 5, 0) + b3_ref[...]
    sc_ref[...] = sc.astype(sc_ref.dtype)


# --------------------------------------------------------------------------
# Kernel B: Conv3x3x3(stride=1)+BN2 on h, fused residual add + final ReLU.
# --------------------------------------------------------------------------
def _conv2_res_kernel(hp_ref, w2_ref, b2_ref, res_ref, y_ref,
                      *, td, ho, wpcin, lanes):
    i = pl.program_id(1)
    rows = td * ho
    d_base = pl.multiple_of(i * td, td)

    acc = jnp.zeros((rows, lanes), jnp.float32)
    t = 0
    for kd in range(3):
        for kh in range(3):
            slab = hp_ref[pl.ds(d_base + kd, td), pl.ds(kh, ho), :]
            acc = acc + jnp.dot(slab.reshape(rows, wpcin), w2_ref[t],
                                preferred_element_type=jnp.float32)
            t += 1

    out = acc + b2_ref[...] + res_ref[...].astype(jnp.float32)
    y_ref[...] = jnp.maximum(out, 0.0).astype(y_ref.dtype)


# --------------------------------------------------------------------------
# Wrapper-side weight preparation: banded-in-W weight matrices.
#   band[t=(kd*k+kh), w_in*Cin+ci, w_out*Cout+co]
#       = w[kd, kh, w_in - (w_out*stride + w_off), ci, co] * bn_scale[co]
# --------------------------------------------------------------------------
def _band_weights(w_dhwio, bn_scale, wp, wo, stride, w_off):
    k = w_dhwio.shape[0]
    cin, cout = w_dhwio.shape[3], w_dhwio.shape[4]
    w_in = jnp.arange(wp)[:, None]
    w_out = jnp.arange(wo)[None, :]
    kw = w_in - (w_out * stride + w_off)                 # (wp, wo)
    valid = (kw >= 0) & (kw < k)
    kw_c = jnp.clip(kw, 0, k - 1)
    big = jnp.take(w_dhwio, kw_c, axis=2)                # (k, k, wp, wo, cin, cout)
    big = jnp.where(valid[None, None, :, :, None, None], big, 0.0)
    big = big * bn_scale[None, None, None, None, None, :]
    big = jnp.transpose(big, (0, 1, 2, 4, 3, 5))         # (k, k, wp, cin, wo, cout)
    return big.reshape(k * k, wp * cin, wo * cout)


def fold_bn(gamma, beta, mean, var, eps=1e-5):
    scale = gamma / jnp.sqrt(var + eps)
    return scale, beta - mean * scale


# --------------------------------------------------------------------------
# Block forward (matches the PyTorch module, inference-mode BN)
# --------------------------------------------------------------------------
def block_forward(x_ncdhw, params, *, stride=1, d_tile=None):
    """x: [B, Cin, D, H, W] (PyTorch NCDHW). Returns [B, Cout, Do, Ho, Wo]."""
    B, Cin, D, H, W = x_ncdhw.shape
    Cout = params["w1"].shape[-1]
    dt = x_ncdhw.dtype
    itemsize = jnp.dtype(dt).itemsize

    Do = (D - 1) // stride + 1
    Ho = (H - 1) // stride + 1
    Wo = (W - 1) // stride + 1
    lanes = Wo * Cout

    # spatial (D) tile: keep the per-step accumulator small, give pipeline depth
    if d_tile is None:
        d_tile = max(1, min(Do, 256 // max(Ho, 1)))
        while Do % d_tile:
            d_tile -= 1
    assert Do % d_tile == 0
    n_dt = Do // d_tile

    # channels-last, single shared pad=2 slab, (W, Cin) flattened onto lanes
    x_cl = jnp.transpose(x_ncdhw, (0, 2, 3, 4, 1))
    xp = jnp.pad(x_cl, ((0, 0), (2, 2), (2, 2), (2, 2), (0, 0)))
    Dp, Hp, Wp = D + 4, H + 4, W + 4
    xp = xp.reshape(B, Dp, Hp, Wp * Cin)

    s1, c1 = fold_bn(*params["bn1"])
    s2, c2 = fold_bn(*params["bn2"])
    s3, c3 = fold_bn(*params["bn3"])

    w1b = _band_weights(params["w1"], s1, Wp, Wo, stride, 1).astype(dt)
    wscb = _band_weights(params["w_sc"], s3, Wp, Wo, stride, 0).astype(dt)
    b1t = jnp.tile(c1, Wo).reshape(1, lanes).astype(jnp.float32)
    b3t = jnp.tile(c3, Wo).reshape(1, lanes).astype(jnp.float32)

    kern_a = partial(_conv1_shortcut_kernel, td=d_tile, ho=Ho, stride=stride,
                     wpcin=Wp * Cin, lanes=lanes)
    flops_a = 2 * B * Do * Ho * (Wp * Cin) * lanes * (9 + 25)
    bytes_a = int(xp.size * itemsize + (w1b.size + wscb.size) * itemsize
                  + 2 * B * Do * Ho * lanes * itemsize)

    h, sc = pl.pallas_call(
        kern_a,
        out_shape=(jax.ShapeDtypeStruct((B, Do * Ho, lanes), dt),
                   jax.ShapeDtypeStruct((B, Do * Ho, lanes), dt)),
        grid_spec=pltpu.PrefetchScalarGridSpec(
            num_scalar_prefetch=0,
            grid=(B, n_dt),
            in_specs=[
                # padded slab: block index constant across the D-tile axis ->
                # fetched once per batch element, shared by both convs
                pl.BlockSpec((None, Dp, Hp, Wp * Cin), lambda b, i: (b, 0, 0, 0)),
                pl.BlockSpec((9, Wp * Cin, lanes), lambda b, i: (0, 0, 0)),
                pl.BlockSpec((25, Wp * Cin, lanes), lambda b, i: (0, 0, 0)),
                pl.BlockSpec((1, lanes), lambda b, i: (0, 0)),
                pl.BlockSpec((1, lanes), lambda b, i: (0, 0)),
            ],
            out_specs=[
                pl.BlockSpec((None, d_tile * Ho, lanes), lambda b, i: (b, i, 0)),
                pl.BlockSpec((None, d_tile * Ho, lanes), lambda b, i: (b, i, 0)),
            ],
        ),
        compiler_params=pltpu.CompilerParams(
            dimension_semantics=("parallel", "parallel"),
            vmem_limit_bytes=32 * 1024 * 1024,
        ),
        cost_estimate=pl.CostEstimate(flops=flops_a, transcendentals=0,
                                      bytes_accessed=bytes_a),
    )(xp, w1b, wscb, b1t, b3t)

    # pad h by 1 for the second 3x3x3 conv (stride 1), keep lane-dense layout
    hp = h.reshape(B, Do, Ho, Wo, Cout)
    hp = jnp.pad(hp, ((0, 0), (1, 1), (1, 1), (1, 1), (0, 0)))
    Wp2 = Wo + 2
    hp = hp.reshape(B, Do + 2, Ho + 2, Wp2 * Cout)

    w2b = _band_weights(params["w2"], s2, Wp2, Wo, 1, 0).astype(dt)
    b2t = jnp.tile(c2, Wo).reshape(1, lanes).astype(jnp.float32)

    kern_b = partial(_conv2_res_kernel, td=d_tile, ho=Ho,
                     wpcin=Wp2 * Cout, lanes=lanes)
    flops_b = 2 * B * Do * Ho * (Wp2 * Cout) * lanes * 9
    bytes_b = int(hp.size * itemsize + w2b.size * itemsize
                  + 2 * B * Do * Ho * lanes * itemsize)

    y = pl.pallas_call(
        kern_b,
        out_shape=jax.ShapeDtypeStruct((B, Do * Ho, lanes), dt),
        grid_spec=pltpu.PrefetchScalarGridSpec(
            num_scalar_prefetch=0,
            grid=(B, n_dt),
            in_specs=[
                pl.BlockSpec((None, Do + 2, Ho + 2, Wp2 * Cout),
                             lambda b, i: (b, 0, 0, 0)),
                pl.BlockSpec((9, Wp2 * Cout, lanes), lambda b, i: (0, 0, 0)),
                pl.BlockSpec((1, lanes), lambda b, i: (0, 0)),
                pl.BlockSpec((None, d_tile * Ho, lanes), lambda b, i: (b, i, 0)),
            ],
            out_specs=pl.BlockSpec((None, d_tile * Ho, lanes),
                                   lambda b, i: (b, i, 0)),
        ),
        compiler_params=pltpu.CompilerParams(
            dimension_semantics=("parallel", "parallel"),
            vmem_limit_bytes=32 * 1024 * 1024,
        ),
        cost_estimate=pl.CostEstimate(flops=flops_b, transcendentals=0,
                                      bytes_accessed=bytes_b),
    )(hp, w2b, b2t, sc)

    y = y.reshape(B, Do, Ho, Wo, Cout)
    return jnp.transpose(y, (0, 4, 1, 2, 3))


# --------------------------------------------------------------------------
# Parameter init (PyTorch-like) and pure-JAX reference for correctness
# --------------------------------------------------------------------------
def init_block_params(key, in_channel, out_channel, dtype=jnp.float32):
    keys = jax.random.split(key, 6)

    def conv_w(k, cout, cin, ksz):
        lim = 1.0 / math.sqrt(cin * ksz ** 3)
        w = jax.random.uniform(k, (cout, cin, ksz, ksz, ksz), dtype, -lim, lim)
        return jnp.transpose(w, (2, 3, 4, 1, 0))        # OIDHW -> DHWIO

    def bn_params(k, c):
        k1, k2, k3, k4 = jax.random.split(k, 4)
        gamma = jax.random.uniform(k1, (c,), jnp.float32, 0.5, 1.5)
        beta = 0.1 * jax.random.normal(k2, (c,), jnp.float32)
        mean = 0.1 * jax.random.normal(k3, (c,), jnp.float32)
        var = jax.random.uniform(k4, (c,), jnp.float32, 0.5, 1.5)
        return gamma, beta, mean, var

    return {
        "w1": conv_w(keys[0], out_channel, in_channel, 3),
        "bn1": bn_params(keys[1], out_channel),
        "w2": conv_w(keys[2], out_channel, out_channel, 3),
        "bn2": bn_params(keys[3], out_channel),
        "w_sc": conv_w(keys[4], out_channel, in_channel, 5),
        "bn3": bn_params(keys[5], out_channel),
    }


def _conv3d_ref(x_cl, w_dhwio, stride, padding):
    return jax.lax.conv_general_dilated(
        x_cl, w_dhwio,
        window_strides=(stride, stride, stride),
        padding=[(padding, padding)] * 3,
        dimension_numbers=("NDHWC", "DHWIO", "NDHWC"))


def block_reference(x_ncdhw, params, *, stride=1):
    x_cl = jnp.transpose(x_ncdhw, (0, 2, 3, 4, 1))
    s1, c1 = fold_bn(*params["bn1"])
    s2, c2 = fold_bn(*params["bn2"])
    s3, c3 = fold_bn(*params["bn3"])
    h = jnp.maximum(_conv3d_ref(x_cl, params["w1"], stride, 1) * s1 + c1, 0.0)
    left = _conv3d_ref(h, params["w2"], 1, 1) * s2 + c2
    sc = _conv3d_ref(x_cl, params["w_sc"], stride, 2) * s3 + c3
    y = jnp.maximum(left + sc, 0.0)
    return jnp.transpose(y, (0, 4, 1, 2, 3))


if __name__ == "__main__":
    key = jax.random.PRNGKey(0)
    kx, kp = jax.random.split(key)

    # small shapes consistent with the module: NCDHW volume input
    B, Cin, Cout, D, H, W = 2, 4, 8, 8, 8, 8
    stride = 1
    x = jax.random.normal(kx, (B, Cin, D, H, W), dtype=jnp.float32)
    params = init_block_params(kp, Cin, Cout)

    # d_tile=4 -> grid=(B, 2): exercises the spatial tiling + resident-slab reuse
    y = block_forward(x, params, stride=stride, d_tile=4)
    y = jax.block_until_ready(y)

    y_ref = block_reference(x, params, stride=stride)
    assert y.shape == (B, Cout, D // stride, H // stride, W // stride), y.shape
    assert jnp.allclose(y, y_ref, atol=1e-4, rtol=1e-4), "mismatch vs reference"

    print("KERNEL_OK")
</pallas_src>

<mosaic_0001>
module attributes {stable_mosaic.version = 11 : i64} {
  func.func @_conv1_shortcut_kernel(%arg0: i32, %arg1: i32, %arg2: memref<1x12x12x48xf32, #tpu.memory_space<vmem>>, %arg3: memref<9x48x64xf32, #tpu.memory_space<vmem>>, %arg4: memref<25x48x64xf32, #tpu.memory_space<vmem>>, %arg5: memref<1x64xf32, #tpu.memory_space<vmem>>, %arg6: memref<1x64xf32, #tpu.memory_space<vmem>>, %arg7: memref<1x32x64xf32, #tpu.memory_space<vmem>>, %arg8: memref<1x32x64xf32, #tpu.memory_space<vmem>>) attributes {dimension_semantics = [#tpu.dimension_semantics<parallel>, #tpu.dimension_semantics<parallel>], iteration_bounds = array<i64: 2, 2>, scalar_prefetch = 0 : i64, scratch_operands = 0 : i64, tpu.core_type = #tpu.core_type<tc>, window_params = [{transform_indices = @transform_0, window_bounds = array<i64: 1, 12, 12, 48>}, {pipeline_mode = #tpu.pipeline_mode<synchronous>, transform_indices = @transform_1, window_bounds = array<i64: 9, 48, 64>}, {pipeline_mode = #tpu.pipeline_mode<synchronous>, transform_indices = @transform_2, window_bounds = array<i64: 25, 48, 64>}, {pipeline_mode = #tpu.pipeline_mode<synchronous>, transform_indices = @transform_3, window_bounds = array<i64: 1, 64>}, {pipeline_mode = #tpu.pipeline_mode<synchronous>, transform_indices = @transform_4, window_bounds = array<i64: 1, 64>}, {transform_indices = @transform_5, window_bounds = array<i64: 1, 32, 64>}, {transform_indices = @transform_6, window_bounds = array<i64: 1, 32, 64>}]} {
    %c4_i32 = arith.constant 4 : i32
    %0 = arith.muli %arg1, %c4_i32 : i32
    %1 = tpu.assume_multiple %0, 4 : i32
    %cst = arith.constant 0.000000e+00 : f32
    %2 = vector.broadcast %cst : f32 to vector<32x64xf32>
    %c0_i32 = arith.constant 0 : i32
    %3 = arith.addi %1, %c0_i32 : i32
    %c1_i32 = arith.constant 1 : i32
    %4 = arith.addi %3, %c1_i32 : i32
    %c0 = arith.constant 0 : index
    %5 = arith.index_cast %4 : i32 to index
    %c1 = arith.constant 1 : index
    %c0_0 = arith.constant 0 : index
    %6 = vector.load %arg2[%c0, %5, %c1, %c0_0] : memref<1x12x12x48xf32, #tpu.memory_space<vmem>>, vector<1x4x8x48xf32>
    %7 = vector.shape_cast %6 : vector<1x4x8x48xf32> to vector<4x8x48xf32>
    %8 = vector.shape_cast %7 : vector<4x8x48xf32> to vector<32x48xf32>
    %c0_1 = arith.constant 0 : index
    %c0_2 = arith.constant 0 : index
    %c0_3 = arith.constant 0 : index
    %9 = vector.load %arg3[%c0_1, %c0_2, %c0_3] : memref<9x48x64xf32, #tpu.memory_space<vmem>>, vector<1x48x64xf32>
    %10 = vector.shape_cast %9 : vector<1x48x64xf32> to vector<48x64xf32>
    %cst_4 = arith.constant dense<0.000000e+00> : vector<32x64xf32>
    %11 = tpu.matmul %8, %10, %cst_4 {dimension_numbers = #tpu.dot_dimension_numbers<[1], [0], [0], [1], [0, 0, 1, 1], [], []>} : vector<32x48xf32>, vector<48x64xf32>, vector<32x64xf32> -> vector<32x64xf32>
    %12 = arith.addf %2, %11 : vector<32x64xf32>
    %c0_i32_5 = arith.constant 0 : i32
    %13 = arith.addi %1, %c0_i32_5 : i32
    %c1_i32_6 = arith.constant 1 : i32
    %14 = arith.addi %13, %c1_i32_6 : i32
    %c0_7 = arith.constant 0 : index
    %15 = arith.index_cast %14 : i32 to index
    %c2 = arith.constant 2 : index
    %c0_8 = arith.constant 0 : index
    %16 = vector.load %arg2[%c0_7, %15, %c2, %c0_8] : memref<1x12x12x48xf32, #tpu.memory_space<vmem>>, vector<1x4x8x48xf32>
    %17 = vector.shape_cast %16 : vector<1x4x8x48xf32> to vector<4x8x48xf32>
    %18 = vector.shape_cast %17 : vector<4x8x48xf32> to vector<32x48xf32>
    %c1_9 = arith.constant 1 : index
    %c0_10 = arith.constant 0 : index
    %c0_11 = arith.constant 0 : index
    %19 = vector.load %arg3[%c1_9, %c0_10, %c0_11] : memref<9x48x64xf32, #tpu.memory_space<vmem>>, vector<1x48x64xf32>
    %20 = vector.shape_cast %19 : vector<1x48x64xf32> to vector<48x64xf32>
    %cst_12 = arith.constant dense<0.000000e+00> : vector<32x64xf32>
    %21 = tpu.matmul %18, %20, %cst_12 {dimension_numbers = #tpu.dot_dimension_numbers<[1], [0], [0], [1], [0, 0, 1, 1], [], []>} : vector<32x48xf32>, vector<48x64xf32>, vector<32x64xf32> -> vector<32x64xf32>
    %22 = arith.addf %12, %21 : vector<32x64xf32>
    %c0_i32_13 = arith.constant 0 : i32
    %23 = arith.addi %1, %c0_i32_13 : i32
    %c1_i32_14 = arith.constant 1 : i32
    %24 = arith.addi %23, %c1_i32_14 : i32
    %c0_15 = arith.constant 0 : index
    %25 = arith.index_cast %24 : i32 to index
    %c3 = arith.constant 3 : index
    %c0_16 = arith.constant 0 : index
    %26 = vector.load %arg2[%c0_15, %25, %c3, %c0_16] : memref<1x12x12x48xf32, #tpu.memory_space<vmem>>, vector<1x4x8x48xf32>
    %27 = vector.shape_cast %26 : vector<1x4x8x48xf32> to vector<4x8x48xf32>
    %28 = vector.shape_cast %27 : vector<4x8x48xf32> to vector<32x48xf32>
    %c2_17 = arith.constant 2 : index
    %c0_18 = arith.constant 0 : index
    %c0_19 = arith.constant 0 : index
    %29 = vector.load %arg3[%c2_17, %c0_18, %c0_19] : memref<9x48x64xf32, #tpu.memory_space<vmem>>, vector<1x48x64xf32>
    %30 = vector.shape_cast %29 : vector<1x48x64xf32> to vector<48x64xf32>
    %cst_20 = arith.constant dense<0.000000e+00> : vector<32x64xf32>
    %31 = tpu.matmul %28, %30, %cst_20 {dimension_numbers = #tpu.dot_dimension_numbers<[1], [0], [0], [1], [0, 0, 1, 1], [], []>} : vector<32x48xf32>, vector<48x64xf32>, vector<32x64xf32> -> vector<32x64xf32>
    %32 = arith.addf %22, %31 : vector<32x64xf32>
    %c1_i32_21 = arith.constant 1 : i32
    %33 = arith.addi %1, %c1_i32_21 : i32
    %c1_i32_22 = arith.constant 1 : i32
    %34 = arith.addi %33, %c1_i32_22 : i32
    %c0_23 = arith.constant 0 : index
    %35 = arith.index_cast %34 : i32 to index
    %c1_24 = arith.constant 1 : index
    %c0_25 = arith.constant 0 : index
    %36 = vector.load %arg2[%c0_23, %35, %c1_24, %c0_25] : memref<1x12x12x48xf32, #tpu.memory_space<vmem>>, vector<1x4x8x48xf32>
    %37 = vector.shape_cast %36 : vector<1x4x8x48xf32> to vector<4x8x48xf32>
    %38 = vector.shape_cast %37 : vector<4x8x48xf32> to vector<32x48xf32>
    %c3_26 = arith.constant 3 : index
    %c0_27 = arith.constant 0 : index
    %c0_28 = arith.constant 0 : index
    %39 = vector.load %arg3[%c3_26, %c0_27, %c0_28] : memref<9x48x64xf32, #tpu.memory_space<vmem>>, vector<1x48x64xf32>
    %40 = vector.shape_cast %39 : vector<1x48x64xf32> to vector<48x64xf32>
    %cst_29 = arith.constant dense<0.000000e+00> : vector<32x64xf32>
    %41 = tpu.matmul %38, %40, %cst_29 {dimension_numbers = #tpu.dot_dimension_numbers<[1], [0], [0], [1], [0, 0, 1, 1], [], []>} : vector<32x48xf32>, vector<48x64xf32>, vector<32x64xf32> -> vector<32x64xf32>
    %42 = arith.addf %32, %41 : vector<32x64xf32>
    %c1_i32_30 = arith.constant 1 : i32
    %43 = arith.addi %1, %c1_i32_30 : i32
    %c1_i32_31 = arith.constant 1 : i32
    %44 = arith.addi %43, %c1_i32_31 : i32
    %c0_32 = arith.constant 0 : index
    %45 = arith.index_cast %44 : i32 to index
    %c2_33 = arith.constant 2 : index
    %c0_34 = arith.constant 0 : index
    %46 = vector.load %arg2[%c0_32, %45, %c2_33, %c0_34] : memref<1x12x12x48xf32, #tpu.memory_space<vmem>>, vector<1x4x8x48xf32>
    %47 = vector.shape_cast %46 : vector<1x4x8x48xf32> to vector<4x8x48xf32>
    %48 = vector.shape_cast %47 : vector<4x8x48xf32> to vector<32x48xf32>
    %c4 = arith.constant 4 : index
    %c0_35 = arith.constant 0 : index
    %c0_36 = arith.constant 0 : index
    %49 = vector.load %arg3[%c4, %c0_35, %c0_36] : memref<9x48x64xf32, #tpu.memory_space<vmem>>, vector<1x48x64xf32>
    %50 = vector.shape_cast %49 : vector<1x48x64xf32> to vector<48x64xf32>
    %cst_37 = arith.constant dense<0.000000e+00> : vector<32x64xf32>
    %51 = tpu.matmul %48, %50, %cst_37 {dimension_numbers = #tpu.dot_dimension_numbers<[1], [0], [0], [1], [0, 0, 1, 1], [], []>} : vector<32x48xf32>, vector<48x64xf32>, vector<32x64xf32> -> vector<32x64xf32>
    %52 = arith.addf %42, %51 : vector<32x64xf32>
    %c1_i32_38 = arith.constant 1 : i32
    %53 = arith.addi %1, %c1_i32_38 : i32
    %c1_i32_39 = arith.constant 1 : i32
    %54 = arith.addi %53, %c1_i32_39 : i32
    %c0_40 = arith.constant 0 : index
    %55 = arith.index_cast %54 : i32 to index
    %c3_41 = arith.constant 3 : index
    %c0_42 = arith.constant 0 : index
    %56 = vector.load %arg2[%c0_40, %55, %c3_41, %c0_42] : memref<1x12x12x48xf32, #tpu.memory_space<vmem>>, vector<1x4x8x48xf32>
    %57 = vector.shape_cast %56 : vector<1x4x8x48xf32> to vector<4x8x48xf32>
    %58 = vector.shape_cast %57 : vector<4x8x48xf32> to vector<32x48xf32>
    %c5 = arith.constant 5 : index
    %c0_43 = arith.constant 0 : index
    %c0_44 = arith.constant 0 : index
    %59 = vector.load %arg3[%c5, %c0_43, %c0_44] : memref<9x48x64xf32, #tpu.memory_space<vmem>>, vector<1x48x64xf32>
    %60 = vector.shape_cast %59 : vector<1x48x64xf32> to vector<48x64xf32>
    %cst_45 = arith.constant dense<0.000000e+00> : vector<32x64xf32>
    %61 = tpu.matmul %58, %60, %cst_45 {dimension_numbers = #tpu.dot_dimension_numbers<[1], [0], [0], [1], [0, 0, 1, 1], [], []>} : vector<32x48xf32>, vector<48x64xf32>, vector<32x64xf32> -> vector<32x64xf32>
    %62 = arith.addf %52, %61 : vector<32x64xf32>
    %c2_i32 = arith.constant 2 : i32
    %63 = arith.addi %1, %c2_i32 : i32
    %c1_i32_46 = arith.constant 1 : i32
    %64 = arith.addi %63, %c1_i32_46 : i32
    %c0_47 = arith.constant 0 : index
    %65 = arith.index_cast %64 : i32 to index
    %c1_48 = arith.constant 1 : index
    %c0_49 = arith.constant 0 : index
    %66 = vector.load %arg2[%c0_47, %65, %c1_48, %c0_49] : memref<1x12x12x48xf32, #tpu.memory_space<vmem>>, vector<1x4x8x48xf32>
    %67 = vector.shape_cast %66 : vector<1x4x8x48xf32> to vector<4x8x48xf32>
    %68 = vector.shape_cast %67 : vector<4x8x48xf32> to vector<32x48xf32>
    %c6 = arith.constant 6 : index
    %c0_50 = arith.constant 0 : index
    %c0_51 = arith.constant 0 : index
    %69 = vector.load %arg3[%c6, %c0_50, %c0_51] : memref<9x48x64xf32, #tpu.memory_space<vmem>>, vector<1x48x64xf32>
    %70 = vector.shape_cast %69 : vector<1x48x64xf32> to vector<48x64xf32>
    %cst_52 = arith.constant dense<0.000000e+00> : vector<32x64xf32>
    %71 = tpu.matmul %68, %70, %cst_52 {dimension_numbers = #tpu.dot_dimension_numbers<[1], [0], [0], [1], [0, 0, 1, 1], [], []>} : vector<32x48xf32>, vector<48x64xf32>, vector<32x64xf32> -> vector<32x64xf32>
    %72 = arith.addf %62, %71 : vector<32x64xf32>
    %c2_i32_53 = arith.constant 2 : i32
    %73 = arith.addi %1, %c2_i32_53 : i32
    %c1_i32_54 = arith.constant 1 : i32
    %74 = arith.addi %73, %c1_i32_54 : i32
    %c0_55 = arith.constant 0 : index
    %75 = arith.index_cast %74 : i32 to index
    %c2_56 = arith.constant 2 : index
    %c0_57 = arith.constant 0 : index
    %76 = vector.load %arg2[%c0_55, %75, %c2_56, %c0_57] : memref<1x12x12x48xf32, #tpu.memory_space<vmem>>, vector<1x4x8x48xf32>
    %77 = vector.shape_cast %76 : vector<1x4x8x48xf32> to vector<4x8x48xf32>
    %78 = vector.shape_cast %77 : vector<4x8x48xf32> to vector<32x48xf32>
    %c7 = arith.constant 7 : index
    %c0_58 = arith.constant 0 : index
    %c0_59 = arith.constant 0 : index
    %79 = vector.load %arg3[%c7, %c0_58, %c0_59] : memref<9x48x64xf32, #tpu.memory_space<vmem>>, vector<1x48x64xf32>
    %80 = vector.shape_cast %79 : vector<1x48x64xf32> to vector<48x64xf32>
    %cst_60 = arith.constant dense<0.000000e+00> : vector<32x64xf32>
    %81 = tpu.matmul %78, %80, %cst_60 {dimension_numbers = #tpu.dot_dimension_numbers<[1], [0], [0], [1], [0, 0, 1, 1], [], []>} : vector<32x48xf32>, vector<48x64xf32>, vector<32x64xf32> -> vector<32x64xf32>
    %82 = arith.addf %72, %81 : vector<32x64xf32>
    %c2_i32_61 = arith.constant 2 : i32
    %83 = arith.addi %1, %c2_i32_61 : i32
    %c1_i32_62 = arith.constant 1 : i32
    %84 = arith.addi %83, %c1_i32_62 : i32
    %c0_63 = arith.constant 0 : index
    %85 = arith.index_cast %84 : i32 to index
    %c3_64 = arith.constant 3 : index
    %c0_65 = arith.constant 0 : index
    %86 = vector.load %arg2[%c0_63, %85, %c3_64, %c0_65] : memref<1x12x12x48xf32, #tpu.memory_space<vmem>>, vector<1x4x8x48xf32>
    %87 = vector.shape_cast %86 : vector<1x4x8x48xf32> to vector<4x8x48xf32>
    %88 = vector.shape_cast %87 : vector<4x8x48xf32> to vector<32x48xf32>
    %c8 = arith.constant 8 : index
    %c0_66 = arith.constant 0 : index
    %c0_67 = arith.constant 0 : index
    %89 = vector.load %arg3[%c8, %c0_66, %c0_67] : memref<9x48x64xf32, #tpu.memory_space<vmem>>, vector<1x48x64xf32>
    %90 = vector.shape_cast %89 : vector<1x48x64xf32> to vector<48x64xf32>
    %cst_68 = arith.constant dense<0.000000e+00> : vector<32x64xf32>
    %91 = tpu.matmul %88, %90, %cst_68 {dimension_numbers = #tpu.dot_dimension_numbers<[1], [0], [0], [1], [0, 0, 1, 1], [], []>} : vector<32x48xf32>, vector<48x64xf32>, vector<32x64xf32> -> vector<32x64xf32>
    %92 = arith.addf %82, %91 : vector<32x64xf32>
    %c0_69 = arith.constant 0 : index
    %c0_70 = arith.constant 0 : index
    %93 = vector.load %arg5[%c0_69, %c0_70] : memref<1x64xf32, #tpu.memory_space<vmem>>, vector<1x64xf32>
    %94 = vector.broadcast %93 : vector<1x64xf32> to vector<32x64xf32>
    %95 = arith.addf %92, %94 : vector<32x64xf32>
    %cst_71 = arith.constant 0.000000e+00 : f32
    %96 = vector.broadcast %cst_71 : f32 to vector<32x64xf32>
    %97 = arith.maximumf %95, %96 : vector<32x64xf32>
    %c0_72 = arith.constant 0 : index
    %c0_73 = arith.constant 0 : index
    %c0_74 = arith.constant 0 : index
    %98 = vector.load %arg7[%c0_72, %c0_73, %c0_74] : memref<1x32x64xf32, #tpu.memory_space<vmem>>, vector<1x32x64xf32>
    %99 = vector.shape_cast %98 : vector<1x32x64xf32> to vector<32x64xf32>
    %100 = vector.shape_cast %97 : vector<32x64xf32> to vector<1x32x64xf32>
    tpu.vector_store %arg7[%c0_72, %c0_73, %c0_74], %100 {strides = array<i32>} : memref<1x32x64xf32, #tpu.memory_space<vmem>>, vector<1x32x64xf32>,
    %cst_75 = arith.constant 0.000000e+00 : f32
    %101 = vector.broadcast %cst_75 : f32 to vector<32x64xf32>
    %c0_i32_76 = arith.constant 0 : i32
    %102 = arith.addi %1, %c0_i32_76 : i32
    %c0_i32_77 = arith.constant 0 : i32
    %103 = arith.addi %102, %c0_i32_77 : i32
    %c0_78 = arith.constant 0 : index
    %104 = arith.index_cast %103 : i32 to index
    %c0_79 = arith.constant 0 : index
    %c0_80 = arith.constant 0 : index
    %105 = vector.load %arg2[%c0_78, %104, %c0_79, %c0_80] : memref<1x12x12x48xf32, #tpu.memory_space<vmem>>, vector<1x4x8x48xf32>
    %106 = vector.shape_cast %105 : vector<1x4x8x48xf32> to vector<4x8x48xf32>
    %107 = vector.shape_cast %106 : vector<4x8x48xf32> to vector<32x48xf32>
    %c0_81 = arith.constant 0 : index
    %c0_82 = arith.constant 0 : index
    %c0_83 = arith.constant 0 : index
    %108 = vector.load %arg4[%c0_81, %c0_82, %c0_83] : memref<25x48x64xf32, #tpu.memory_space<vmem>>, vector<1x48x64xf32>
    %109 = vector.shape_cast %108 : vector<1x48x64xf32> to vector<48x64xf32>
    %cst_84 = arith.constant dense<0.000000e+00> : vector<32x64xf32>
    %110 = tpu.matmul %107, %109, %cst_84 {dimension_numbers = #tpu.dot_dimension_numbers<[1], [0], [0], [1], [0, 0, 1, 1], [], []>} : vector<32x48xf32>, vector<48x64xf32>, vector<32x64xf32> -> vector<32x64xf32>
    %111 = arith.addf %101, %110 : vector<32x64xf32>
    %c0_i32_85 = arith.constant 0 : i32
    %112 = arith.addi %1, %c0_i32_85 : i32
    %c0_i32_86 = arith.constant 0 : i32
    %113 = arith.addi %112, %c0_i32_86 : i32
    %c0_87 = arith.constant 0 : index
    %114 = arith.index_cast %113 : i32 to index
    %c1_88 = arith.constant 1 : index
    %c0_89 = arith.constant 0 : index
    %115 = vector.load %arg2[%c0_87, %114, %c1_88, %c0_89] : memref<1x12x12x48xf32, #tpu.memory_space<vmem>>, vector<1x4x8x48xf32>
    %116 = vector.shape_cast %115 : vector<1x4x8x48xf32> to vector<4x8x48xf32>
    %117 = vector.shape_cast %116 : vector<4x8x48xf32> to vector<32x48xf32>
    %c1_90 = arith.constant 1 : index
    %c0_91 = arith.constant 0 : index
    %c0_92 = arith.constant 0 : index
    %118 = vector.load %arg4[%c1_90, %c0_91, %c0_92] : memref<25x48x64xf32, #tpu.memory_space<vmem>>, vector<1x48x64xf32>
    %119 = vector.shape_cast %118 : vector<1x48x64xf32> to vector<48x64xf32>
    %cst_93 = arith.constant dense<0.000000e+00> : vector<32x64xf32>
    %120 = tpu.matmul %117, %119, %cst_93 {dimension_numbers = #tpu.dot_dimension_numbers<[1], [0], [0], [1], [0, 0, 1, 1], [], []>} : vector<32x48xf32>, vector<48x64xf32>, vector<32x64xf32> -> vector<32x64xf32>
    %121 = arith.addf %111, %120 : vector<32x64xf32>
    %c0_i32_94 = arith.constant 0 : i32
    %122 = arith.addi %1, %c0_i32_94 : i32
    %c0_i32_95 = arith.constant 0 : i32
    %123 = arith.addi %122, %c0_i32_95 : i32
    %c0_96 = arith.constant 0 : index
    %124 = arith.index_cast %123 : i32 to index
    %c2_97 = arith.constant 2 : index
    %c0_98 = arith.constant 0 : index
    %125 = vector.load %arg2[%c0_96, %124, %c2_97, %c0_98] : memref<1x12x12x48xf32, #tpu.memory_space<vmem>>, vector<1x4x8x48xf32>
    %126 = vector.shape_cast %125 : vector<1x4x8x48xf32> to vector<4x8x48xf32>
    %127 = vector.shape_cast %126 : vector<4x8x48xf32> to vector<32x48xf32>
    %c2_99 = arith.constant 2 : index
    %c0_100 = arith.constant 0 : index
    %c0_101 = arith.constant 0 : index
    %128 = vector.load %arg4[%c2_99, %c0_100, %c0_101] : memref<25x48x64xf32, #tpu.memory_space<vmem>>, vector<1x48x64xf32>
    %129 = vector.shape_cast %128 : vector<1x48x64xf32> to vector<48x64xf32>
    %cst_102 = arith.constant dense<0.000000e+00> : vector<32x64xf32>
    %130 = tpu.matmul %127, %129, %cst_102 {dimension_numbers = #tpu.dot_dimension_numbers<[1], [0], [0], [1], [0, 0, 1, 1], [], []>} : vector<32x48xf32>, vector<48x64xf32>, vector<32x64xf32> -> vector<32x64xf32>
    %131 = arith.addf %121, %130 : vector<32x64xf32>
    %c0_i32_103 = arith.constant 0 : i32
    %132 = arith.addi %1, %c0_i32_103 : i32
    %c0_i32_104 = arith.constant 0 : i32
    %133 = arith.addi %132, %c0_i32_104 : i32
    %c0_105 = arith.constant 0 : index
    %134 = arith.index_cast %133 : i32 to index
    %c3_106 = arith.constant 3 : index
    %c0_107 = arith.constant 0 : index
    %135 = vector.load %arg2[%c0_105, %134, %c3_106, %c0_107] : memref<1x12x12x48xf32, #tpu.memory_space<vmem>>, vector<1x4x8x48xf32>
    %136 = vector.shape_cast %135 : vector<1x4x8x48xf32> to vector<4x8x48xf32>
    %137 = vector.shape_cast %136 : vector<4x8x48xf32> to vector<32x48xf32>
    %c3_108 = arith.constant 3 : index
    %c0_109 = arith.constant 0 : index
    %c0_110 = arith.constant 0 : index
    %138 = vector.load %arg4[%c3_108, %c0_109, %c0_110] : memref<25x48x64xf32, #tpu.memory_space<vmem>>, vector<1x48x64xf32>
    %139 = vector.shape_cast %138 : vector<1x48x64xf32> to vector<48x64xf32>
    %cst_111 = arith.constant dense<0.000000e+00> : vector<32x64xf32>
    %140 = tpu.matmul %137, %139, %cst_111 {dimension_numbers = #tpu.dot_dimension_numbers<[1], [0], [0], [1], [0, 0, 1, 1], [], []>} : vector<32x48xf32>, vector<48x64xf32>, vector<32x64xf32> -> vector<32x64xf32>
    %141 = arith.addf %131, %140 : vector<32x64xf32>
    %c0_i32_112 = arith.constant 0 : i32
    %142 = arith.addi %1, %c0_i32_112 : i32
    %c0_i32_113 = arith.constant 0 : i32
    %143 = arith.addi %142, %c0_i32_113 : i32
    %c0_114 = arith.constant 0 : index
    %144 = arith.index_cast %143 : i32 to index
    %c4_115 = arith.constant 4 : index
    %c0_116 = arith.constant 0 : index
    %145 = vector.load %arg2[%c0_114, %144, %c4_115, %c0_116] : memref<1x12x12x48xf32, #tpu.memory_space<vmem>>, vector<1x4x8x48xf32>
    %146 = vector.shape_cast %145 : vector<1x4x8x48xf32> to vector<4x8x48xf32>
    %147 = vector.shape_cast %146 : vector<4x8x48xf32> to vector<32x48xf32>
    %c4_117 = arith.constant 4 : index
    %c0_118 = arith.constant 0 : index
    %c0_119 = arith.constant 0 : index
    %148 = vector.load %arg4[%c4_117, %c0_118, %c0_119] : memref<25x48x64xf32, #tpu.memory_space<vmem>>, vector<1x48x64xf32>
    %149 = vector.shape_cast %148 : vector<1x48x64xf32> to vector<48x64xf32>
    %cst_120 = arith.constant dense<0.000000e+00> : vector<32x64xf32>
    %150 = tpu.matmul %147, %149, %cst_120 {dimension_numbers = #tpu.dot_dimension_numbers<[1], [0], [0], [1], [0, 0, 1, 1], [], []>} : vector<32x48xf32>, vector<48x64xf32>, vector<32x64xf32> -> vector<32x64xf32>
    %151 = arith.addf %141, %150 : vector<32x64xf32>
    %c1_i32_121 = arith.constant 1 : i32
    %152 = arith.addi %1, %c1_i32_121 : i32
    %c0_i32_122 = arith.constant 0 : i32
    %153 = arith.addi %152, %c0_i32_122 : i32
    %c0_123 = arith.constant 0 : index
    %154 = arith.index_cast %153 : i32 to index
    %c0_124 = arith.constant 0 : index
    %c0_125 = arith.constant 0 : index
    %155 = vector.load %arg2[%c0_123, %154, %c0_124, %c0_125] : memref<1x12x12x48xf32, #tpu.memory_space<vmem>>, vector<1x4x8x48xf32>
    %156 = vector.shape_cast %155 : vector<1x4x8x48xf32> to vector<4x8x48xf32>
    %157 = vector.shape_cast %156 : vector<4x8x48xf32> to vector<32x48xf32>
    %c5_126 = arith.constant 5 : index
    %c0_127 = arith.constant 0 : index
    %c0_128 = arith.constant 0 : index
    %158 = vector.load %arg4[%c5_126, %c0_127, %c0_128] : memref<25x48x64xf32, #tpu.memory_space<vmem>>, vector<1x48x64xf32>
    %159 = vector.shape_cast %158 : vector<1x48x64xf32> to vector<48x64xf32>
    %cst_129 = arith.constant dense<0.000000e+00> : vector<32x64xf32>
    %160 = tpu.matmul %157, %159, %cst_129 {dimension_numbers = #tpu.dot_dimension_numbers<[1], [0], [0], [1], [0, 0, 1, 1], [], []>} : vector<32x48xf32>, vector<48x64xf32>, vector<32x64xf32> -> vector<32x64xf32>
    %161 = arith.addf %151, %160 : vector<32x64xf32>
    %c1_i32_130 = arith.constant 1 : i32
    %162 = arith.addi %1, %c1_i32_130 : i32
    %c0_i32_131 = arith.constant 0 : i32
    %163 = arith.addi %162, %c0_i32_131 : i32
    %c0_132 = arith.constant 0 : index
    %164 = arith.index_cast %163 : i32 to index
    %c1_133 = arith.constant 1 : index
    %c0_134 = arith.constant 0 : index
    %165 = vector.load %arg2[%c0_132, %164, %c1_133, %c0_134] : memref<1x12x12x48xf32, #tpu.memory_space<vmem>>, vector<1x4x8x48xf32>
    %166 = vector.shape_cast %165 : vector<1x4x8x48xf32> to vector<4x8x48xf32>
    %167 = vector.shape_cast %166 : vector<4x8x48xf32> to vector<32x48xf32>
    %c6_135 = arith.constant 6 : index
    %c0_136 = arith.constant 0 : index
    %c0_137 = arith.constant 0 : index
    %168 = vector.load %arg4[%c6_135, %c0_136, %c0_137] : memref<25x48x64xf32, #tpu.memory_space<vmem>>, vector<1x48x64xf32>
    %169 = vector.shape_cast %168 : vector<1x48x64xf32> to vector<48x64xf32>
    %cst_138 = arith.constant dense<0.000000e+00> : vector<32x64xf32>
    %170 = tpu.matmul %167, %169, %cst_138 {dimension_numbers = #tpu.dot_dimension_numbers<[1], [0], [0], [1], [0, 0, 1, 1], [], []>} : vector<32x48xf32>, vector<48x64xf32>, vector<32x64xf32> -> vector<32x64xf32>
    %171 = arith.addf %161, %170 : vector<32x64xf32>
    %c1_i32_139 = arith.constant 1 : i32
    %172 = arith.addi %1, %c1_i32_139 : i32
    %c0_i32_140 = arith.constant 0 : i32
    %173 = arith.addi %172, %c0_i32_140 : i32
    %c0_141 = arith.constant 0 : index
    %174 = arith.index_cast %173 : i32 to index
    %c2_142 = arith.constant 2 : index
    %c0_143 = arith.constant 0 : index
    %175 = vector.load %arg2[%c0_141, %174, %c2_142, %c0_143] : memref<1x12x12x48xf32, #tpu.memory_space<vmem>>, vector<1x4x8x48xf32>
    %176 = vector.shape_cast %175 : vector<1x4x8x48xf32> to vector<4x8x48xf32>
    %177 = vector.shape_cast %176 : vector<4x8x48xf32> to vector<32x48xf32>
    %c7_144 = arith.constant 7 : index
    %c0_145 = arith.constant 0 : index
    %c0_146 = arith.constant 0 : index
    %178 = vector.load %arg4[%c7_144, %c0_145, %c0_146] : memref<25x48x64xf32, #tpu.memory_space<vmem>>, vector<1x48x64xf32>
    %179 = vector.shape_cast %178 : vector<1x48x64xf32> to vector<48x64xf32>
    %cst_147 = arith.constant dense<0.000000e+00> : vector<32x64xf32>
    %180 = tpu.matmul %177, %179, %cst_147 {dimension_numbers = #tpu.dot_dimension_numbers<[1], [0], [0], [1], [0, 0, 1, 1], [], []>} : vector<32x48xf32>, vector<48x64xf32>, vector<32x64xf32> -> vector<32x64xf32>
    %181 = arith.addf %171, %180 : vector<32x64xf32>
    %c1_i32_148 = arith.constant 1 : i32
    %182 = arith.addi %1, %c1_i32_148 : i32
    %c0_i32_149 = arith.constant 0 : i32
    %183 = arith.addi %182, %c0_i32_149 : i32
    %c0_150 = arith.constant 0 : index
    %184 = arith.index_cast %183 : i32 to index
    %c3_151 = arith.constant 3 : index
    %c0_152 = arith.constant 0 : index
    %185 = vector.load %arg2[%c0_150, %184, %c3_151, %c0_152] : memref<1x12x12x48xf32, #tpu.memory_space<vmem>>, vector<1x4x8x48xf32>
    %186 = vector.shape_cast %185 : vector<1x4x8x48xf32> to vector<4x8x48xf32>
    %187 = vector.shape_cast %186 : vector<4x8x48xf32> to vector<32x48xf32>
    %c8_153 = arith.constant 8 : index
    %c0_154 = arith.constant 0 : index
    %c0_155 = arith.constant 0 : index
    %188 = vector.load %arg4[%c8_153, %c0_154, %c0_155] : memref<25x48x64xf32, #tpu.memory_space<vmem>>, vector<1x48x64xf32>
    %189 = vector.shape_cast %188 : vector<1x48x64xf32> to vector<48x64xf32>
    %cst_156 = arith.constant dense<0.000000e+00> : vector<32x64xf32>
    %190 = tpu.matmul %187, %189, %cst_156 {dimension_numbers = #tpu.dot_dimension_numbers<[1], [0], [0], [1], [0, 0, 1, 1], [], []>} : vector<32x48xf32>, vector<48x64xf32>, vector<32x64xf32> -> vector<32x64xf32>
    %191 = arith.addf %181, %190 : vector<32x64xf32>
    %c1_i32_157 = arith.constant 1 : i32
    %192 = arith.addi %1, %c1_i32_157 : i32
    %c0_i32_158 = arith.constant 0 : i32
    %193 = arith.addi %192, %c0_i32_158 : i32
    %c0_159 = arith.constant 0 : index
    %194 = arith.index_cast %193 : i32 to index
    %c4_160 = arith.constant 4 : index
    %c0_161 = arith.constant 0 : index
    %195 = vector.load %arg2[%c0_159, %194, %c4_160, %c0_161] : memref<1x12x12x48xf32, #tpu.memory_space<vmem>>, vector<1x4x8x48xf32>
    %196 = vector.shape_cast %195 : vector<1x4x8x48xf32> to vector<4x8x48xf32>
    %197 = vector.shape_cast %196 : vector<4x8x48xf32> to vector<32x48xf32>
    %c9 = arith.constant 9 : index
    %c0_162 = arith.constant 0 : index
    %c0_163 = arith.constant 0 : index
    %198 = vector.load %arg4[%c9, %c0_162, %c0_163] : memref<25x48x64xf32, #tpu.memory_space<vmem>>, vector<1x48x64xf32>
    %199 = vector.shape_cast %198 : vector<1x48x64xf32> to vector<48x64xf32>
    %cst_164 = arith.constant dense<0.000000e+00> : vector<32x64xf32>
    %200 = tpu.matmul %197, %199, %cst_164 {dimension_numbers = #tpu.dot_dimension_numbers<[1], [0], [0], [1], [0, 0, 1, 1], [], []>} : vector<32x48xf32>, vector<48x64xf32>, vector<32x64xf32> -> vector<32x64xf32>
    %201 = arith.addf %191, %200 : vector<32x64xf32>
    %c2_i32_165 = arith.constant 2 : i32
    %202 = arith.addi %1, %c2_i32_165 : i32
    %c0_i32_166 = arith.constant 0 : i32
    %203 = arith.addi %202, %c0_i32_166 : i32
    %c0_167 = arith.constant 0 : index
    %204 = arith.index_cast %203 : i32 to index
    %c0_168 = arith.constant 0 : index
    %c0_169 = arith.constant 0 : index
    %205 = vector.load %arg2[%c0_167, %204, %c0_168, %c0_169] : memref<1x12x12x48xf32, #tpu.memory_space<vmem>>, vector<1x4x8x48xf32>
    %206 = vector.shape_cast %205 : vector<1x4x8x48xf32> to vector<4x8x48xf32>
    %207 = vector.shape_cast %206 : vector<4x8x48xf32> to vector<32x48xf32>
    %c10 = arith.constant 10 : index
    %c0_170 = arith.constant 0 : index
    %c0_171 = arith.constant 0 : index
    %208 = vector.load %arg4[%c10, %c0_170, %c0_171] : memref<25x48x64xf32, #tpu.memory_space<vmem>>, vector<1x48x64xf32>
    %209 = vector.shape_cast %208 : vector<1x48x64xf32> to vector<48x64xf32>
    %cst_172 = arith.constant dense<0.000000e+00> : vector<32x64xf32>
    %210 = tpu.matmul %207, %209, %cst_172 {dimension_numbers = #tpu.dot_dimension_numbers<[1], [0], [0], [1], [0, 0, 1, 1], [], []>} : vector<32x48xf32>, vector<48x64xf32>, vector<32x64xf32> -> vector<32x64xf32>
    %211 = arith.addf %201, %210 : vector<32x64xf32>
    %c2_i32_173 = arith.constant 2 : i32
    %212 = arith.addi %1, %c2_i32_173 : i32
    %c0_i32_174 = arith.constant 0 : i32
    %213 = arith.addi %212, %c0_i32_174 : i32
    %c0_175 = arith.constant 0 : index
    %214 = arith.index_cast %213 : i32 to index
    %c1_176 = arith.constant 1 : index
    %c0_177 = arith.constant 0 : index
    %215 = vector.load %arg2[%c0_175, %214, %c1_176, %c0_177] : memref<1x12x12x48xf32, #tpu.memory_space<vmem>>, vector<1x4x8x48xf32>
    %216 = vector.shape_cast %215 : vector<1x4x8x48xf32> to vector<4x8x48xf32>
    %217 = vector.shape_cast %216 : vector<4x8x48xf32> to vector<32x48xf32>
    %c11 = arith.constant 11 : index
    %c0_178 = arith.constant 0 : index
    %c0_179 = arith.constant 0 : index
    %218 = vector.load %arg4[%c11, %c0_178, %c0_179] : memref<25x48x64xf32, #tpu.memory_space<vmem>>, vector<1x48x64xf32>
    %219 = vector.shape_cast %218 : vector<1x48x64xf32> to vector<48x64xf32>
    %cst_180 = arith.constant dense<0.000000e+00> : vector<32x64xf32>
    %220 = tpu.matmul %217, %219, %cst_180 {dimension_numbers = #tpu.dot_dimension_numbers<[1], [0], [0], [1], [0, 0, 1, 1], [], []>} : vector<32x48xf32>, vector<48x64xf32>, vector<32x64xf32> -> vector<32x64xf32>
    %221 = arith.addf %211, %220 : vector<32x64xf32>
    %c2_i32_181 = arith.constant 2 : i32
    %222 = arith.addi %1, %c2_i32_181 : i32
    %c0_i32_182 = arith.constant 0 : i32
    %223 = arith.addi %222, %c0_i32_182 : i32
    %c0_183 = arith.constant 0 : index
    %224 = arith.index_cast %223 : i32 to index
    %c2_184 = arith.constant 2 : index
    %c0_185 = arith.constant 0 : index
    %225 = vector.load %arg2[%c0_183, %224, %c2_184, %c0_185] : memref<1x12x12x48xf32, #tpu.memory_space<vmem>>, vector<1x4x8x48xf32>
    %226 = vector.shape_cast %225 : vector<1x4x8x48xf32> to vector<4x8x48xf32>
    %227 = vector.shape_cast %226 : vector<4x8x48xf32> to vector<32x48xf32>
    %c12 = arith.constant 12 : index
    %c0_186 = arith.constant 0 : index
    %c0_187 = arith.constant 0 : index
    %228 = vector.load %arg4[%c12, %c0_186, %c0_187] : memref<25x48x64xf32, #tpu.memory_space<vmem>>, vector<1x48x64xf32>
    %229 = vector.shape_cast %228 : vector<1x48x64xf32> to vector<48x64xf32>
    %cst_188 = arith.constant dense<0.000000e+00> : vector<32x64xf32>
    %230 = tpu.matmul %227, %229, %cst_188 {dimension_numbers = #tpu.dot_dimension_numbers<[1], [0], [0], [1], [0, 0, 1, 1], [], []>} : vector<32x48xf32>, vector<48x64xf32>, vector<32x64xf32> -> vector<32x64xf32>
    %231 = arith.addf %221, %230 : vector<32x64xf32>
    %c2_i32_189 = arith.constant 2 : i32
    %232 = arith.addi %1, %c2_i32_189 : i32
    %c0_i32_190 = arith.constant 0 : i32
    %233 = arith.addi %232, %c0_i32_190 : i32
    %c0_191 = arith.constant 0 : index
    %234 = arith.index_cast %233 : i32 to index
    %c3_192 = arith.constant 3 : index
    %c0_193 = arith.constant 0 : index
    %235 = vector.load %arg2[%c0_191, %234, %c3_192, %c0_193] : memref<1x12x12x48xf32, #tpu.memory_space<vmem>>, vector<1x4x8x48xf32>
    %236 = vector.shape_cast %235 : vector<1x4x8x48xf32> to vector<4x8x48xf32>
    %237 = vector.shape_cast %236 : vector<4x8x48xf32> to vector<32x48xf32>
    %c13 = arith.constant 13 : index
    %c0_194 = arith.constant 0 : index
    %c0_195 = arith.constant 0 : index
    %238 = vector.load %arg4[%c13, %c0_194, %c0_195] : memref<25x48x64xf32, #tpu.memory_space<vmem>>, vector<1x48x64xf32>
    %239 = vector.shape_cast %238 : vector<1x48x64xf32> to vector<48x64xf32>
    %cst_196 = arith.constant dense<0.000000e+00> : vector<32x64xf32>
    %240 = tpu.matmul %237, %239, %cst_196 {dimension_numbers = #tpu.dot_dimension_numbers<[1], [0], [0], [1], [0, 0, 1, 1], [], []>} : vector<32x48xf32>, vector<48x64xf32>, vector<32x64xf32> -> vector<32x64xf32>
    %241 = arith.addf %231, %240 : vector<32x64xf32>
    %c2_i32_197 = arith.constant 2 : i32
    %242 = arith.addi %1, %c2_i32_197 : i32
    %c0_i32_198 = arith.constant 0 : i32
    %243 = arith.addi %242, %c0_i32_198 : i32
    %c0_199 = arith.constant 0 : index
    %244 = arith.index_cast %243 : i32 to index
    %c4_200 = arith.constant 4 : index
    %c0_201 = arith.constant 0 : index
    %245 = vector.load %arg2[%c0_199, %244, %c4_200, %c0_201] : memref<1x12x12x48xf32, #tpu.memory_space<vmem>>, vector<1x4x8x48xf32>
    %246 = vector.shape_cast %245 : vector<1x4x8x48xf32> to vector<4x8x48xf32>
    %247 = vector.shape_cast %246 : vector<4x8x48xf32> to vector<32x48xf32>
    %c14 = arith.constant 14 : index
    %c0_202 = arith.constant 0 : index
    %c0_203 = arith.constant 0 : index
    %248 = vector.load %arg4[%c14, %c0_202, %c0_203] : memref<25x48x64xf32, #tpu.memory_space<vmem>>, vector<1x48x64xf32>
    %249 = vector.shape_cast %248 : vector<1x48x64xf32> to vector<48x64xf32>
    %cst_204 = arith.constant dense<0.000000e+00> : vector<32x64xf32>
    %250 = tpu.matmul %247, %249, %cst_204 {dimension_numbers = #tpu.dot_dimension_numbers<[1], [0], [0], [1], [0, 0, 1, 1], [], []>} : vector<32x48xf32>, vector<48x64xf32>, vector<32x64xf32> -> vector<32x64xf32>
    %251 = arith.addf %241, %250 : vector<32x64xf32>
    %c3_i32 = arith.constant 3 : i32
    %252 = arith.addi %1, %c3_i32 : i32
    %c0_i32_205 = arith.constant 0 : i32
    %253 = arith.addi %252, %c0_i32_205 : i32
    %c0_206 = arith.constant 0 : index
    %254 = arith.index_cast %253 : i32 to index
    %c0_207 = arith.constant 0 : index
    %c0_208 = arith.constant 0 : index
    %255 = vector.load %arg2[%c0_206, %254, %c0_207, %c0_208] : memref<1x12x12x48xf32, #tpu.memory_space<vmem>>, vector<1x4x8x48xf32>
    %256 = vector.shape_cast %255 : vector<1x4x8x48xf32> to vector<4x8x48xf32>
    %257 = vector.shape_cast %256 : vector<4x8x48xf32> to vector<32x48xf32>
    %c15 = arith.constant 15 : index
    %c0_209 = arith.constant 0 : index
    %c0_210 = arith.constant 0 : index
    %258 = vector.load %arg4[%c15, %c0_209, %c0_210] : memref<25x48x64xf32, #tpu.memory_space<vmem>>, vector<1x48x64xf32>
    %259 = vector.shape_cast %258 : vector<1x48x64xf32> to vector<48x64xf32>
    %cst_211 = arith.constant dense<0.000000e+00> : vector<32x64xf32>
    %260 = tpu.matmul %257, %259, %cst_211 {dimension_numbers = #tpu.dot_dimension_numbers<[1], [0], [0], [1], [0, 0, 1, 1], [], []>} : vector<32x48xf32>, vector<48x64xf32>, vector<32x64xf32> -> vector<32x64xf32>
    %261 = arith.addf %251, %260 : vector<32x64xf32>
    %c3_i32_212 = arith.constant 3 : i32
    %262 = arith.addi %1, %c3_i32_212 : i32
    %c0_i32_213 = arith.constant 0 : i32
    %263 = arith.addi %262, %c0_i32_213 : i32
    %c0_214 = arith.constant 0 : index
    %264 = arith.index_cast %263 : i32 to index
    %c1_215 = arith.constant 1 : index
    %c0_216 = arith.constant 0 : index
    %265 = vector.load %arg2[%c0_214, %264, %c1_215, %c0_216] : memref<1x12x12x48xf32, #tpu.memory_space<vmem>>, vector<1x4x8x48xf32>
    %266 = vector.shape_cast %265 : vector<1x4x8x48xf32> to vector<4x8x48xf32>
    %267 = vector.shape_cast %266 : vector<4x8x48xf32> to vector<32x48xf32>
    %c16 = arith.constant 16 : index
    %c0_217 = arith.constant 0 : index
    %c0_218 = arith.constant 0 : index
    %268 = vector.load %arg4[%c16, %c0_217, %c0_218] : memref<25x48x64xf32, #tpu.memory_space<vmem>>, vector<1x48x64xf32>
    %269 = vector.shape_cast %268 : vector<1x48x64xf32> to vector<48x64xf32>
    %cst_219 = arith.constant dense<0.000000e+00> : vector<32x64xf32>
    %270 = tpu.matmul %267, %269, %cst_219 {dimension_numbers = #tpu.dot_dimension_numbers<[1], [0], [0], [1], [0, 0, 1, 1], [], []>} : vector<32x48xf32>, vector<48x64xf32>, vector<32x64xf32> -> vector<32x64xf32>
    %271 = arith.addf %261, %270 : vector<32x64xf32>
    %c3_i32_220 = arith.constant 3 : i32
    %272 = arith.addi %1, %c3_i32_220 : i32
    %c0_i32_221 = arith.constant 0 : i32
    %273 = arith.addi %272, %c0_i32_221 : i32
    %c0_222 = arith.constant 0 : index
    %274 = arith.index_cast %273 : i32 to index
    %c2_223 = arith.constant 2 : index
    %c0_224 = arith.constant 0 : index
    %275 = vector.load %arg2[%c0_222, %274, %c2_223, %c0_224] : memref<1x12x12x48xf32, #tpu.memory_space<vmem>>, vector<1x4x8x48xf32>
    %276 = vector.shape_cast %275 : vector<1x4x8x48xf32> to vector<4x8x48xf32>
    %277 = vector.shape_cast %276 : vector<4x8x48xf32> to vector<32x48xf32>
    %c17 = arith.constant 17 : index
    %c0_225 = arith.constant 0 : index
    %c0_226 = arith.constant 0 : index
    %278 = vector.load %arg4[%c17, %c0_225, %c0_226] : memref<25x48x64xf32, #tpu.memory_space<vmem>>, vector<1x48x64xf32>
    %279 = vector.shape_cast %278 : vector<1x48x64xf32> to vector<48x64xf32>
    %cst_227 = arith.constant dense<0.000000e+00> : vector<32x64xf32>
    %280 = tpu.matmul %277, %279, %cst_227 {dimension_numbers = #tpu.dot_dimension_numbers<[1], [0], [0], [1], [0, 0, 1, 1], [], []>} : vector<32x48xf32>, vector<48x64xf32>, vector<32x64xf32> -> vector<32x64xf32>
    %281 = arith.addf %271, %280 : vector<32x64xf32>
    %c3_i32_228 = arith.constant 3 : i32
    %282 = arith.addi %1, %c3_i32_228 : i32
    %c0_i32_229 = arith.constant 0 : i32
    %283 = arith.addi %282, %c0_i32_229 : i32
    %c0_230 = arith.constant 0 : index
    %284 = arith.index_cast %283 : i32 to index
    %c3_231 = arith.constant 3 : index
    %c0_232 = arith.constant 0 : index
    %285 = vector.load %arg2[%c0_230, %284, %c3_231, %c0_232] : memref<1x12x12x48xf32, #tpu.memory_space<vmem>>, vector<1x4x8x48xf32>
    %286 = vector.shape_cast %285 : vector<1x4x8x48xf32> to vector<4x8x48xf32>
    %287 = vector.shape_cast %286 : vector<4x8x48xf32> to vector<32x48xf32>
    %c18 = arith.constant 18 : index
    %c0_233 = arith.constant 0 : index
    %c0_234 = arith.constant 0 : index
    %288 = vector.load %arg4[%c18, %c0_233, %c0_234] : memref<25x48x64xf32, #tpu.memory_space<vmem>>, vector<1x48x64xf32>
    %289 = vector.shape_cast %288 : vector<1x48x64xf32> to vector<48x64xf32>
    %cst_235 = arith.constant dense<0.000000e+00> : vector<32x64xf32>
    %290 = tpu.matmul %287, %289, %cst_235 {dimension_numbers = #tpu.dot_dimension_numbers<[1], [0], [0], [1], [0, 0, 1, 1], [], []>} : vector<32x48xf32>, vector<48x64xf32>, vector<32x64xf32> -> vector<32x64xf32>
    %291 = arith.addf %281, %290 : vector<32x64xf32>
    %c3_i32_236 = arith.constant 3 : i32
    %292 = arith.addi %1, %c3_i32_236 : i32
    %c0_i32_237 = arith.constant 0 : i32
    %293 = arith.addi %292, %c0_i32_237 : i32
    %c0_238 = arith.constant 0 : index
    %294 = arith.index_cast %293 : i32 to index
    %c4_239 = arith.constant 4 : index
    %c0_240 = arith.constant 0 : index
    %295 = vector.load %arg2[%c0_238, %294, %c4_239, %c0_240] : memref<1x12x12x48xf32, #tpu.memory_space<vmem>>, vector<1x4x8x48xf32>
    %296 = vector.shape_cast %295 : vector<1x4x8x48xf32> to vector<4x8x48xf32>
    %297 = vector.shape_cast %296 : vector<4x8x48xf32> to vector<32x48xf32>
    %c19 = arith.constant 19 : index
    %c0_241 = arith.constant 0 : index
    %c0_242 = arith.constant 0 : index
    %298 = vector.load %arg4[%c19, %c0_241, %c0_242] : memref<25x48x64xf32, #tpu.memory_space<vmem>>, vector<1x48x64xf32>
    %299 = vector.shape_cast %298 : vector<1x48x64xf32> to vector<48x64xf32>
    %cst_243 = arith.constant dense<0.000000e+00> : vector<32x64xf32>
    %300 = tpu.matmul %297, %299, %cst_243 {dimension_numbers = #tpu.dot_dimension_numbers<[1], [0], [0], [1], [0, 0, 1, 1], [], []>} : vector<32x48xf32>, vector<48x64xf32>, vector<32x64xf32> -> vector<32x64xf32>
    %301 = arith.addf %291, %300 : vector<32x64xf32>
    %c4_i32_244 = arith.constant 4 : i32
    %302 = arith.addi %1, %c4_i32_244 : i32
    %c0_i32_245 = arith.constant 0 : i32
    %303 = arith.addi %302, %c0_i32_245 : i32
    %c0_246 = arith.constant 0 : index
    %304 = arith.index_cast %303 : i32 to index
    %c0_247 = arith.constant 0 : index
    %c0_248 = arith.constant 0 : index
    %305 = vector.load %arg2[%c0_246, %304, %c0_247, %c0_248] : memref<1x12x12x48xf32, #tpu.memory_space<vmem>>, vector<1x4x8x48xf32>
    %306 = vector.shape_cast %305 : vector<1x4x8x48xf32> to vector<4x8x48xf32>
    %307 = vector.shape_cast %306 : vector<4x8x48xf32> to vector<32x48xf32>
    %c20 = arith.constant 20 : index
    %c0_249 = arith.constant 0 : index
    %c0_250 = arith.constant 0 : index
    %308 = vector.load %arg4[%c20, %c0_249, %c0_250] : memref<25x48x64xf32, #tpu.memory_space<vmem>>, vector<1x48x64xf32>
    %309 = vector.shape_cast %308 : vector<1x48x64xf32> to vector<48x64xf32>
    %cst_251 = arith.constant dense<0.000000e+00> : vector<32x64xf32>
    %310 = tpu.matmul %307, %309, %cst_251 {dimension_numbers = #tpu.dot_dimension_numbers<[1], [0], [0], [1], [0, 0, 1, 1], [], []>} : vector<32x48xf32>, vector<48x64xf32>, vector<32x64xf32> -> vector<32x64xf32>
    %311 = arith.addf %301, %310 : vector<32x64xf32>
    %c4_i32_252 = arith.constant 4 : i32
    %312 = arith.addi %1, %c4_i32_252 : i32
    %c0_i32_253 = arith.constant 0 : i32
    %313 = arith.addi %312, %c0_i32_253 : i32
    %c0_254 = arith.constant 0 : index
    %314 = arith.index_cast %313 : i32 to index
    %c1_255 = arith.constant 1 : index
    %c0_256 = arith.constant 0 : index
    %315 = vector.load %arg2[%c0_254, %314, %c1_255, %c0_256] : memref<1x12x12x48xf32, #tpu.memory_space<vmem>>, vector<1x4x8x48xf32>
    %316 = vector.shape_cast %315 : vector<1x4x8x48xf32> to vector<4x8x48xf32>
    %317 = vector.shape_cast %316 : vector<4x8x48xf32> to vector<32x48xf32>
    %c21 = arith.constant 21 : index
    %c0_257 = arith.constant 0 : index
    %c0_258 = arith.constant 0 : index
    %318 = vector.load %arg4[%c21, %c0_257, %c0_258] : memref<25x48x64xf32, #tpu.memory_space<vmem>>, vector<1x48x64xf32>
    %319 = vector.shape_cast %318 : vector<1x48x64xf32> to vector<48x64xf32>
    %cst_259 = arith.constant dense<0.000000e+00> : vector<32x64xf32>
    %320 = tpu.matmul %317, %319, %cst_259 {dimension_numbers = #tpu.dot_dimension_numbers<[1], [0], [0], [1], [0, 0, 1, 1], [], []>} : vector<32x48xf32>, vector<48x64xf32>, vector<32x64xf32> -> vector<32x64xf32>
    %321 = arith.addf %311, %320 : vector<32x64xf32>
    %c4_i32_260 = arith.constant 4 : i32
    %322 = arith.addi %1, %c4_i32_260 : i32
    %c0_i32_261 = arith.constant 0 : i32
    %323 = arith.addi %322, %c0_i32_261 : i32
    %c0_262 = arith.constant 0 : index
    %324 = arith.index_cast %323 : i32 to index
    %c2_263 = arith.constant 2 : index
    %c0_264 = arith.constant 0 : index
    %325 = vector.load %arg2[%c0_262, %324, %c2_263, %c0_264] : memref<1x12x12x48xf32, #tpu.memory_space<vmem>>, vector<1x4x8x48xf32>
    %326 = vector.shape_cast %325 : vector<1x4x8x48xf32> to vector<4x8x48xf32>
    %327 = vector.shape_cast %326 : vector<4x8x48xf32> to vector<32x48xf32>
    %c22 = arith.constant 22 : index
    %c0_265 = arith.constant 0 : index
    %c0_266 = arith.constant 0 : index
    %328 = vector.load %arg4[%c22, %c0_265, %c0_266] : memref<25x48x64xf32, #tpu.memory_space<vmem>>, vector<1x48x64xf32>
    %329 = vector.shape_cast %328 : vector<1x48x64xf32> to vector<48x64xf32>
    %cst_267 = arith.constant dense<0.000000e+00> : vector<32x64xf32>
    %330 = tpu.matmul %327, %329, %cst_267 {dimension_numbers = #tpu.dot_dimension_numbers<[1], [0], [0], [1], [0, 0, 1, 1], [], []>} : vector<32x48xf32>, vector<48x64xf32>, vector<32x64xf32> -> vector<32x64xf32>
    %331 = arith.addf %321, %330 : vector<32x64xf32>
    %c4_i32_268 = arith.constant 4 : i32
    %332 = arith.addi %1, %c4_i32_268 : i32
    %c0_i32_269 = arith.constant 0 : i32
    %333 = arith.addi %332, %c0_i32_269 : i32
    %c0_270 = arith.constant 0 : index
    %334 = arith.index_cast %333 : i32 to index
    %c3_271 = arith.constant 3 : index
    %c0_272 = arith.constant 0 : index
    %335 = vector.load %arg2[%c0_270, %334, %c3_271, %c0_272] : memref<1x12x12x48xf32, #tpu.memory_space<vmem>>, vector<1x4x8x48xf32>
    %336 = vector.shape_cast %335 : vector<1x4x8x48xf32> to vector<4x8x48xf32>
    %337 = vector.shape_cast %336 : vector<4x8x48xf32> to vector<32x48xf32>
    %c23 = arith.constant 23 : index
    %c0_273 = arith.constant 0 : index
    %c0_274 = arith.constant 0 : index
    %338 = vector.load %arg4[%c23, %c0_273, %c0_274] : memref<25x48x64xf32, #tpu.memory_space<vmem>>, vector<1x48x64xf32>
    %339 = vector.shape_cast %338 : vector<1x48x64xf32> to vector<48x64xf32>
    %cst_275 = arith.constant dense<0.000000e+00> : vector<32x64xf32>
    %340 = tpu.matmul %337, %339, %cst_275 {dimension_numbers = #tpu.dot_dimension_numbers<[1], [0], [0], [1], [0, 0, 1, 1], [], []>} : vector<32x48xf32>, vector<48x64xf32>, vector<32x64xf32> -> vector<32x64xf32>
    %341 = arith.addf %331, %340 : vector<32x64xf32>
    %c4_i32_276 = arith.constant 4 : i32
    %342 = arith.addi %1, %c4_i32_276 : i32
    %c0_i32_277 = arith.constant 0 : i32
    %343 = arith.addi %342, %c0_i32_277 : i32
    %c0_278 = arith.constant 0 : index
    %344 = arith.index_cast %343 : i32 to index
    %c4_279 = arith.constant 4 : index
    %c0_280 = arith.constant 0 : index
    %345 = vector.load %arg2[%c0_278, %344, %c4_279, %c0_280] : memref<1x12x12x48xf32, #tpu.memory_space<vmem>>, vector<1x4x8x48xf32>
    %346 = vector.shape_cast %345 : vector<1x4x8x48xf32> to vector<4x8x48xf32>
    %347 = vector.shape_cast %346 : vector<4x8x48xf32> to vector<32x48xf32>
    %c24 = arith.constant 24 : index
    %c0_281 = arith.constant 0 : index
    %c0_282 = arith.constant 0 : index
    %348 = vector.load %arg4[%c24, %c0_281, %c0_282] : memref<25x48x64xf32, #tpu.memory_space<vmem>>, vector<1x48x64xf32>
    %349 = vector.shape_cast %348 : vector<1x48x64xf32> to vector<48x64xf32>
    %cst_283 = arith.constant dense<0.000000e+00> : vector<32x64xf32>
    %350 = tpu.matmul %347, %349, %cst_283 {dimension_numbers = #tpu.dot_dimension_numbers<[1], [0], [0], [1], [0, 0, 1, 1], [], []>} : vector<32x48xf32>, vector<48x64xf32>, vector<32x64xf32> -> vector<32x64xf32>
    %351 = arith.addf %341, %350 : vector<32x64xf32>
    %c0_284 = arith.constant 0 : index
    %c0_285 = arith.constant 0 : index
    %352 = vector.load %arg6[%c0_284, %c0_285] : memref<1x64xf32, #tpu.memory_space<vmem>>, vector<1x64xf32>
    %353 = vector.broadcast %352 : vector<1x64xf32> to vector<32x64xf32>
    %354 = arith.addf %351, %353 : vector<32x64xf32>
    %c0_286 = arith.constant 0 : index
    %c0_287 = arith.constant 0 : index
    %c0_288 = arith.constant 0 : index
    %355 = vector.load %arg8[%c0_286, %c0_287, %c0_288] : memref<1x32x64xf32, #tpu.memory_space<vmem>>, vector<1x32x64xf32>
    %356 = vector.shape_cast %355 : vector<1x32x64xf32> to vector<32x64xf32>
    %357 = vector.shape_cast %354 : vector<32x64xf32> to vector<1x32x64xf32>
    tpu.vector_store %arg8[%c0_286, %c0_287, %c0_288], %357 {strides = array<i32>} : memref<1x32x64xf32, #tpu.memory_space<vmem>>, vector<1x32x64xf32>,
    return
  }
  func.func @transform_0(%arg0: i32, %arg1: i32) -> (i32, i32, i32, i32) {
    %c0_i32 = arith.constant 0 : i32
    %c0_i32_0 = arith.constant 0 : i32
    %c0_i32_1 = arith.constant 0 : i32
    %c0_i32_2 = arith.constant 0 : i32
    return %arg0, %c0_i32, %c0_i32_0, %c0_i32_1 : i32, i32, i32, i32
  }
  func.func @transform_1(%arg0: i32, %arg1: i32) -> (i32, i32, i32) {
    %c0_i32 = arith.constant 0 : i32
    %c0_i32_0 = arith.constant 0 : i32
    %c0_i32_1 = arith.constant 0 : i32
    %c0_i32_2 = arith.constant 0 : i32
    return %c0_i32, %c0_i32_0, %c0_i32_1 : i32, i32, i32
  }
  func.func @transform_2(%arg0: i32, %arg1: i32) -> (i32, i32, i32) {
    %c0_i32 = arith.constant 0 : i32
    %c0_i32_0 = arith.constant 0 : i32
    %c0_i32_1 = arith.constant 0 : i32
    %c0_i32_2 = arith.constant 0 : i32
    return %c0_i32, %c0_i32_0, %c0_i32_1 : i32, i32, i32
  }
  func.func @transform_3(%arg0: i32, %arg1: i32) -> (i32, i32) {
    %c0_i32 = arith.constant 0 : i32
    %c0_i32_0 = arith.constant 0 : i32
    %c0_i32_1 = arith.constant 0 : i32
    return %c0_i32, %c0_i32_0 : i32, i32
  }
  func.func @transform_4(%arg0: i32, %arg1: i32) -> (i32, i32) {
    %c0_i32 = arith.constant 0 : i32
    %c0_i32_0 = arith.constant 0 : i32
    %c0_i32_1 = arith.constant 0 : i32
    return %c0_i32, %c0_i32_0 : i32, i32
  }
  func.func @transform_5(%arg0: i32, %arg1: i32) -> (i32, i32, i32) {
    %c0_i32 = arith.constant 0 : i32
    %c0_i32_0 = arith.constant 0 : i32
    return %arg0, %arg1, %c0_i32 : i32, i32, i32
  }
  func.func @transform_6(%arg0: i32, %arg1: i32) -> (i32, i32, i32) {
    %c0_i32 = arith.constant 0 : i32
    %c0_i32_0 = arith.constant 0 : i32
    return %arg0, %arg1, %c0_i32 : i32, i32, i32
  }
}

</mosaic_0001>

<llo_original>
// kernel: tpu_custom_call.1
$region0: #{tpu_custom_call.1}
  #allocation0 [shape = 'u32[]', space=smem, size = 0x4, offset = 0x4, fixed_abs, tag = 'smem constant byte address 0x4 - core index']
  #allocation1 [shape = 'u32[144,128]{1,0:T(1,128)}', space=vmem, size = 0x12000, scoped, tag = 'internal scratch']
  %s0 = inlined_call_operand.vmem [shape: f32[2,12,12,48], index: 0, kind: input, shape index: {}]
  %s1 = inlined_call_operand.vmem [shape: f32[9,48,64], index: 1, kind: input, shape index: {}]
  %s2 = inlined_call_operand.hbm [shape: f32[25,48,64], index: 2, kind: input, shape index: {}]
  %s3 = inlined_call_operand.vmem [shape: f32[1,64], index: 3, kind: input, shape index: {}]
  %s4 = inlined_call_operand.vmem [shape: f32[1,64], index: 4, kind: input, shape index: {}]
  %s5 = inlined_call_operand.hbm [shape: f32[2,64,64], index: 5, kind: output, shape index: {0}]
  %s6 = inlined_call_operand.hbm [shape: f32[2,64,64], index: 6, kind: output, shape index: {1}]
  %7 = xla_tuple %s5, %s6
  %s8 = sld [smem:[#allocation0]]
  $region65: #{tpu_custom_call.1} parent=0
    _
  %s10 = ssub.s32 1, %s8
  %s11 = scalar_select 0, %s10, %s8
  $region1: #{tpu_custom_call.1} parent=0
    #allocation2 [shape = 'u8[614400]{0}', space=vmem, size = 0x96000, scoped, tag = 'input window, operand 2, single buffered']
    #allocation3 [shape = 's32[2]{0}', space=sflag, size = 0x8, scoped, tag = 'scoped memory for tpu_custom_call.1']
    #allocation4 [shape = 's32[2]{0}', space=sflag, size = 0x8, scoped, tag = 'scoped memory for tpu_custom_call.1']
    #allocation5 [shape = 'u8[32768]{0}', space=vmem, size = 0x8000, scoped, tag = 'output window, operand 0']
    #allocation6 [shape = 'u8[32768]{0}', space=vmem, size = 0x8000, scoped, tag = 'output window, operand 1']
    #allocation7 [shape = 's32[2]{0}', space=sflag, size = 0x8, scoped, tag = 'scoped memory for tpu_custom_call.1']
    %12 = vsyncpa [#allocation3], 0
    %13 = vsyncpa [#allocation4], 0
    %s14 = scalar_lea.sflag [#allocation4], 1
    %15 = vsyncpa %s14, 0
    %16 = vsyncpa [#allocation7], 0
    %s17 = scalar_lea.sflag [#allocation7], 1
    %18 = vsyncpa %s17, 0
    loop: start=0, step=1, limit=6
    $region2: #{tpu_custom_call.1} parent=1 // loop_pre_header
      _
    $region3: #{tpu_custom_call.1} parent=1 // loop_header
      %s20 = sphi 0, %s24
      %p21 = scmp.ge.s32.totalorder %s20, 6
      %s27 = sphi 0, %s39
      %s28 = sphi 0, %s35
      %s29 = sphi 0, %s27
      %s30 = sphi 0, %s28
      %s31 = sphi 0, %s29
      %s32 = sphi 0, %s30
      %s42 = sphi 0, %s44
      %s45 = sphi 0, %s42
      %s46 = sphi 0, %s45
      %s62 = sphi 0, %s46
      %s66 = sphi 0, %s66
      %s68 = sphi 0, %s66
      %s69 = sphi 0, %s68
      %s83 = sphi 0, %s69
      %s87 = sphi 0, %s87
      %s89 = sphi 0, %s87
      %s90 = sphi 0, %s89
      %s104 = sphi 0, %s90
      %s108 = sphi 0, %s108
      %s110 = sphi 0, %s108
      %s111 = sphi 0, %s110
      %s125 = sphi 0, %s111
      %s129 = sphi 0, %s129
      %s131 = sphi 0, %s129
      %s132 = sphi 0, %s131
      %s146 = sphi 0, %s132
      %s154 = sphi 0, %s156
      %s157 = sphi 0, %s154
      %s158 = sphi 0, %s157
      %s174 = sphi 0, %s158
      %s182 = sphi 0, %s184
      %s185 = sphi 0, %s182
      %s186 = sphi 0, %s185
      %s202 = sphi 0, %s186
    $region4: #{tpu_custom_call.1} parent=1 // loop_header_branch
      %23 = sbr.rel (%p21) target = $region8
    $region5: #{tpu_custom_call.1} parent=1 // loop_body
      %s25 = ssub.s32 %s20, 1
      %s26 = ssub.s32 %s20, 2
      %s33 = sadd.s32 1, %s28
      %p34 = scmp.ge.s32.totalorder %s33, 2
      %s35 = scalar_select %p34, 0, %s33
      %s36 = sadd.s32 1, %s27
      %s37 = scalar_select %p34, %s36, %s27
      %p38 = scmp.ge.s32.totalorder %s37, 2
      %s39 = scalar_select %p38, 0, %s37
      %s40 = ssub.s32 %s27, %s39
      %p41 = scmp.eq.s32.totalorder %s40, 0
      %s43 = sadd.s32 %s42, 1
      %s44 = scalar_select %p41, %s42, %s43
      %p47 = pneg %p41
      %p48 = scmp.eq.s32.totalorder %s20, 3
      %p49 = por %p47, %p48
      %p50 = scmp.ne.s32.totalorder %s42, %s45
      %p51 = scmp.eq.s32.totalorder %s20, 0
      %p52 = por %p50, %p51
      %p53 = scmp.ne.s32.totalorder %s42, %s45
      %p54 = scmp.eq.s32.totalorder %s25, 3
      %p55 = por %p53, %p54
      %p56 = scmp.ne.s32.totalorder %s45, %s46
      %p57 = scmp.eq.s32.totalorder %s25, 0
      %p58 = por %p56, %p57
      %p59 = scmp.ne.s32.totalorder %s45, %s46
      %p60 = scmp.eq.s32.totalorder %s26, 3
      %p61 = por %p59, %p60
      %p63 = scmp.ne.s32.totalorder %s46, %s62
      %p64 = scmp.eq.s32.totalorder %s26, 0
      %p65 = por %p63, %p64
      %s67 = sadd.s32 %s66, 1
      %p70 = scmp.eq.s32.totalorder %s20, 3
      %p71 = scmp.ne.s32.totalorder %s66, %s68
      %p72 = scmp.eq.s32.totalorder %s20, 0
      %p73 = por %p71, %p72
      %p74 = scmp.ne.s32.totalorder %s66, %s68
      %p75 = scmp.eq.s32.totalorder %s25, 3
      %p76 = por %p74, %p75
      %p77 = scmp.ne.s32.totalorder %s68, %s69
      %p78 = scmp.eq.s32.totalorder %s25, 0
      %p79 = por %p77, %p78
      %p80 = scmp.ne.s32.totalorder %s68, %s69
      %p81 = scmp.eq.s32.totalorder %s26, 3
      %p82 = por %p80, %p81
      %p84 = scmp.ne.s32.totalorder %s69, %s83
      %p85 = scmp.eq.s32.totalorder %s26, 0
      %p86 = por %p84, %p85
      %s88 = sadd.s32 %s87, 1
      %p91 = scmp.eq.s32.totalorder %s20, 3
      %p92 = scmp.ne.s32.totalorder %s87, %s89
      %p93 = scmp.eq.s32.totalorder %s20, 0
      %p94 = por %p92, %p93
      %p95 = scmp.ne.s32.totalorder %s87, %s89
      %p96 = scmp.eq.s32.totalorder %s25, 3
      %p97 = por %p95, %p96
      %p98 = scmp.ne.s32.totalorder %s89, %s90
      %p99 = scmp.eq.s32.totalorder %s25, 0
      %p100 = por %p98, %p99
      %p101 = scmp.ne.s32.totalorder %s89, %s90
      %p102 = scmp.eq.s32.totalorder %s26, 3
      %p103 = por %p101, %p102
      %p105 = scmp.ne.s32.totalorder %s90, %s104
      %p106 = scmp.eq.s32.totalorder %s26, 0
      %p107 = por %p105, %p106
      %s109 = sadd.s32 %s108, 1
      %p112 = scmp.eq.s32.totalorder %s20, 3
      %p113 = scmp.ne.s32.totalorder %s108, %s110
      %p114 = scmp.eq.s32.totalorder %s20, 0
      %p115 = por %p113, %p114
      %p116 = scmp.ne.s32.totalorder %s108, %s110
      %p117 = scmp.eq.s32.totalorder %s25, 3
      %p118 = por %p116, %p117
      %p119 = scmp.ne.s32.totalorder %s110, %s111
      %p120 = scmp.eq.s32.totalorder %s25, 0
      %p121 = por %p119, %p120
      %p122 = scmp.ne.s32.totalorder %s110, %s111
      %p123 = scmp.eq.s32.totalorder %s26, 3
      %p124 = por %p122, %p123
      %p126 = scmp.ne.s32.totalorder %s111, %s125
      %p127 = scmp.eq.s32.totalorder %s26, 0
      %p128 = por %p126, %p127
      %s130 = sadd.s32 %s129, 1
      %p133 = scmp.eq.s32.totalorder %s20, 3
      %p134 = scmp.ne.s32.totalorder %s129, %s131
      %p135 = scmp.eq.s32.totalorder %s20, 0
      %p136 = por %p134, %p135
      %p137 = scmp.ne.s32.totalorder %s129, %s131
      %p138 = scmp.eq.s32.totalorder %s25, 3
      %p139 = por %p137, %p138
      %p140 = scmp.ne.s32.totalorder %s131, %s132
      %p141 = scmp.eq.s32.totalorder %s25, 0
      %p142 = por %p140, %p141
      %p143 = scmp.ne.s32.totalorder %s131, %s132
      %p144 = scmp.eq.s32.totalorder %s26, 3
      %p145 = por %p143, %p144
      %p147 = scmp.ne.s32.totalorder %s132, %s146
      %p148 = scmp.eq.s32.totalorder %s26, 0
      %p149 = por %p147, %p148
      %s150 = ssub.s32 %s27, %s39
      %s151 = ssub.s32 %s28, %s35
      %s152 = sor.u32 %s150, %s151
      %p153 = scmp.eq.s32.totalorder %s152, 0
      %s155 = sadd.s32 %s154, 1
      %s156 = scalar_select %p153, %s154, %s155
      %p159 = pneg %p153
      %p160 = scmp.eq.s32.totalorder %s20, 3
      %p161 = por %p159, %p160
      %p162 = scmp.ne.s32.totalorder %s154, %s157
      %p163 = scmp.eq.s32.totalorder %s20, 0
      %p164 = por %p162, %p163
      %p165 = scmp.ne.s32.totalorder %s154, %s157
      %p166 = scmp.eq.s32.totalorder %s25, 3
      %p167 = por %p165, %p166
      %p168 = scmp.ne.s32.totalorder %s157, %s158
      %p169 = scmp.eq.s32.totalorder %s25, 0
      %p170 = por %p168, %p169
      %p171 = scmp.ne.s32.totalorder %s157, %s158
      %p172 = scmp.eq.s32.totalorder %s26, 3
      %p173 = por %p171, %p172
      %p175 = scmp.ne.s32.totalorder %s158, %s174
      %p176 = scmp.eq.s32.totalorder %s26, 0
      %p177 = por %p175, %p176
      %s178 = ssub.s32 %s27, %s39
      %s179 = ssub.s32 %s28, %s35
      %s180 = sor.u32 %s178, %s179
      %p181 = scmp.eq.s32.totalorder %s180, 0
      %s183 = sadd.s32 %s182, 1
      %s184 = scalar_select %p181, %s182, %s183
      %p187 = pneg %p181
      %p188 = scmp.eq.s32.totalorder %s20, 3
      %p189 = por %p187, %p188
      %p190 = scmp.ne.s32.totalorder %s182, %s185
      %p191 = scmp.eq.s32.totalorder %s20, 0
      %p192 = por %p190, %p191
      %p193 = scmp.ne.s32.totalorder %s182, %s185
      %p194 = scmp.eq.s32.totalorder %s25, 3
      %p195 = por %p193, %p194
      %p196 = scmp.ne.s32.totalorder %s185, %s186
      %p197 = scmp.eq.s32.totalorder %s25, 0
      %p198 = por %p196, %p197
      %p199 = scmp.ne.s32.totalorder %s185, %s186
      %p200 = scmp.eq.s32.totalorder %s26, 3
      %p201 = por %p199, %p200
      %p203 = scmp.ne.s32.totalorder %s186, %s202
      %p204 = scmp.eq.s32.totalorder %s26, 0
      %p205 = por %p203, %p204
      %p206 = scmp.le.s32.totalorder 1, %s20
      %p207 = scmp.lt.s32.totalorder %s20, 5
      %p208 = pnand %p206, %p207
      %p209 = pneg %p208
      // Predicated region
      $region9: #{tpu_custom_call.1} parent=5 // pred_check
        _
      $region10: #{tpu_custom_call.1} parent=5 // pred_check_branch
        %211 = sbr.rel (%p208) target = $region12
      $region11: #{tpu_custom_call.1} parent=5 // pred_region
        %s212 = ssub.s32 %s20, 1
        // Predicated region
        $region13: #{tpu_custom_call.1} parent=11 // pred_check
          %p213 = pneg %p79
        $region14: #{tpu_custom_call.1} parent=11 // pred_check_branch
          %215 = sbr.rel (%p213) target = $region16
        $region15: #{tpu_custom_call.1} parent=11 // pred_region
          _
        $region16: #{tpu_custom_call.1} parent=11 // pred_fallthru
          _
        // Predicated region
        $region17: #{tpu_custom_call.1} parent=11 // pred_check
          %p216 = pneg %p100
        $region18: #{tpu_custom_call.1} parent=11 // pred_check_branch
          %218 = sbr.rel (%p216) target = $region20
        $region19: #{tpu_custom_call.1} parent=11 // pred_region
          %s220 = ssub.s32 19200, 19200
          %221 = vsyncadd [#allocation3], %s220
          %s222 = sshll.u32 [#allocation2], 4
          %s223 = int_to_ptr.vmem [resolvable:$true] %s222
          %228 = dma.hbm_to_vmem [thread:$0]  %s2, 19200, %s223, [#allocation3], 128, 128, 8
        $region20: #{tpu_custom_call.1} parent=11 // pred_fallthru
          _
        // Predicated region
        $region21: #{tpu_custom_call.1} parent=11 // pred_check
          %p229 = pneg %p121
        $region22: #{tpu_custom_call.1} parent=11 // pred_check_branch
          %231 = sbr.rel (%p229) target = $region24
        $region23: #{tpu_custom_call.1} parent=11 // pred_region
          _
        $region24: #{tpu_custom_call.1} parent=11 // pred_fallthru
          _
        // Predicated region
        $region25: #{tpu_custom_call.1} parent=11 // pred_check
          %p232 = pneg %p142
        $region26: #{tpu_custom_call.1} parent=11 // pred_check_branch
          %234 = sbr.rel (%p232) target = $region28
        $region27: #{tpu_custom_call.1} parent=11 // pred_region
          _
        $region28: #{tpu_custom_call.1} parent=11 // pred_fallthru
          _
      $region12: #{tpu_custom_call.1} parent=5 // pred_fallthru
        _
      %p235 = scmp.lt.s32.totalorder %s20, 4
      // Predicated region
      $region29: #{tpu_custom_call.1} parent=5 // pred_check
        %p236 = pneg %p235
      $region30: #{tpu_custom_call.1} parent=5 // pred_check_branch
        %238 = sbr.rel (%p236) target = $region32
      $region31: #{tpu_custom_call.1} parent=5 // pred_region
        // Predicated region
        $region33: #{tpu_custom_call.1} parent=31 // pred_check
          %p239 = pneg %p52
        $region34: #{tpu_custom_call.1} parent=31 // pred_check_branch
          %241 = sbr.rel (%p239) target = $region36
        $region35: #{tpu_custom_call.1} parent=31 // pred_region
          %p242 = scmp.lt.s32.totalorder %s27, 1
          %s243 = scalar_select %p242, %s27, 1
          %s244 = smul.addr %s243, 24
          %s245 = smul.addr %s244, 8
          %s246 = scalar_lea.vmem %s0, %s245
        $region36: #{tpu_custom_call.1} parent=31 // pred_fallthru
          _
      $region32: #{tpu_custom_call.1} parent=5 // pred_fallthru
        _
      %p247 = scmp.le.s32.totalorder 1, %s20
      %p248 = scmp.lt.s32.totalorder %s20, 5
      %p249 = pnand %p247, %p248
      %p250 = pneg %p249
      // Predicated region
      $region37: #{tpu_custom_call.1} parent=5 // pred_check
        _
      $region38: #{tpu_custom_call.1} parent=5 // pred_check_branch
        %252 = sbr.rel (%p249) target = $region40
      $region39: #{tpu_custom_call.1} parent=5 // pred_region
        %s253 = ssub.s32 %s20, 1
        // Predicated region
        $region41: #{tpu_custom_call.1} parent=39 // pred_check
          %p254 = pneg %p100
        $region42: #{tpu_custom_call.1} parent=39 // pred_check_branch
          %256 = sbr.rel (%p254) target = $region44
        $region43: #{tpu_custom_call.1} parent=39 // pred_region
          %257 = dma.done [#allocation3], 19200
        $region44: #{tpu_custom_call.1} parent=39 // pred_fallthru
          _
        %p258 = scmp.lt.s32.totalorder %s29, 1
        %s259 = scalar_select %p258, %s29, 1
        %s260 = smul.addr %s259, 24
        %s261 = smul.addr %s260, 8
        %s262 = scalar_lea.vmem %s0, %s261
        %p263 = pneg %p58
        %p264 = pneg %p55
        %p265 = pneg %p79
        %p266 = pneg %p76
        %p267 = pneg %p100
        %p268 = pneg %p97
        %p269 = pneg %p121
        %p270 = pneg %p118
        %p271 = pneg %p142
        %p272 = pneg %p139
        %p273 = pneg %p170
        %p274 = pneg %p167
        %s275 = sand.u32 %s157, 1
        %s276 = scalar_lea.sflag [#allocation4], %s275
        %s277 = sand.u32 %s157, 1
        %s278 = smul.addr %s277, 32
        %s279 = scalar_lea.vmem [#allocation5], %s278
        %p280 = pneg %p198
        %p281 = pneg %p195
        %s282 = sand.u32 %s185, 1
        %s283 = scalar_lea.sflag [#allocation7], %s282
        %s284 = sand.u32 %s185, 1
        %s285 = smul.addr %s284, 32
        %s286 = scalar_lea.vmem [#allocation6], %s285
        %p287 = scmp.lt.s32.totalorder %s29, 1
        %s288 = scalar_select %p287, %s29, 1
        %s289 = smul.addr %s288, 24
        %s290 = smul.addr %s289, 8
        %s291 = scalar_lea.vmem %s0, %s290
        %s292 = smul.u32 4, %s30
        %s293 = smul.u32 4, %s30
        %s294 = smul.u32 %s30, 4
        %s295 = sadd.s32 %s294, 1
        %s296 = smul.u32 %s295, 16
        %s297 = scalar_lea.vmem %s291, %s296
        %v298 = vld [vmem:[%s297 + $0x1] sm:$0xff]
        %v299 = vld [vmem:[%s297 + $0x11] sm:$0xff]
        %v300 = vld [vmem:[%s297 + $0x21] sm:$0xff]
        %v301 = vld [vmem:[%s297 + $0x31] sm:$0xff]
        %v302 = vld [vmem:[%s1] sm:$0xff]
        %v303 = vld [vmem:[%s1 + $0x8] sm:$0xff]
        %v304 = vld [vmem:[%s1 + $0x10] sm:$0xff]
        %v305 = vld [vmem:[%s1 + $0x18] sm:$0xff]
        %v306 = vld [vmem:[%s1 + $0x20] sm:$0xff]
        %v307 = vld [vmem:[%s1 + $0x28] sm:$0xff]
        %v308 = vld [vmem:[%s297 + $0x2] sm:$0xff]
        %v309 = vld [vmem:[%s297 + $0x12] sm:$0xff]
        %v310 = vld [vmem:[%s297 + $0x22] sm:$0xff]
        %v311 = vld [vmem:[%s297 + $0x32] sm:$0xff]
        %s312 = scalar_lea.vmem %s1, 48
        %v313 = vld [vmem:[%s312] sm:$0xff]
        %v314 = vld [vmem:[%s312 + $0x8] sm:$0xff]
        %v315 = vld [vmem:[%s312 + $0x10] sm:$0xff]
        %v316 = vld [vmem:[%s312 + $0x18] sm:$0xff]
        %v317 = vld [vmem:[%s312 + $0x20] sm:$0xff]
        %v318 = vld [vmem:[%s312 + $0x28] sm:$0xff]
        %vm319 = vcmask 392192
        %v321 = vsel %vm319, %v308, 0
        %v324 = vsel %vm319, %v309, 0
        %v327 = vsel %vm319, %v310, 0
        %v330 = vsel %vm319, %v311, 0
        %332 = vmatprep.subr.mxu0 0.0
        %333 = vmatpush1.msra.mxu0 0.0
        %334 = vmatprep.subr.mxu0 0.0
        %335 = vmatpush1.msra.mxu0 0.0
        %336 = vmatprep.subr.mxu0 0.0
        %337 = vmatpush1.msra.mxu0 0.0
        %338 = vmatprep.subr.mxu0 0.0
        %339 = vmatpush1.msra.mxu0 0.0
        %340 = vmatprep.subr.mxu0 0.0
        %341 = vmatpush1.msra.mxu0 0.0
        %342 = vmatprep.subr.mxu0 0.0
        %343 = vmatpush1.msra.mxu0 0.0
        %344 = vmatprep.subr.mxu0 0.0
        %345 = vmatpush1.msra.mxu0 0.0
        %346 = vmatprep.subr.mxu0 0.0
        %347 = vmatpush1.msra.mxu0 0.0
        %348 = vmatprep.subr.mxu0 0.0
        %349 = vmatpush1.msra.mxu0 0.0
        %350 = vmatprep.subr.mxu0 0.0
        %351 = vmatpush1.msra.mxu0 0.0
        %352 = vmatprep.subr.mxu0 0.0
        %353 = vmatpush1.msra.mxu0 %v318
        %354 = vmatprep.subr.mxu0 0.0
        %355 = vmatpush1.msra.mxu0 %v317
        %356 = vmatprep.subr.mxu0 0.0
        %357 = vmatpush1.msra.mxu0 %v316
        %358 = vmatprep.subr.mxu0 0.0
        %359 = vmatpush1.msra.mxu0 %v315
        %360 = vmatprep.subr.mxu0 0.0
        %361 = vmatpush1.msra.mxu0 %v314
        %362 = vmatprep.subr.mxu0 0.0
        %363 = vmatpush1.msra.mxu0 %v313
        %364 = vmatprep.subr.mxu0 0.0
        %365 = vmatpush2.msra.mxu0 0.0
        %366 = vmatprep.subr.mxu0 0.0
        %367 = vmatpush2.msra.mxu0 0.0
        %368 = vmatprep.subr.mxu0 0.0
        %369 = vmatpush2.msra.mxu0 0.0
        %370 = vmatprep.subr.mxu0 0.0
        %371 = vmatpush2.msra.mxu0 0.0
        %372 = vmatprep.subr.mxu0 0.0
        %373 = vmatpush2.msra.mxu0 0.0
        %374 = vmatprep.subr.mxu0 0.0
        %375 = vmatpush2.msra.mxu0 0.0
        %376 = vmatprep.subr.mxu0 0.0
        %377 = vmatpush2.msra.mxu0 0.0
        %378 = vmatprep.subr.mxu0 0.0
        %379 = vmatpush2.msra.mxu0 0.0
        %380 = vmatprep.subr.mxu0 0.0
        %381 = vmatpush2.msra.mxu0 0.0
        %382 = vmatprep.subr.mxu0 0.0
        %383 = vmatpush2.msra.mxu0 0.0
        %384 = vmatprep.subr.mxu0 0.0
        %385 = vmatpush2.msra.mxu0 0.0
        %386 = vmatprep.subr.mxu0 0.0
        %387 = vmatpush2.msra.mxu0 0.0
        %388 = vmatprep.subr.mxu0 0.0
        %389 = vmatpush2.msra.mxu0 0.0
        %390 = vmatprep.subr.mxu0 0.0
        %391 = vmatpush2.msra.mxu0 0.0
        %392 = vmatprep.subr.mxu0 0.0
        %393 = vmatpush2.msra.mxu0 0.0
        %394 = vmatprep.subr.mxu0 0.0
        %395 = vmatpush2.msra.mxu0 0.0
        %396 = vmatprep.mubr.f32.mxu0 0.0
        %397 = vmatmul.mubr.f32.gmra.mxu0 %v321
        %v398 = vpop.f32.mrf.mxu0
        %v399 = vadd.f32 0.0, %v398
        %v400 = vpop.f32.mrf.mxu0
        %401 = vmatprep.mubr.f32.mxu0 0.0
        %402 = vmatmul.mubr.f32.gmra.mxu0 %v324
        %v403 = vpop.f32.mrf.mxu0
        %v404 = vadd.f32 0.0, %v403
        %v405 = vpop.f32.mrf.mxu0
        %406 = vmatprep.mubr.f32.mxu0 0.0
        %407 = vmatmul.mubr.f32.gmra.mxu0 %v327
        %v408 = vpop.f32.mrf.mxu0
        %v409 = vadd.f32 0.0, %v408
        %v410 = vpop.f32.mrf.mxu0
        %411 = vmatprep.mubr.f32.mxu0 0.0
        %412 = vmatmul.mubr.f32.gmra.mxu0 %v330
        %v413 = vpop.f32.mrf.mxu0
        %v414 = vadd.f32 0.0, %v413
        %v415 = vpop.f32.mrf.mxu0
        %416 = vdwg.mxu0
        %v418 = vsel %vm319, %v298, 0
        %v421 = vsel %vm319, %v299, 0
        %v424 = vsel %vm319, %v300, 0
        %v427 = vsel %vm319, %v301, 0
        %429 = vmatprep.subr.mxu0 0.0
        %430 = vmatpush1.msra.mxu0 0.0
        %431 = vmatprep.subr.mxu0 0.0
        %432 = vmatpush1.msra.mxu0 0.0
        %433 = vmatprep.subr.mxu0 0.0
        %434 = vmatpush1.msra.mxu0 0.0
        %435 = vmatprep.subr.mxu0 0.0
        %436 = vmatpush1.msra.mxu0 0.0
        %437 = vmatprep.subr.mxu0 0.0
        %438 = vmatpush1.msra.mxu0 0.0
        %439 = vmatprep.subr.mxu0 0.0
        %440 = vmatpush1.msra.mxu0 0.0
        %441 = vmatprep.subr.mxu0 0.0
        %442 = vmatpush1.msra.mxu0 0.0
        %443 = vmatprep.subr.mxu0 0.0
        %444 = vmatpush1.msra.mxu0 0.0
        %445 = vmatprep.subr.mxu0 0.0
        %446 = vmatpush1.msra.mxu0 0.0
        %447 = vmatprep.subr.mxu0 0.0
        %448 = vmatpush1.msra.mxu0 0.0
        %449 = vmatprep.subr.mxu0 0.0
        %450 = vmatpush1.msra.mxu0 %v307
        %451 = vmatprep.subr.mxu0 0.0
        %452 = vmatpush1.msra.mxu0 %v306
        %453 = vmatprep.subr.mxu0 0.0
        %454 = vmatpush1.msra.mxu0 %v305
        %455 = vmatprep.subr.mxu0 0.0
        %456 = vmatpush1.msra.mxu0 %v304
        %457 = vmatprep.subr.mxu0 0.0
        %458 = vmatpush1.msra.mxu0 %v303
        %459 = vmatprep.subr.mxu0 0.0
        %460 = vmatpush1.msra.mxu0 %v302
        %461 = vmatprep.subr.mxu0 0.0
        %462 = vmatpush2.msra.mxu0 0.0
        %463 = vmatprep.subr.mxu0 0.0
        %464 = vmatpush2.msra.mxu0 0.0
        %465 = vmatprep.subr.mxu0 0.0
        %466 = vmatpush2.msra.mxu0 0.0
        %467 = vmatprep.subr.mxu0 0.0
        %468 = vmatpush2.msra.mxu0 0.0
        %469 = vmatprep.subr.mxu0 0.0
        %470 = vmatpush2.msra.mxu0 0.0
        %471 = vmatprep.subr.mxu0 0.0
        %472 = vmatpush2.msra.mxu0 0.0
        %473 = vmatprep.subr.mxu0 0.0
        %474 = vmatpush2.msra.mxu0 0.0
        %475 = vmatprep.subr.mxu0 0.0
        %476 = vmatpush2.msra.mxu0 0.0
        %477 = vmatprep.subr.mxu0 0.0
        %478 = vmatpush2.msra.mxu0 0.0
        %479 = vmatprep.subr.mxu0 0.0
        %480 = vmatpush2.msra.mxu0 0.0
        %481 = vmatprep.subr.mxu0 0.0
        %482 = vmatpush2.msra.mxu0 0.0
        %483 = vmatprep.subr.mxu0 0.0
        %484 = vmatpush2.msra.mxu0 0.0
        %485 = vmatprep.subr.mxu0 0.0
        %486 = vmatpush2.msra.mxu0 0.0
        %487 = vmatprep.subr.mxu0 0.0
        %488 = vmatpush2.msra.mxu0 0.0
        %489 = vmatprep.subr.mxu0 0.0
        %490 = vmatpush2.msra.mxu0 0.0
        %491 = vmatprep.subr.mxu0 0.0
        %492 = vmatpush2.msra.mxu0 0.0
        %493 = vmatprep.mubr.f32.mxu0 0.0
        %494 = vmatmul.mubr.f32.gmra.mxu0 %v418
        %v495 = vpop.f32.mrf.mxu0
        %v496 = vadd.f32 %v399, %v495
        %v497 = vpop.f32.mrf.mxu0
        %498 = vmatprep.mubr.f32.mxu0 0.0
        %499 = vmatmul.mubr.f32.gmra.mxu0 %v421
        %v500 = vpop.f32.mrf.mxu0
        %v501 = vadd.f32 %v404, %v500
        %v502 = vpop.f32.mrf.mxu0
        %503 = vmatprep.mubr.f32.mxu0 0.0
        %504 = vmatmul.mubr.f32.gmra.mxu0 %v424
        %v505 = vpop.f32.mrf.mxu0
        %v506 = vadd.f32 %v409, %v505
        %v507 = vpop.f32.mrf.mxu0
        %508 = vmatprep.mubr.f32.mxu0 0.0
        %509 = vmatmul.mubr.f32.gmra.mxu0 %v427
        %v510 = vpop.f32.mrf.mxu0
        %v511 = vadd.f32 %v414, %v510
        %v512 = vpop.f32.mrf.mxu0
        %513 = vdwg.mxu0
        %v514 = vld [vmem:[%s297 + $0x3] sm:$0xff]
        %v515 = vld [vmem:[%s297 + $0x13] sm:$0xff]
        %v516 = vld [vmem:[%s297 + $0x23] sm:$0xff]
        %v517 = vld [vmem:[%s297 + $0x33] sm:$0xff]
        %s518 = scalar_lea.vmem %s1, 96
        %v519 = vld [vmem:[%s518] sm:$0xff]
        %v520 = vld [vmem:[%s518 + $0x8] sm:$0xff]
        %v521 = vld [vmem:[%s518 + $0x10] sm:$0xff]
        %v522 = vld [vmem:[%s518 + $0x18] sm:$0xff]
        %v523 = vld [vmem:[%s518 + $0x20] sm:$0xff]
        %v524 = vld [vmem:[%s518 + $0x28] sm:$0xff]
        %v526 = vsel %vm319, %v514, 0
        %v529 = vsel %vm319, %v515, 0
        %v532 = vsel %vm319, %v516, 0
        %v535 = vsel %vm319, %v517, 0
        %537 = vmatprep.subr.mxu0 0.0
        %538 = vmatpush1.msra.mxu0 0.0
        %539 = vmatprep.subr.mxu0 0.0
        %540 = vmatpush1.msra.mxu0 0.0
        %541 = vmatprep.subr.mxu0 0.0
        %542 = vmatpush1.msra.mxu0 0.0
        %543 = vmatprep.subr.mxu0 0.0
        %544 = vmatpush1.msra.mxu0 0.0
        %545 = vmatprep.subr.mxu0 0.0
        %546 = vmatpush1.msra.mxu0 0.0
        %547 = vmatprep.subr.mxu0 0.0
        %548 = vmatpush1.msra.mxu0 0.0
        %549 = vmatprep.subr.mxu0 0.0
        %550 = vmatpush1.msra.mxu0 0.0
        %551 = vmatprep.subr.mxu0 0.0
        %552 = vmatpush1.msra.mxu0 0.0
        %553 = vmatprep.subr.mxu0 0.0
        %554 = vmatpush1.msra.mxu0 0.0
        %555 = vmatprep.subr.mxu0 0.0
        %556 = vmatpush1.msra.mxu0 0.0
        %557 = vmatprep.subr.mxu0 0.0
        %558 = vmatpush1.msra.mxu0 %v524
        %559 = vmatprep.subr.mxu0 0.0
        %560 = vmatpush1.msra.mxu0 %v523
        %561 = vmatprep.subr.mxu0 0.0
        %562 = vmatpush1.msra.mxu0 %v522
        %563 = vmatprep.subr.mxu0 0.0
        %564 = vmatpush1.msra.mxu0 %v521
        %565 = vmatprep.subr.mxu0 0.0
        %566 = vmatpush1.msra.mxu0 %v520
        %567 = vmatprep.subr.mxu0 0.0
        %568 = vmatpush1.msra.mxu0 %v519
        %569 = vmatprep.subr.mxu0 0.0
        %570 = vmatpush2.msra.mxu0 0.0
        %571 = vmatprep.subr.mxu0 0.0
        %572 = vmatpush2.msra.mxu0 0.0
        %573 = vmatprep.subr.mxu0 0.0
        %574 = vmatpush2.msra.mxu0 0.0
        %575 = vmatprep.subr.mxu0 0.0
        %576 = vmatpush2.msra.mxu0 0.0
        %577 = vmatprep.subr.mxu0 0.0
        %578 = vmatpush2.msra.mxu0 0.0
        %579 = vmatprep.subr.mxu0 0.0
        %580 = vmatpush2.msra.mxu0 0.0
        %581 = vmatprep.subr.mxu0 0.0
        %582 = vmatpush2.msra.mxu0 0.0
        %583 = vmatprep.subr.mxu0 0.0
        %584 = vmatpush2.msra.mxu0 0.0
        %585 = vmatprep.subr.mxu0 0.0
        %586 = vmatpush2.msra.mxu0 0.0
        %587 = vmatprep.subr.mxu0 0.0
        %588 = vmatpush2.msra.mxu0 0.0
        %589 = vmatprep.subr.mxu0 0.0
        %590 = vmatpush2.msra.mxu0 0.0
        %591 = vmatprep.subr.mxu0 0.0
        %592 = vmatpush2.msra.mxu0 0.0
        %593 = vmatprep.subr.mxu0 0.0
        %594 = vmatpush2.msra.mxu0 0.0
        %595 = vmatprep.subr.mxu0 0.0
        %596 = vmatpush2.msra.mxu0 0.0
        %597 = vmatprep.subr.mxu0 0.0
        %598 = vmatpush2.msra.mxu0 0.0
        %599 = vmatprep.subr.mxu0 0.0
        %600 = vmatpush2.msra.mxu0 0.0
        %601 = vmatprep.mubr.f32.mxu0 0.0
        %602 = vmatmul.mubr.f32.gmra.mxu0 %v526
        %v603 = vpop.f32.mrf.mxu0
        %v604 = vadd.f32 0.0, %v603
        %v605 = vpop.f32.mrf.mxu0
        %606 = vmatprep.mubr.f32.mxu0 0.0
        %607 = vmatmul.mubr.f32.gmra.mxu0 %v529
        %v608 = vpop.f32.mrf.mxu0
        %v609 = vadd.f32 0.0, %v608
        %v610 = vpop.f32.mrf.mxu0
        %611 = vmatprep.mubr.f32.mxu0 0.0
        %612 = vmatmul.mubr.f32.gmra.mxu0 %v532
        %v613 = vpop.f32.mrf.mxu0
        %v614 = vadd.f32 0.0, %v613
        %v615 = vpop.f32.mrf.mxu0
        %616 = vmatprep.mubr.f32.mxu0 0.0
        %617 = vmatmul.mubr.f32.gmra.mxu0 %v535
        %v618 = vpop.f32.mrf.mxu0
        %v619 = vadd.f32 0.0, %v618
        %v620 = vpop.f32.mrf.mxu0
        %621 = vdwg.mxu0
        %v622 = vadd.f32 %v496, %v604
        %v623 = vadd.f32 %v501, %v609
        %v624 = vadd.f32 %v506, %v614
        %v625 = vadd.f32 %v511, %v619
        %s626 = sadd.s32 %s294, 2
        %s627 = smul.u32 %s626, 16
        %s628 = scalar_lea.vmem %s291, %s627
        %v629 = vld [vmem:[%s628 + $0x1] sm:$0xff]
        %v630 = vld [vmem:[%s628 + $0x11] sm:$0xff]
        %v631 = vld [vmem:[%s628 + $0x21] sm:$0xff]
        %v632 = vld [vmem:[%s628 + $0x31] sm:$0xff]
        %s633 = scalar_lea.vmem %s1, 144
        %v634 = vld [vmem:[%s633] sm:$0xff]
        %v635 = vld [vmem:[%s633 + $0x8] sm:$0xff]
        %v636 = vld [vmem:[%s633 + $0x10] sm:$0xff]
        %v637 = vld [vmem:[%s633 + $0x18] sm:$0xff]
        %v638 = vld [vmem:[%s633 + $0x20] sm:$0xff]
        %v639 = vld [vmem:[%s633 + $0x28] sm:$0xff]
        %v641 = vsel %vm319, %v629, 0
        %v644 = vsel %vm319, %v630, 0
        %v647 = vsel %vm319, %v631, 0
        %v650 = vsel %vm319, %v632, 0
        %652 = vmatprep.subr.mxu0 0.0
        %653 = vmatpush1.msra.mxu0 0.0
        %654 = vmatprep.subr.mxu0 0.0
        %655 = vmatpush1.msra.mxu0 0.0
        %656 = vmatprep.subr.mxu0 0.0
        %657 = vmatpush1.msra.mxu0 0.0
        %658 = vmatprep.subr.mxu0 0.0
        %659 = vmatpush1.msra.mxu0 0.0
        %660 = vmatprep.subr.mxu0 0.0
        %661 = vmatpush1.msra.mxu0 0.0
        %662 = vmatprep.subr.mxu0 0.0
        %663 = vmatpush1.msra.mxu0 0.0
        %664 = vmatprep.subr.mxu0 0.0
        %665 = vmatpush1.msra.mxu0 0.0
        %666 = vmatprep.subr.mxu0 0.0
        %667 = vmatpush1.msra.mxu0 0.0
        %668 = vmatprep.subr.mxu0 0.0
        %669 = vmatpush1.msra.mxu0 0.0
        %670 = vmatprep.subr.mxu0 0.0
        %671 = vmatpush1.msra.mxu0 0.0
        %672 = vmatprep.subr.mxu0 0.0
        %673 = vmatpush1.msra.mxu0 %v639
        %674 = vmatprep.subr.mxu0 0.0
        %675 = vmatpush1.msra.mxu0 %v638
        %676 = vmatprep.subr.mxu0 0.0
        %677 = vmatpush1.msra.mxu0 %v637
        %678 = vmatprep.subr.mxu0 0.0
        %679 = vmatpush1.msra.mxu0 %v636
        %680 = vmatprep.subr.mxu0 0.0
        %681 = vmatpush1.msra.mxu0 %v635
        %682 = vmatprep.subr.mxu0 0.0
        %683 = vmatpush1.msra.mxu0 %v634
        %684 = vmatprep.subr.mxu0 0.0
        %685 = vmatpush2.msra.mxu0 0.0
        %686 = vmatprep.subr.mxu0 0.0
        %687 = vmatpush2.msra.mxu0 0.0
        %688 = vmatprep.subr.mxu0 0.0
        %689 = vmatpush2.msra.mxu0 0.0
        %690 = vmatprep.subr.mxu0 0.0
        %691 = vmatpush2.msra.mxu0 0.0
        %692 = vmatprep.subr.mxu0 0.0
        %693 = vmatpush2.msra.mxu0 0.0
        %694 = vmatprep.subr.mxu0 0.0
        %695 = vmatpush2.msra.mxu0 0.0
        %696 = vmatprep.subr.mxu0 0.0
        %697 = vmatpush2.msra.mxu0 0.0
        %698 = vmatprep.subr.mxu0 0.0
        %699 = vmatpush2.msra.mxu0 0.0
        %700 = vmatprep.subr.mxu0 0.0
        %701 = vmatpush2.msra.mxu0 0.0
        %702 = vmatprep.subr.mxu0 0.0
        %703 = vmatpush2.msra.mxu0 0.0
        %704 = vmatprep.subr.mxu0 0.0
        %705 = vmatpush2.msra.mxu0 0.0
        %706 = vmatprep.subr.mxu0 0.0
        %707 = vmatpush2.msra.mxu0 0.0
        %708 = vmatprep.subr.mxu0 0.0
        %709 = vmatpush2.msra.mxu0 0.0
        %710 = vmatprep.subr.mxu0 0.0
        %711 = vmatpush2.msra.mxu0 0.0
        %712 = vmatprep.subr.mxu0 0.0
        %713 = vmatpush2.msra.mxu0 0.0
        %714 = vmatprep.subr.mxu0 0.0
        %715 = vmatpush2.msra.mxu0 0.0
        %716 = vmatprep.mubr.f32.mxu0 0.0
        %717 = vmatmul.mubr.f32.gmra.mxu0 %v641
        %v718 = vpop.f32.mrf.mxu0
        %v719 = vadd.f32 0.0, %v718
        %v720 = vpop.f32.mrf.mxu0
        %721 = vmatprep.mubr.f32.mxu0 0.0
        %722 = vmatmul.mubr.f32.gmra.mxu0 %v644
        %v723 = vpop.f32.mrf.mxu0
        %v724 = vadd.f32 0.0, %v723
        %v725 = vpop.f32.mrf.mxu0
        %726 = vmatprep.mubr.f32.mxu0 0.0
        %727 = vmatmul.mubr.f32.gmra.mxu0 %v647
        %v728 = vpop.f32.mrf.mxu0
        %v729 = vadd.f32 0.0, %v728
        %v730 = vpop.f32.mrf.mxu0
        %731 = vmatprep.mubr.f32.mxu0 0.0
        %732 = vmatmul.mubr.f32.gmra.mxu0 %v650
        %v733 = vpop.f32.mrf.mxu0
        %v734 = vadd.f32 0.0, %v733
        %v735 = vpop.f32.mrf.mxu0
        %736 = vdwg.mxu0
        %v737 = vadd.f32 %v622, %v719
        %v738 = vadd.f32 %v623, %v724
        %v739 = vadd.f32 %v624, %v729
        %v740 = vadd.f32 %v625, %v734
        %v741 = vld [vmem:[%s628 + $0x2] sm:$0xff]
        %v742 = vld [vmem:[%s628 + $0x12] sm:$0xff]
        %v743 = vld [vmem:[%s628 + $0x22] sm:$0xff]
        %v744 = vld [vmem:[%s628 + $0x32] sm:$0xff]
        %s745 = scalar_lea.vmem %s1, 192
        %v746 = vld [vmem:[%s745] sm:$0xff]
        %v747 = vld [vmem:[%s745 + $0x8] sm:$0xff]
        %v748 = vld [vmem:[%s745 + $0x10] sm:$0xff]
        %v749 = vld [vmem:[%s745 + $0x18] sm:$0xff]
        %v750 = vld [vmem:[%s745 + $0x20] sm:$0xff]
        %v751 = vld [vmem:[%s745 + $0x28] sm:$0xff]
        %v753 = vsel %vm319, %v741, 0
        %v756 = vsel %vm319, %v742, 0
        %v759 = vsel %vm319, %v743, 0
        %v762 = vsel %vm319, %v744, 0
        %764 = vmatprep.subr.mxu0 0.0
        %765 = vmatpush1.msra.mxu0 0.0
        %766 = vmatprep.subr.mxu0 0.0
        %767 = vmatpush1.msra.mxu0 0.0
        %768 = vmatprep.subr.mxu0 0.0
        %769 = vmatpush1.msra.mxu0 0.0
        %770 = vmatprep.subr.mxu0 0.0
        %771 = vmatpush1.msra.mxu0 0.0
        %772 = vmatprep.subr.mxu0 0.0
        %773 = vmatpush1.msra.mxu0 0.0
        %774 = vmatprep.subr.mxu0 0.0
        %775 = vmatpush1.msra.mxu0 0.0
        %776 = vmatprep.subr.mxu0 0.0
        %777 = vmatpush1.msra.mxu0 0.0
        %778 = vmatprep.subr.mxu0 0.0
        %779 = vmatpush1.msra.mxu0 0.0
        %780 = vmatprep.subr.mxu0 0.0
        %781 = vmatpush1.msra.mxu0 0.0
        %782 = vmatprep.subr.mxu0 0.0
        %783 = vmatpush1.msra.mxu0 0.0
        %784 = vmatprep.subr.mxu0 0.0
        %785 = vmatpush1.msra.mxu0 %v751
        %786 = vmatprep.subr.mxu0 0.0
        %787 = vmatpush1.msra.mxu0 %v750
        %788 = vmatprep.subr.mxu0 0.0
        %789 = vmatpush1.msra.mxu0 %v749
        %790 = vmatprep.subr.mxu0 0.0
        %791 = vmatpush1.msra.mxu0 %v748
        %792 = vmatprep.subr.mxu0 0.0
        %793 = vmatpush1.msra.mxu0 %v747
        %794 = vmatprep.subr.mxu0 0.0
        %795 = vmatpush1.msra.mxu0 %v746
        %796 = vmatprep.subr.mxu0 0.0
        %797 = vmatpush2.msra.mxu0 0.0
        %798 = vmatprep.subr.mxu0 0.0
        %799 = vmatpush2.msra.mxu0 0.0
        %800 = vmatprep.subr.mxu0 0.0
        %801 = vmatpush2.msra.mxu0 0.0
        %802 = vmatprep.subr.mxu0 0.0
        %803 = vmatpush2.msra.mxu0 0.0
        %804 = vmatprep.subr.mxu0 0.0
        %805 = vmatpush2.msra.mxu0 0.0
        %806 = vmatprep.subr.mxu0 0.0
        %807 = vmatpush2.msra.mxu0 0.0
        %808 = vmatprep.subr.mxu0 0.0
        %809 = vmatpush2.msra.mxu0 0.0
        %810 = vmatprep.subr.mxu0 0.0
        %811 = vmatpush2.msra.mxu0 0.0
        %812 = vmatprep.subr.mxu0 0.0
        %813 = vmatpush2.msra.mxu0 0.0
        %814 = vmatprep.subr.mxu0 0.0
        %815 = vmatpush2.msra.mxu0 0.0
        %816 = vmatprep.subr.mxu0 0.0
        %817 = vmatpush2.msra.mxu0 0.0
        %818 = vmatprep.subr.mxu0 0.0
        %819 = vmatpush2.msra.mxu0 0.0
        %820 = vmatprep.subr.mxu0 0.0
        %821 = vmatpush2.msra.mxu0 0.0
        %822 = vmatprep.subr.mxu0 0.0
        %823 = vmatpush2.msra.mxu0 0.0
        %824 = vmatprep.subr.mxu0 0.0
        %825 = vmatpush2.msra.mxu0 0.0
        %826 = vmatprep.subr.mxu0 0.0
        %827 = vmatpush2.msra.mxu0 0.0
        %828 = vmatprep.mubr.f32.mxu0 0.0
        %829 = vmatmul.mubr.f32.gmra.mxu0 %v753
        %v830 = vpop.f32.mrf.mxu0
        %v831 = vadd.f32 0.0, %v830
        %v832 = vpop.f32.mrf.mxu0
        %833 = vmatprep.mubr.f32.mxu0 0.0
        %834 = vmatmul.mubr.f32.gmra.mxu0 %v756
        %v835 = vpop.f32.mrf.mxu0
        %v836 = vadd.f32 0.0, %v835
        %v837 = vpop.f32.mrf.mxu0
        %838 = vmatprep.mubr.f32.mxu0 0.0
        %839 = vmatmul.mubr.f32.gmra.mxu0 %v759
        %v840 = vpop.f32.mrf.mxu0
        %v841 = vadd.f32 0.0, %v840
        %v842 = vpop.f32.mrf.mxu0
        %843 = vmatprep.mubr.f32.mxu0 0.0
        %844 = vmatmul.mubr.f32.gmra.mxu0 %v762
        %v845 = vpop.f32.mrf.mxu0
        %v846 = vadd.f32 0.0, %v845
        %v847 = vpop.f32.mrf.mxu0
        %848 = vdwg.mxu0
        %v849 = vadd.f32 %v737, %v831
        %v850 = vadd.f32 %v738, %v836
        %v851 = vadd.f32 %v739, %v841
        %v852 = vadd.f32 %v740, %v846
        %v853 = vld [vmem:[%s628 + $0x3] sm:$0xff]
        %v854 = vld [vmem:[%s628 + $0x13] sm:$0xff]
        %v855 = vld [vmem:[%s628 + $0x23] sm:$0xff]
        %v856 = vld [vmem:[%s628 + $0x33] sm:$0xff]
        %s857 = scalar_lea.vmem %s1, 240
        %v858 = vld [vmem:[%s857] sm:$0xff]
        %v859 = vld [vmem:[%s857 + $0x8] sm:$0xff]
        %v860 = vld [vmem:[%s857 + $0x10] sm:$0xff]
        %v861 = vld [vmem:[%s857 + $0x18] sm:$0xff]
        %v862 = vld [vmem:[%s857 + $0x20] sm:$0xff]
        %v863 = vld [vmem:[%s857 + $0x28] sm:$0xff]
        %v865 = vsel %vm319, %v853, 0
        %v868 = vsel %vm319, %v854, 0
        %v871 = vsel %vm319, %v855, 0
        %v874 = vsel %vm319, %v856, 0
        %876 = vmatprep.subr.mxu0 0.0
        %877 = vmatpush1.msra.mxu0 0.0
        %878 = vmatprep.subr.mxu0 0.0
        %879 = vmatpush1.msra.mxu0 0.0
        %880 = vmatprep.subr.mxu0 0.0
        %881 = vmatpush1.msra.mxu0 0.0
        %882 = vmatprep.subr.mxu0 0.0
        %883 = vmatpush1.msra.mxu0 0.0
        %884 = vmatprep.subr.mxu0 0.0
        %885 = vmatpush1.msra.mxu0 0.0
        %886 = vmatprep.subr.mxu0 0.0
        %887 = vmatpush1.msra.mxu0 0.0
        %888 = vmatprep.subr.mxu0 0.0
        %889 = vmatpush1.msra.mxu0 0.0
        %890 = vmatprep.subr.mxu0 0.0
        %891 = vmatpush1.msra.mxu0 0.0
        %892 = vmatprep.subr.mxu0 0.0
        %893 = vmatpush1.msra.mxu0 0.0
        %894 = vmatprep.subr.mxu0 0.0
        %895 = vmatpush1.msra.mxu0 0.0
        %896 = vmatprep.subr.mxu0 0.0
        %897 = vmatpush1.msra.mxu0 %v863
        %898 = vmatprep.subr.mxu0 0.0
        %899 = vmatpush1.msra.mxu0 %v862
        %900 = vmatprep.subr.mxu0 0.0
        %901 = vmatpush1.msra.mxu0 %v861
        %902 = vmatprep.subr.mxu0 0.0
        %903 = vmatpush1.msra.mxu0 %v860
        %904 = vmatprep.subr.mxu0 0.0
        %905 = vmatpush1.msra.mxu0 %v859
        %906 = vmatprep.subr.mxu0 0.0
        %907 = vmatpush1.msra.mxu0 %v858
        %908 = vmatprep.subr.mxu0 0.0
        %909 = vmatpush2.msra.mxu0 0.0
        %910 = vmatprep.subr.mxu0 0.0
        %911 = vmatpush2.msra.mxu0 0.0
        %912 = vmatprep.subr.mxu0 0.0
        %913 = vmatpush2.msra.mxu0 0.0
        %914 = vmatprep.subr.mxu0 0.0
        %915 = vmatpush2.msra.mxu0 0.0
        %916 = vmatprep.subr.mxu0 0.0
        %917 = vmatpush2.msra.mxu0 0.0
        %918 = vmatprep.subr.mxu0 0.0
        %919 = vmatpush2.msra.mxu0 0.0
        %920 = vmatprep.subr.mxu0 0.0
        %921 = vmatpush2.msra.mxu0 0.0
        %922 = vmatprep.subr.mxu0 0.0
        %923 = vmatpush2.msra.mxu0 0.0
        %924 = vmatprep.subr.mxu0 0.0
        %925 = vmatpush2.msra.mxu0 0.0
        %926 = vmatprep.subr.mxu0 0.0
        %927 = vmatpush2.msra.mxu0 0.0
        %928 = vmatprep.subr.mxu0 0.0
        %929 = vmatpush2.msra.mxu0 0.0
        %930 = vmatprep.subr.mxu0 0.0
        %931 = vmatpush2.msra.mxu0 0.0
        %932 = vmatprep.subr.mxu0 0.0
        %933 = vmatpush2.msra.mxu0 0.0
        %934 = vmatprep.subr.mxu0 0.0
        %935 = vmatpush2.msra.mxu0 0.0
        %936 = vmatprep.subr.mxu0 0.0
        %937 = vmatpush2.msra.mxu0 0.0
        %938 = vmatprep.subr.mxu0 0.0
        %939 = vmatpush2.msra.mxu0 0.0
        %940 = vmatprep.mubr.f32.mxu0 0.0
        %941 = vmatmul.mubr.f32.gmra.mxu0 %v865
        %v942 = vpop.f32.mrf.mxu0
        %v943 = vadd.f32 0.0, %v942
        %v944 = vpop.f32.mrf.mxu0
        %945 = vmatprep.mubr.f32.mxu0 0.0
        %946 = vmatmul.mubr.f32.gmra.mxu0 %v868
        %v947 = vpop.f32.mrf.mxu0
        %v948 = vadd.f32 0.0, %v947
        %v949 = vpop.f32.mrf.mxu0
        %950 = vmatprep.mubr.f32.mxu0 0.0
        %951 = vmatmul.mubr.f32.gmra.mxu0 %v871
        %v952 = vpop.f32.mrf.mxu0
        %v953 = vadd.f32 0.0, %v952
        %v954 = vpop.f32.mrf.mxu0
        %955 = vmatprep.mubr.f32.mxu0 0.0
        %956 = vmatmul.mubr.f32.gmra.mxu0 %v874
        %v957 = vpop.f32.mrf.mxu0
        %v958 = vadd.f32 0.0, %v957
        %v959 = vpop.f32.mrf.mxu0
        %960 = vdwg.mxu0
        %v961 = vadd.f32 %v849, %v943
        %v962 = vadd.f32 %v850, %v948
        %v963 = vadd.f32 %v851, %v953
        %v964 = vadd.f32 %v852, %v958
        %s965 = sadd.s32 %s294, 3
        %s966 = smul.u32 %s965, 16
        %s967 = scalar_lea.vmem %s291, %s966
        %v968 = vld [vmem:[%s967 + $0x1] sm:$0xff]
        %v969 = vld [vmem:[%s967 + $0x11] sm:$0xff]
        %v970 = vld [vmem:[%s967 + $0x21] sm:$0xff]
        %v971 = vld [vmem:[%s967 + $0x31] sm:$0xff]
        %s972 = scalar_lea.vmem %s1, 288
        %v973 = vld [vmem:[%s972] sm:$0xff]
        %v974 = vld [vmem:[%s972 + $0x8] sm:$0xff]
        %v975 = vld [vmem:[%s972 + $0x10] sm:$0xff]
        %v976 = vld [vmem:[%s972 + $0x18] sm:$0xff]
        %v977 = vld [vmem:[%s972 + $0x20] sm:$0xff]
        %v978 = vld [vmem:[%s972 + $0x28] sm:$0xff]
        %v980 = vsel %vm319, %v968, 0
        %v983 = vsel %vm319, %v969, 0
        %v986 = vsel %vm319, %v970, 0
        %v989 = vsel %vm319, %v971, 0
        %991 = vmatprep.subr.mxu0 0.0
        %992 = vmatpush1.msra.mxu0 0.0
        %993 = vmatprep.subr.mxu0 0.0
        %994 = vmatpush1.msra.mxu0 0.0
        %995 = vmatprep.subr.mxu0 0.0
        %996 = vmatpush1.msra.mxu0 0.0
        %997 = vmatprep.subr.mxu0 0.0
        %998 = vmatpush1.msra.mxu0 0.0
        %999 = vmatprep.subr.mxu0 0.0
        %1000 = vmatpush1.msra.mxu0 0.0
        %1001 = vmatprep.subr.mxu0 0.0
        %1002 = vmatpush1.msra.mxu0 0.0
        %1003 = vmatprep.subr.mxu0 0.0
        %1004 = vmatpush1.msra.mxu0 0.0
        %1005 = vmatprep.subr.mxu0 0.0
        %1006 = vmatpush1.msra.mxu0 0.0
        %1007 = vmatprep.subr.mxu0 0.0
        %1008 = vmatpush1.msra.mxu0 0.0
        %1009 = vmatprep.subr.mxu0 0.0
        %1010 = vmatpush1.msra.mxu0 0.0
        %1011 = vmatprep.subr.mxu0 0.0
        %1012 = vmatpush1.msra.mxu0 %v978
        %1013 = vmatprep.subr.mxu0 0.0
        %1014 = vmatpush1.msra.mxu0 %v977
        %1015 = vmatprep.subr.mxu0 0.0
        %1016 = vmatpush1.msra.mxu0 %v976
        %1017 = vmatprep.subr.mxu0 0.0
        %1018 = vmatpush1.msra.mxu0 %v975
        %1019 = vmatprep.subr.mxu0 0.0
        %1020 = vmatpush1.msra.mxu0 %v974
        %1021 = vmatprep.subr.mxu0 0.0
        %1022 = vmatpush1.msra.mxu0 %v973
        %1023 = vmatprep.subr.mxu0 0.0
        %1024 = vmatpush2.msra.mxu0 0.0
        %1025 = vmatprep.subr.mxu0 0.0
        %1026 = vmatpush2.msra.mxu0 0.0
        %1027 = vmatprep.subr.mxu0 0.0
        %1028 = vmatpush2.msra.mxu0 0.0
        %1029 = vmatprep.subr.mxu0 0.0
        %1030 = vmatpush2.msra.mxu0 0.0
        %1031 = vmatprep.subr.mxu0 0.0
        %1032 = vmatpush2.msra.mxu0 0.0
        %1033 = vmatprep.subr.mxu0 0.0
        %1034 = vmatpush2.msra.mxu0 0.0
        %1035 = vmatprep.subr.mxu0 0.0
        %1036 = vmatpush2.msra.mxu0 0.0
        %1037 = vmatprep.subr.mxu0 0.0
        %1038 = vmatpush2.msra.mxu0 0.0
        %1039 = vmatprep.subr.mxu0 0.0
        %1040 = vmatpush2.msra.mxu0 0.0
        %1041 = vmatprep.subr.mxu0 0.0
        %1042 = vmatpush2.msra.mxu0 0.0
        %1043 = vmatprep.subr.mxu0 0.0
        %1044 = vmatpush2.msra.mxu0 0.0
        %1045 = vmatprep.subr.mxu0 0.0
        %1046 = vmatpush2.msra.mxu0 0.0
        %1047 = vmatprep.subr.mxu0 0.0
        %1048 = vmatpush2.msra.mxu0 0.0
        %1049 = vmatprep.subr.mxu0 0.0
        %1050 = vmatpush2.msra.mxu0 0.0
        %1051 = vmatprep.subr.mxu0 0.0
        %1052 = vmatpush2.msra.mxu0 0.0
        %1053 = vmatprep.subr.mxu0 0.0
        %1054 = vmatpush2.msra.mxu0 0.0
        %1055 = vmatprep.mubr.f32.mxu0 0.0
        %1056 = vmatmul.mubr.f32.gmra.mxu0 %v980
        %v1057 = vpop.f32.mrf.mxu0
        %v1058 = vadd.f32 0.0, %v1057
        %v1059 = vpop.f32.mrf.mxu0
        %1060 = vmatprep.mubr.f32.mxu0 0.0
        %1061 = vmatmul.mubr.f32.gmra.mxu0 %v983
        %v1062 = vpop.f32.mrf.mxu0
        %v1063 = vadd.f32 0.0, %v1062
        %v1064 = vpop.f32.mrf.mxu0
        %1065 = vmatprep.mubr.f32.mxu0 0.0
        %1066 = vmatmul.mubr.f32.gmra.mxu0 %v986
        %v1067 = vpop.f32.mrf.mxu0
        %v1068 = vadd.f32 0.0, %v1067
        %v1069 = vpop.f32.mrf.mxu0
        %1070 = vmatprep.mubr.f32.mxu0 0.0
        %1071 = vmatmul.mubr.f32.gmra.mxu0 %v989
        %v1072 = vpop.f32.mrf.mxu0
        %v1073 = vadd.f32 0.0, %v1072
        %v1074 = vpop.f32.mrf.mxu0
        %1075 = vdwg.mxu0
        %v1076 = vadd.f32 %v961, %v1058
        %v1077 = vadd.f32 %v962, %v1063
        %v1078 = vadd.f32 %v963, %v1068
        %v1079 = vadd.f32 %v964, %v1073
        %v1080 = vld [vmem:[%s967 + $0x2] sm:$0xff]
        %v1081 = vld [vmem:[%s967 + $0x12] sm:$0xff]
        %v1082 = vld [vmem:[%s967 + $0x22] sm:$0xff]
        %v1083 = vld [vmem:[%s967 + $0x32] sm:$0xff]
        %s1084 = scalar_lea.vmem %s1, 336
        %v1085 = vld [vmem:[%s1084] sm:$0xff]
        %v1086 = vld [vmem:[%s1084 + $0x8] sm:$0xff]
        %v1087 = vld [vmem:[%s1084 + $0x10] sm:$0xff]
        %v1088 = vld [vmem:[%s1084 + $0x18] sm:$0xff]
        %v1089 = vld [vmem:[%s1084 + $0x20] sm:$0xff]
        %v1090 = vld [vmem:[%s1084 + $0x28] sm:$0xff]
        %v1092 = vsel %vm319, %v1080, 0
        %v1095 = vsel %vm319, %v1081, 0
        %v1098 = vsel %vm319, %v1082, 0
        %v1101 = vsel %vm319, %v1083, 0
        %1103 = vmatprep.subr.mxu0 0.0
        %1104 = vmatpush1.msra.mxu0 0.0
        %1105 = vmatprep.subr.mxu0 0.0
        %1106 = vmatpush1.msra.mxu0 0.0
        %1107 = vmatprep.subr.mxu0 0.0
        %1108 = vmatpush1.msra.mxu0 0.0
        %1109 = vmatprep.subr.mxu0 0.0
        %1110 = vmatpush1.msra.mxu0 0.0
        %1111 = vmatprep.subr.mxu0 0.0
        %1112 = vmatpush1.msra.mxu0 0.0
        %1113 = vmatprep.subr.mxu0 0.0
        %1114 = vmatpush1.msra.mxu0 0.0
        %1115 = vmatprep.subr.mxu0 0.0
        %1116 = vmatpush1.msra.mxu0 0.0
        %1117 = vmatprep.subr.mxu0 0.0
        %1118 = vmatpush1.msra.mxu0 0.0
        %1119 = vmatprep.subr.mxu0 0.0
        %1120 = vmatpush1.msra.mxu0 0.0
        %1121 = vmatprep.subr.mxu0 0.0
        %1122 = vmatpush1.msra.mxu0 0.0
        %1123 = vmatprep.subr.mxu0 0.0
        %1124 = vmatpush1.msra.mxu0 %v1090
        %1125 = vmatprep.subr.mxu0 0.0
        %1126 = vmatpush1.msra.mxu0 %v1089
        %1127 = vmatprep.subr.mxu0 0.0
        %1128 = vmatpush1.msra.mxu0 %v1088
        %1129 = vmatprep.subr.mxu0 0.0
        %1130 = vmatpush1.msra.mxu0 %v1087
        %1131 = vmatprep.subr.mxu0 0.0
        %1132 = vmatpush1.msra.mxu0 %v1086
        %1133 = vmatprep.subr.mxu0 0.0
        %1134 = vmatpush1.msra.mxu0 %v1085
        %1135 = vmatprep.subr.mxu0 0.0
        %1136 = vmatpush2.msra.mxu0 0.0
        %1137 = vmatprep.subr.mxu0 0.0
        %1138 = vmatpush2.msra.mxu0 0.0
        %1139 = vmatprep.subr.mxu0 0.0
        %1140 = vmatpush2.msra.mxu0 0.0
        %1141 = vmatprep.subr.mxu0 0.0
        %1142 = vmatpush2.msra.mxu0 0.0
        %1143 = vmatprep.subr.mxu0 0.0
        %1144 = vmatpush2.msra.mxu0 0.0
        %1145 = vmatprep.subr.mxu0 0.0
        %1146 = vmatpush2.msra.mxu0 0.0
        %1147 = vmatprep.subr.mxu0 0.0
        %1148 = vmatpush2.msra.mxu0 0.0
        %1149 = vmatprep.subr.mxu0 0.0
        %1150 = vmatpush2.msra.mxu0 0.0
        %1151 = vmatprep.subr.mxu0 0.0
        %1152 = vmatpush2.msra.mxu0 0.0
        %1153 = vmatprep.subr.mxu0 0.0
        %1154 = vmatpush2.msra.mxu0 0.0
        %1155 = vmatprep.subr.mxu0 0.0
        %1156 = vmatpush2.msra.mxu0 0.0
        %1157 = vmatprep.subr.mxu0 0.0
        %1158 = vmatpush2.msra.mxu0 0.0
        %1159 = vmatprep.subr.mxu0 0.0
        %1160 = vmatpush2.msra.mxu0 0.0
        %1161 = vmatprep.subr.mxu0 0.0
        %1162 = vmatpush2.msra.mxu0 0.0
        %1163 = vmatprep.subr.mxu0 0.0
        %1164 = vmatpush2.msra.mxu0 0.0
        %1165 = vmatprep.subr.mxu0 0.0
        %1166 = vmatpush2.msra.mxu0 0.0
        %1167 = vmatprep.mubr.f32.mxu0 0.0
        %1168 = vmatmul.mubr.f32.gmra.mxu0 %v1092
        %v1169 = vpop.f32.mrf.mxu0
        %v1170 = vadd.f32 0.0, %v1169
        %v1171 = vpop.f32.mrf.mxu0
        %1172 = vmatprep.mubr.f32.mxu0 0.0
        %1173 = vmatmul.mubr.f32.gmra.mxu0 %v1095
        %v1174 = vpop.f32.mrf.mxu0
        %v1175 = vadd.f32 0.0, %v1174
        %v1176 = vpop.f32.mrf.mxu0
        %1177 = vmatprep.mubr.f32.mxu0 0.0
        %1178 = vmatmul.mubr.f32.gmra.mxu0 %v1098
        %v1179 = vpop.f32.mrf.mxu0
        %v1180 = vadd.f32 0.0, %v1179
        %v1181 = vpop.f32.mrf.mxu0
        %1182 = vmatprep.mubr.f32.mxu0 0.0
        %1183 = vmatmul.mubr.f32.gmra.mxu0 %v1101
        %v1184 = vpop.f32.mrf.mxu0
        %v1185 = vadd.f32 0.0, %v1184
        %v1186 = vpop.f32.mrf.mxu0
        %1187 = vdwg.mxu0
        %v1188 = vadd.f32 %v1076, %v1170
        %v1189 = vadd.f32 %v1077, %v1175
        %v1190 = vadd.f32 %v1078, %v1180
        %v1191 = vadd.f32 %v1079, %v1185
        %v1192 = vld [vmem:[%s967 + $0x3] sm:$0xff]
        %v1193 = vld [vmem:[%s967 + $0x13] sm:$0xff]
        %v1194 = vld [vmem:[%s967 + $0x23] sm:$0xff]
        %v1195 = vld [vmem:[%s967 + $0x33] sm:$0xff]
        %s1196 = scalar_lea.vmem %s1, 384
        %v1197 = vld [vmem:[%s1196] sm:$0xff]
        %v1198 = vld [vmem:[%s1196 + $0x8] sm:$0xff]
        %v1199 = vld [vmem:[%s1196 + $0x10] sm:$0xff]
        %v1200 = vld [vmem:[%s1196 + $0x18] sm:$0xff]
        %v1201 = vld [vmem:[%s1196 + $0x20] sm:$0xff]
        %v1202 = vld [vmem:[%s1196 + $0x28] sm:$0xff]
        %v1204 = vsel %vm319, %v1192, 0
        %v1207 = vsel %vm319, %v1193, 0
        %v1210 = vsel %vm319, %v1194, 0
        %v1213 = vsel %vm319, %v1195, 0
        %1215 = vmatprep.subr.mxu0 0.0
        %1216 = vmatpush1.msra.mxu0 0.0
        %1217 = vmatprep.subr.mxu0 0.0
        %1218 = vmatpush1.msra.mxu0 0.0
        %1219 = vmatprep.subr.mxu0 0.0
        %1220 = vmatpush1.msra.mxu0 0.0
        %1221 = vmatprep.subr.mxu0 0.0
        %1222 = vmatpush1.msra.mxu0 0.0
        %1223 = vmatprep.subr.mxu0 0.0
        %1224 = vmatpush1.msra.mxu0 0.0
        %1225 = vmatprep.subr.mxu0 0.0
        %1226 = vmatpush1.msra.mxu0 0.0
        %1227 = vmatprep.subr.mxu0 0.0
        %1228 = vmatpush1.msra.mxu0 0.0
        %1229 = vmatprep.subr.mxu0 0.0
        %1230 = vmatpush1.msra.mxu0 0.0
        %1231 = vmatprep.subr.mxu0 0.0
        %1232 = vmatpush1.msra.mxu0 0.0
        %1233 = vmatprep.subr.mxu0 0.0
        %1234 = vmatpush1.msra.mxu0 0.0
        %1235 = vmatprep.subr.mxu0 0.0
        %1236 = vmatpush1.msra.mxu0 %v1202
        %1237 = vmatprep.subr.mxu0 0.0
        %1238 = vmatpush1.msra.mxu0 %v1201
        %1239 = vmatprep.subr.mxu0 0.0
        %1240 = vmatpush1.msra.mxu0 %v1200
        %1241 = vmatprep.subr.mxu0 0.0
        %1242 = vmatpush1.msra.mxu0 %v1199
        %1243 = vmatprep.subr.mxu0 0.0
        %1244 = vmatpush1.msra.mxu0 %v1198
        %1245 = vmatprep.subr.mxu0 0.0
        %1246 = vmatpush1.msra.mxu0 %v1197
        %1247 = vmatprep.subr.mxu0 0.0
        %1248 = vmatpush2.msra.mxu0 0.0
        %1249 = vmatprep.subr.mxu0 0.0
        %1250 = vmatpush2.msra.mxu0 0.0
        %1251 = vmatprep.subr.mxu0 0.0
        %1252 = vmatpush2.msra.mxu0 0.0
        %1253 = vmatprep.subr.mxu0 0.0
        %1254 = vmatpush2.msra.mxu0 0.0
        %1255 = vmatprep.subr.mxu0 0.0
        %1256 = vmatpush2.msra.mxu0 0.0
        %1257 = vmatprep.subr.mxu0 0.0
        %1258 = vmatpush2.msra.mxu0 0.0
        %1259 = vmatprep.subr.mxu0 0.0
        %1260 = vmatpush2.msra.mxu0 0.0
        %1261 = vmatprep.subr.mxu0 0.0
        %1262 = vmatpush2.msra.mxu0 0.0
        %1263 = vmatprep.subr.mxu0 0.0
        %1264 = vmatpush2.msra.mxu0 0.0
        %1265 = vmatprep.subr.mxu0 0.0
        %1266 = vmatpush2.msra.mxu0 0.0
        %1267 = vmatprep.subr.mxu0 0.0
        %1268 = vmatpush2.msra.mxu0 0.0
        %1269 = vmatprep.subr.mxu0 0.0
        %1270 = vmatpush2.msra.mxu0 0.0
        %1271 = vmatprep.subr.mxu0 0.0
        %1272 = vmatpush2.msra.mxu0 0.0
        %1273 = vmatprep.subr.mxu0 0.0
        %1274 = vmatpush2.msra.mxu0 0.0
        %1275 = vmatprep.subr.mxu0 0.0
        %1276 = vmatpush2.msra.mxu0 0.0
        %1277 = vmatprep.subr.mxu0 0.0
        %1278 = vmatpush2.msra.mxu0 0.0
        %1279 = vmatprep.mubr.f32.mxu0 0.0
        %1280 = vmatmul.mubr.f32.gmra.mxu0 %v1204
        %v1281 = vpop.f32.mrf.mxu0
        %v1282 = vadd.f32 0.0, %v1281
        %v1283 = vpop.f32.mrf.mxu0
        %1284 = vmatprep.mubr.f32.mxu0 0.0
        %1285 = vmatmul.mubr.f32.gmra.mxu0 %v1207
        %v1286 = vpop.f32.mrf.mxu0
        %v1287 = vadd.f32 0.0, %v1286
        %v1288 = vpop.f32.mrf.mxu0
        %1289 = vmatprep.mubr.f32.mxu0 0.0
        %1290 = vmatmul.mubr.f32.gmra.mxu0 %v1210
        %v1291 = vpop.f32.mrf.mxu0
        %v1292 = vadd.f32 0.0, %v1291
        %v1293 = vpop.f32.mrf.mxu0
        %1294 = vmatprep.mubr.f32.mxu0 0.0
        %1295 = vmatmul.mubr.f32.gmra.mxu0 %v1213
        %v1296 = vpop.f32.mrf.mxu0
        %v1297 = vadd.f32 0.0, %v1296
        %v1298 = vpop.f32.mrf.mxu0
        %1299 = vdwg.mxu0
        %v1300 = vadd.f32 %v1188, %v1282
        %v1301 = vadd.f32 %v1189, %v1287
        %v1302 = vadd.f32 %v1190, %v1292
        %v1303 = vadd.f32 %v1191, %v1297
        %v1304 = vld [vmem:[%s3] sm:$0x1]
        %v1306 = vlaneseq
        %v1307 = vshrl.u32 %v1306, 7
        %v1308 = vsub.s32 0, %v1307
        %v1309 = vrot.slane %v1304, %v1308
        %v1311 = vadd.f32 %v1300, %v1309
        %v1312 = vadd.f32 %v1301, %v1309
        %v1313 = vadd.f32 %v1302, %v1309
        %v1314 = vadd.f32 %v1303, %v1309
        %v1315 = vmax.f32 %v1311, 0.0
        %v1316 = vmax.f32 %v1312, 0.0
        %v1317 = vmax.f32 %v1313, 0.0
        %v1318 = vmax.f32 %v1314, 0.0
        %vm1319 = vcmask 523264
        %1320 = vst.msk [vmem:[%s279] sm:$0xff] %vm1319, %v1315
        %1321 = vst.msk [vmem:[%s279 + $0x8] sm:$0xff] %vm1319, %v1316
        %1322 = vst.msk [vmem:[%s279 + $0x10] sm:$0xff] %vm1319, %v1317
        %1323 = vst.msk [vmem:[%s279 + $0x18] sm:$0xff] %vm1319, %v1318
        %s1324 = smul.u32 %s294, 16
        %s1325 = scalar_lea.vmem %s291, %s1324
        %v1326 = vld [vmem:[%s1325] sm:$0xff]
        %v1327 = vld [vmem:[%s1325 + $0x10] sm:$0xff]
        %v1328 = vld [vmem:[%s1325 + $0x20] sm:$0xff]
        %v1329 = vld [vmem:[%s1325 + $0x30] sm:$0xff]
        %v1330 = vld [vmem:[#allocation2] sm:$0xff]
        %v1331 = vld [vmem:[#allocation2 + $0x8] sm:$0xff]
        %v1332 = vld [vmem:[#allocation2 + $0x10] sm:$0xff]
        %v1333 = vld [vmem:[#allocation2 + $0x18] sm:$0xff]
        %v1334 = vld [vmem:[#allocation2 + $0x20] sm:$0xff]
        %v1335 = vld [vmem:[#allocation2 + $0x28] sm:$0xff]
        %v1336 = vld [vmem:[%s1325 + $0x1] sm:$0xff]
        %v1337 = vld [vmem:[%s1325 + $0x11] sm:$0xff]
        %v1338 = vld [vmem:[%s1325 + $0x21] sm:$0xff]
        %v1339 = vld [vmem:[%s1325 + $0x31] sm:$0xff]
        %s1340 = scalar_lea.vmem [#allocation2], 48
        %v1341 = vld [vmem:[%s1340] sm:$0xff]
        %v1342 = vld [vmem:[%s1340 + $0x8] sm:$0xff]
        %v1343 = vld [vmem:[%s1340 + $0x10] sm:$0xff]
        %v1344 = vld [vmem:[%s1340 + $0x18] sm:$0xff]
        %v1345 = vld [vmem:[%s1340 + $0x20] sm:$0xff]
        %v1346 = vld [vmem:[%s1340 + $0x28] sm:$0xff]
        %v1348 = vsel %vm319, %v1336, 0
        %v1351 = vsel %vm319, %v1337, 0
        %v1354 = vsel %vm319, %v1338, 0
        %v1357 = vsel %vm319, %v1339, 0
        %1359 = vmatprep.subr.mxu0 0.0
        %1360 = vmatpush1.msra.mxu0 0.0
        %1361 = vmatprep.subr.mxu0 0.0
        %1362 = vmatpush1.msra.mxu0 0.0
        %1363 = vmatprep.subr.mxu0 0.0
        %1364 = vmatpush1.msra.mxu0 0.0
        %1365 = vmatprep.subr.mxu0 0.0
        %1366 = vmatpush1.msra.mxu0 0.0
        %1367 = vmatprep.subr.mxu0 0.0
        %1368 = vmatpush1.msra.mxu0 0.0
        %1369 = vmatprep.subr.mxu0 0.0
        %1370 = vmatpush1.msra.mxu0 0.0
        %1371 = vmatprep.subr.mxu0 0.0
        %1372 = vmatpush1.msra.mxu0 0.0
        %1373 = vmatprep.subr.mxu0 0.0
        %1374 = vmatpush1.msra.mxu0 0.0
        %1375 = vmatprep.subr.mxu0 0.0
        %1376 = vmatpush1.msra.mxu0 0.0
        %1377 = vmatprep.subr.mxu0 0.0
        %1378 = vmatpush1.msra.mxu0 0.0
        %1379 = vmatprep.subr.mxu0 0.0
        %1380 = vmatpush1.msra.mxu0 %v1346
        %1381 = vmatprep.subr.mxu0 0.0
        %1382 = vmatpush1.msra.mxu0 %v1345
        %1383 = vmatprep.subr.mxu0 0.0
        %1384 = vmatpush1.msra.mxu0 %v1344
        %1385 = vmatprep.subr.mxu0 0.0
        %1386 = vmatpush1.msra.mxu0 %v1343
        %1387 = vmatprep.subr.mxu0 0.0
        %1388 = vmatpush1.msra.mxu0 %v1342
        %1389 = vmatprep.subr.mxu0 0.0
        %1390 = vmatpush1.msra.mxu0 %v1341
        %1391 = vmatprep.subr.mxu0 0.0
        %1392 = vmatpush2.msra.mxu0 0.0
        %1393 = vmatprep.subr.mxu0 0.0
        %1394 = vmatpush2.msra.mxu0 0.0
        %1395 = vmatprep.subr.mxu0 0.0
        %1396 = vmatpush2.msra.mxu0 0.0
        %1397 = vmatprep.subr.mxu0 0.0
        %1398 = vmatpush2.msra.mxu0 0.0
        %1399 = vmatprep.subr.mxu0 0.0
        %1400 = vmatpush2.msra.mxu0 0.0
        %1401 = vmatprep.subr.mxu0 0.0
        %1402 = vmatpush2.msra.mxu0 0.0
        %1403 = vmatprep.subr.mxu0 0.0
        %1404 = vmatpush2.msra.mxu0 0.0
        %1405 = vmatprep.subr.mxu0 0.0
        %1406 = vmatpush2.msra.mxu0 0.0
        %1407 = vmatprep.subr.mxu0 0.0
        %1408 = vmatpush2.msra.mxu0 0.0
        %1409 = vmatprep.subr.mxu0 0.0
        %1410 = vmatpush2.msra.mxu0 0.0
        %1411 = vmatprep.subr.mxu0 0.0
        %1412 = vmatpush2.msra.mxu0 0.0
        %1413 = vmatprep.subr.mxu0 0.0
        %1414 = vmatpush2.msra.mxu0 0.0
        %1415 = vmatprep.subr.mxu0 0.0
        %1416 = vmatpush2.msra.mxu0 0.0
        %1417 = vmatprep.subr.mxu0 0.0
        %1418 = vmatpush2.msra.mxu0 0.0
        %1419 = vmatprep.subr.mxu0 0.0
        %1420 = vmatpush2.msra.mxu0 0.0
        %1421 = vmatprep.subr.mxu0 0.0
        %1422 = vmatpush2.msra.mxu0 0.0
        %1423 = vmatprep.mubr.f32.mxu0 0.0
        %1424 = vmatmul.mubr.f32.gmra.mxu0 %v1348
        %v1425 = vpop.f32.mrf.mxu0
        %v1426 = vadd.f32 0.0, %v1425
        %v1427 = vpop.f32.mrf.mxu0
        %1428 = vmatprep.mubr.f32.mxu0 0.0
        %1429 = vmatmul.mubr.f32.gmra.mxu0 %v1351
        %v1430 = vpop.f32.mrf.mxu0
        %v1431 = vadd.f32 0.0, %v1430
        %v1432 = vpop.f32.mrf.mxu0
        %1433 = vmatprep.mubr.f32.mxu0 0.0
        %1434 = vmatmul.mubr.f32.gmra.mxu0 %v1354
        %v1435 = vpop.f32.mrf.mxu0
        %v1436 = vadd.f32 0.0, %v1435
        %v1437 = vpop.f32.mrf.mxu0
        %1438 = vmatprep.mubr.f32.mxu0 0.0
        %1439 = vmatmul.mubr.f32.gmra.mxu0 %v1357
        %v1440 = vpop.f32.mrf.mxu0
        %v1441 = vadd.f32 0.0, %v1440
        %v1442 = vpop.f32.mrf.mxu0
        %1443 = vdwg.mxu0
        %v1445 = vsel %vm319, %v1326, 0
        %v1448 = vsel %vm319, %v1327, 0
        %v1451 = vsel %vm319, %v1328, 0
        %v1454 = vsel %vm319, %v1329, 0
        %1456 = vmatprep.subr.mxu0 0.0
        %1457 = vmatpush1.msra.mxu0 0.0
        %1458 = vmatprep.subr.mxu0 0.0
        %1459 = vmatpush1.msra.mxu0 0.0
        %1460 = vmatprep.subr.mxu0 0.0
        %1461 = vmatpush1.msra.mxu0 0.0
        %1462 = vmatprep.subr.mxu0 0.0
        %1463 = vmatpush1.msra.mxu0 0.0
        %1464 = vmatprep.subr.mxu0 0.0
        %1465 = vmatpush1.msra.mxu0 0.0
        %1466 = vmatprep.subr.mxu0 0.0
        %1467 = vmatpush1.msra.mxu0 0.0
        %1468 = vmatprep.subr.mxu0 0.0
        %1469 = vmatpush1.msra.mxu0 0.0
        %1470 = vmatprep.subr.mxu0 0.0
        %1471 = vmatpush1.msra.mxu0 0.0
        %1472 = vmatprep.subr.mxu0 0.0
        %1473 = vmatpush1.msra.mxu0 0.0
        %1474 = vmatprep.subr.mxu0 0.0
        %1475 = vmatpush1.msra.mxu0 0.0
        %1476 = vmatprep.subr.mxu0 0.0
        %1477 = vmatpush1.msra.mxu0 %v1335
        %1478 = vmatprep.subr.mxu0 0.0
        %1479 = vmatpush1.msra.mxu0 %v1334
        %1480 = vmatprep.subr.mxu0 0.0
        %1481 = vmatpush1.msra.mxu0 %v1333
        %1482 = vmatprep.subr.mxu0 0.0
        %1483 = vmatpush1.msra.mxu0 %v1332
        %1484 = vmatprep.subr.mxu0 0.0
        %1485 = vmatpush1.msra.mxu0 %v1331
        %1486 = vmatprep.subr.mxu0 0.0
        %1487 = vmatpush1.msra.mxu0 %v1330
        %1488 = vmatprep.subr.mxu0 0.0
        %1489 = vmatpush2.msra.mxu0 0.0
        %1490 = vmatprep.subr.mxu0 0.0
        %1491 = vmatpush2.msra.mxu0 0.0
        %1492 = vmatprep.subr.mxu0 0.0
        %1493 = vmatpush2.msra.mxu0 0.0
        %1494 = vmatprep.subr.mxu0 0.0
        %1495 = vmatpush2.msra.mxu0 0.0
        %1496 = vmatprep.subr.mxu0 0.0
        %1497 = vmatpush2.msra.mxu0 0.0
        %1498 = vmatprep.subr.mxu0 0.0
        %1499 = vmatpush2.msra.mxu0 0.0
        %1500 = vmatprep.subr.mxu0 0.0
        %1501 = vmatpush2.msra.mxu0 0.0
        %1502 = vmatprep.subr.mxu0 0.0
        %1503 = vmatpush2.msra.mxu0 0.0
        %1504 = vmatprep.subr.mxu0 0.0
        %1505 = vmatpush2.msra.mxu0 0.0
        %1506 = vmatprep.subr.mxu0 0.0
        %1507 = vmatpush2.msra.mxu0 0.0
        %1508 = vmatprep.subr.mxu0 0.0
        %1509 = vmatpush2.msra.mxu0 0.0
        %1510 = vmatprep.subr.mxu0 0.0
        %1511 = vmatpush2.msra.mxu0 0.0
        %1512 = vmatprep.subr.mxu0 0.0
        %1513 = vmatpush2.msra.mxu0 0.0
        %1514 = vmatprep.subr.mxu0 0.0
        %1515 = vmatpush2.msra.mxu0 0.0
        %1516 = vmatprep.subr.mxu0 0.0
        %1517 = vmatpush2.msra.mxu0 0.0
        %1518 = vmatprep.subr.mxu0 0.0
        %1519 = vmatpush2.msra.mxu0 0.0
        %1520 = vmatprep.mubr.f32.mxu0 0.0
        %1521 = vmatmul.mubr.f32.gmra.mxu0 %v1445
        %v1522 = vpop.f32.mrf.mxu0
        %v1523 = vadd.f32 %v1426, %v1522
        %v1524 = vpop.f32.mrf.mxu0
        %1525 = vmatprep.mubr.f32.mxu0 0.0
        %1526 = vmatmul.mubr.f32.gmra.mxu0 %v1448
        %v1527 = vpop.f32.mrf.mxu0
        %v1528 = vadd.f32 %v1431, %v1527
        %v1529 = vpop.f32.mrf.mxu0
        %1530 = vmatprep.mubr.f32.mxu0 0.0
        %1531 = vmatmul.mubr.f32.gmra.mxu0 %v1451
        %v1532 = vpop.f32.mrf.mxu0
        %v1533 = vadd.f32 %v1436, %v1532
        %v1534 = vpop.f32.mrf.mxu0
        %1535 = vmatprep.mubr.f32.mxu0 0.0
        %1536 = vmatmul.mubr.f32.gmra.mxu0 %v1454
        %v1537 = vpop.f32.mrf.mxu0
        %v1538 = vadd.f32 %v1441, %v1537
        %v1539 = vpop.f32.mrf.mxu0
        %1540 = vdwg.mxu0
        %v1541 = vld [vmem:[%s1325 + $0x2] sm:$0xff]
        %v1542 = vld [vmem:[%s1325 + $0x12] sm:$0xff]
        %v1543 = vld [vmem:[%s1325 + $0x22] sm:$0xff]
        %v1544 = vld [vmem:[%s1325 + $0x32] sm:$0xff]
        %s1545 = scalar_lea.vmem [#allocation2], 96
        %v1546 = vld [vmem:[%s1545] sm:$0xff]
        %v1547 = vld [vmem:[%s1545 + $0x8] sm:$0xff]
        %v1548 = vld [vmem:[%s1545 + $0x10] sm:$0xff]
        %v1549 = vld [vmem:[%s1545 + $0x18] sm:$0xff]
        %v1550 = vld [vmem:[%s1545 + $0x20] sm:$0xff]
        %v1551 = vld [vmem:[%s1545 + $0x28] sm:$0xff]
        %v1553 = vsel %vm319, %v1541, 0
        %v1556 = vsel %vm319, %v1542, 0
        %v1559 = vsel %vm319, %v1543, 0
        %v1562 = vsel %vm319, %v1544, 0
        %1564 = vmatprep.subr.mxu0 0.0
        %1565 = vmatpush1.msra.mxu0 0.0
        %1566 = vmatprep.subr.mxu0 0.0
        %1567 = vmatpush1.msra.mxu0 0.0
        %1568 = vmatprep.subr.mxu0 0.0
        %1569 = vmatpush1.msra.mxu0 0.0
        %1570 = vmatprep.subr.mxu0 0.0
        %1571 = vmatpush1.msra.mxu0 0.0
        %1572 = vmatprep.subr.mxu0 0.0
        %1573 = vmatpush1.msra.mxu0 0.0
        %1574 = vmatprep.subr.mxu0 0.0
        %1575 = vmatpush1.msra.mxu0 0.0
        %1576 = vmatprep.subr.mxu0 0.0
        %1577 = vmatpush1.msra.mxu0 0.0
        %1578 = vmatprep.subr.mxu0 0.0
        %1579 = vmatpush1.msra.mxu0 0.0
        %1580 = vmatprep.subr.mxu0 0.0
        %1581 = vmatpush1.msra.mxu0 0.0
        %1582 = vmatprep.subr.mxu0 0.0
        %1583 = vmatpush1.msra.mxu0 0.0
        %1584 = vmatprep.subr.mxu0 0.0
        %1585 = vmatpush1.msra.mxu0 %v1551
        %1586 = vmatprep.subr.mxu0 0.0
        %1587 = vmatpush1.msra.mxu0 %v1550
        %1588 = vmatprep.subr.mxu0 0.0
        %1589 = vmatpush1.msra.mxu0 %v1549
        %1590 = vmatprep.subr.mxu0 0.0
        %1591 = vmatpush1.msra.mxu0 %v1548
        %1592 = vmatprep.subr.mxu0 0.0
        %1593 = vmatpush1.msra.mxu0 %v1547
        %1594 = vmatprep.subr.mxu0 0.0
        %1595 = vmatpush1.msra.mxu0 %v1546
        %1596 = vmatprep.subr.mxu0 0.0
        %1597 = vmatpush2.msra.mxu0 0.0
        %1598 = vmatprep.subr.mxu0 0.0
        %1599 = vmatpush2.msra.mxu0 0.0
        %1600 = vmatprep.subr.mxu0 0.0
        %1601 = vmatpush2.msra.mxu0 0.0
        %1602 = vmatprep.subr.mxu0 0.0
        %1603 = vmatpush2.msra.mxu0 0.0
        %1604 = vmatprep.subr.mxu0 0.0
        %1605 = vmatpush2.msra.mxu0 0.0
        %1606 = vmatprep.subr.mxu0 0.0
        %1607 = vmatpush2.msra.mxu0 0.0
        %1608 = vmatprep.subr.mxu0 0.0
        %1609 = vmatpush2.msra.mxu0 0.0
        %1610 = vmatprep.subr.mxu0 0.0
        %1611 = vmatpush2.msra.mxu0 0.0
        %1612 = vmatprep.subr.mxu0 0.0
        %1613 = vmatpush2.msra.mxu0 0.0
        %1614 = vmatprep.subr.mxu0 0.0
        %1615 = vmatpush2.msra.mxu0 0.0
        %1616 = vmatprep.subr.mxu0 0.0
        %1617 = vmatpush2.msra.mxu0 0.0
        %1618 = vmatprep.subr.mxu0 0.0
        %1619 = vmatpush2.msra.mxu0 0.0
        %1620 = vmatprep.subr.mxu0 0.0
        %1621 = vmatpush2.msra.mxu0 0.0
        %1622 = vmatprep.subr.mxu0 0.0
        %1623 = vmatpush2.msra.mxu0 0.0
        %1624 = vmatprep.subr.mxu0 0.0
        %1625 = vmatpush2.msra.mxu0 0.0
        %1626 = vmatprep.subr.mxu0 0.0
        %1627 = vmatpush2.msra.mxu0 0.0
        %1628 = vmatprep.mubr.f32.mxu0 0.0
        %1629 = vmatmul.mubr.f32.gmra.mxu0 %v1553
        %v1630 = vpop.f32.mrf.mxu0
        %v1631 = vadd.f32 0.0, %v1630
        %v1632 = vpop.f32.mrf.mxu0
        %1633 = vmatprep.mubr.f32.mxu0 0.0
        %1634 = vmatmul.mubr.f32.gmra.mxu0 %v1556
        %v1635 = vpop.f32.mrf.mxu0
        %v1636 = vadd.f32 0.0, %v1635
        %v1637 = vpop.f32.mrf.mxu0
        %1638 = vmatprep.mubr.f32.mxu0 0.0
        %1639 = vmatmul.mubr.f32.gmra.mxu0 %v1559
        %v1640 = vpop.f32.mrf.mxu0
        %v1641 = vadd.f32 0.0, %v1640
        %v1642 = vpop.f32.mrf.mxu0
        %1643 = vmatprep.mubr.f32.mxu0 0.0
        %1644 = vmatmul.mubr.f32.gmra.mxu0 %v1562
        %v1645 = vpop.f32.mrf.mxu0
        %v1646 = vadd.f32 0.0, %v1645
        %v1647 = vpop.f32.mrf.mxu0
        %1648 = vdwg.mxu0
        %v1649 = vadd.f32 %v1523, %v1631
        %v1650 = vadd.f32 %v1528, %v1636
        %v1651 = vadd.f32 %v1533, %v1641
        %v1652 = vadd.f32 %v1538, %v1646
        %v1653 = vld [vmem:[%s1325 + $0x3] sm:$0xff]
        %v1654 = vld [vmem:[%s1325 + $0x13] sm:$0xff]
        %v1655 = vld [vmem:[%s1325 + $0x23] sm:$0xff]
        %v1656 = vld [vmem:[%s1325 + $0x33] sm:$0xff]
        %s1657 = scalar_lea.vmem [#allocation2], 144
        %v1658 = vld [vmem:[%s1657] sm:$0xff]
        %v1659 = vld [vmem:[%s1657 + $0x8] sm:$0xff]
        %v1660 = vld [vmem:[%s1657 + $0x10] sm:$0xff]
        %v1661 = vld [vmem:[%s1657 + $0x18] sm:$0xff]
        %v1662 = vld [vmem:[%s1657 + $0x20] sm:$0xff]
        %v1663 = vld [vmem:[%s1657 + $0x28] sm:$0xff]
        %v1665 = vsel %vm319, %v1653, 0
        %v1668 = vsel %vm319, %v1654, 0
        %v1671 = vsel %vm319, %v1655, 0
        %v1674 = vsel %vm319, %v1656, 0
        %1676 = vmatprep.subr.mxu0 0.0
        %1677 = vmatpush1.msra.mxu0 0.0
        %1678 = vmatprep.subr.mxu0 0.0
        %1679 = vmatpush1.msra.mxu0 0.0
        %1680 = vmatprep.subr.mxu0 0.0
        %1681 = vmatpush1.msra.mxu0 0.0
        %1682 = vmatprep.subr.mxu0 0.0
        %1683 = vmatpush1.msra.mxu0 0.0
        %1684 = vmatprep.subr.mxu0 0.0
        %1685 = vmatpush1.msra.mxu0 0.0
        %1686 = vmatprep.subr.mxu0 0.0
        %1687 = vmatpush1.msra.mxu0 0.0
        %1688 = vmatprep.subr.mxu0 0.0
        %1689 = vmatpush1.msra.mxu0 0.0
        %1690 = vmatprep.subr.mxu0 0.0
        %1691 = vmatpush1.msra.mxu0 0.0
        %1692 = vmatprep.subr.mxu0 0.0
        %1693 = vmatpush1.msra.mxu0 0.0
        %1694 = vmatprep.subr.mxu0 0.0
        %1695 = vmatpush1.msra.mxu0 0.0
        %1696 = vmatprep.subr.mxu0 0.0
        %1697 = vmatpush1.msra.mxu0 %v1663
        %1698 = vmatprep.subr.mxu0 0.0
        %1699 = vmatpush1.msra.mxu0 %v1662
        %1700 = vmatprep.subr.mxu0 0.0
        %1701 = vmatpush1.msra.mxu0 %v1661
        %1702 = vmatprep.subr.mxu0 0.0
        %1703 = vmatpush1.msra.mxu0 %v1660
        %1704 = vmatprep.subr.mxu0 0.0
        %1705 = vmatpush1.msra.mxu0 %v1659
        %1706 = vmatprep.subr.mxu0 0.0
        %1707 = vmatpush1.msra.mxu0 %v1658
        %1708 = vmatprep.subr.mxu0 0.0
        %1709 = vmatpush2.msra.mxu0 0.0
        %1710 = vmatprep.subr.mxu0 0.0
        %1711 = vmatpush2.msra.mxu0 0.0
        %1712 = vmatprep.subr.mxu0 0.0
        %1713 = vmatpush2.msra.mxu0 0.0
        %1714 = vmatprep.subr.mxu0 0.0
        %1715 = vmatpush2.msra.mxu0 0.0
        %1716 = vmatprep.subr.mxu0 0.0
        %1717 = vmatpush2.msra.mxu0 0.0
        %1718 = vmatprep.subr.mxu0 0.0
        %1719 = vmatpush2.msra.mxu0 0.0
        %1720 = vmatprep.subr.mxu0 0.0
        %1721 = vmatpush2.msra.mxu0 0.0
        %1722 = vmatprep.subr.mxu0 0.0
        %1723 = vmatpush2.msra.mxu0 0.0
        %1724 = vmatprep.subr.mxu0 0.0
        %1725 = vmatpush2.msra.mxu0 0.0
        %1726 = vmatprep.subr.mxu0 0.0
        %1727 = vmatpush2.msra.mxu0 0.0
        %1728 = vmatprep.subr.mxu0 0.0
        %1729 = vmatpush2.msra.mxu0 0.0
        %1730 = vmatprep.subr.mxu0 0.0
        %1731 = vmatpush2.msra.mxu0 0.0
        %1732 = vmatprep.subr.mxu0 0.0
        %1733 = vmatpush2.msra.mxu0 0.0
        %1734 = vmatprep.subr.mxu0 0.0
        %1735 = vmatpush2.msra.mxu0 0.0
        %1736 = vmatprep.subr.mxu0 0.0
        %1737 = vmatpush2.msra.mxu0 0.0
        %1738 = vmatprep.subr.mxu0 0.0
        %1739 = vmatpush2.msra.mxu0 0.0
        %1740 = vmatprep.mubr.f32.mxu0 0.0
        %1741 = vmatmul.mubr.f32.gmra.mxu0 %v1665
        %v1742 = vpop.f32.mrf.mxu0
        %v1743 = vadd.f32 0.0, %v1742
        %v1744 = vpop.f32.mrf.mxu0
        %1745 = vmatprep.mubr.f32.mxu0 0.0
        %1746 = vmatmul.mubr.f32.gmra.mxu0 %v1668
        %v1747 = vpop.f32.mrf.mxu0
        %v1748 = vadd.f32 0.0, %v1747
        %v1749 = vpop.f32.mrf.mxu0
        %1750 = vmatprep.mubr.f32.mxu0 0.0
        %1751 = vmatmul.mubr.f32.gmra.mxu0 %v1671
        %v1752 = vpop.f32.mrf.mxu0
        %v1753 = vadd.f32 0.0, %v1752
        %v1754 = vpop.f32.mrf.mxu0
        %1755 = vmatprep.mubr.f32.mxu0 0.0
        %1756 = vmatmul.mubr.f32.gmra.mxu0 %v1674
        %v1757 = vpop.f32.mrf.mxu0
        %v1758 = vadd.f32 0.0, %v1757
        %v1759 = vpop.f32.mrf.mxu0
        %1760 = vdwg.mxu0
        %v1761 = vadd.f32 %v1649, %v1743
        %v1762 = vadd.f32 %v1650, %v1748
        %v1763 = vadd.f32 %v1651, %v1753
        %v1764 = vadd.f32 %v1652, %v1758
        %v1765 = vld [vmem:[%s1325 + $0x4] sm:$0xff]
        %v1766 = vld [vmem:[%s1325 + $0x14] sm:$0xff]
        %v1767 = vld [vmem:[%s1325 + $0x24] sm:$0xff]
        %v1768 = vld [vmem:[%s1325 + $0x34] sm:$0xff]
        %s1769 = scalar_lea.vmem [#allocation2], 192
        %v1770 = vld [vmem:[%s1769] sm:$0xff]
        %v1771 = vld [vmem:[%s1769 + $0x8] sm:$0xff]
        %v1772 = vld [vmem:[%s1769 + $0x10] sm:$0xff]
        %v1773 = vld [vmem:[%s1769 + $0x18] sm:$0xff]
        %v1774 = vld [vmem:[%s1769 + $0x20] sm:$0xff]
        %v1775 = vld [vmem:[%s1769 + $0x28] sm:$0xff]
        %v1777 = vsel %vm319, %v1765, 0
        %v1780 = vsel %vm319, %v1766, 0
        %v1783 = vsel %vm319, %v1767, 0
        %v1786 = vsel %vm319, %v1768, 0
        %1788 = vmatprep.subr.mxu0 0.0
        %1789 = vmatpush1.msra.mxu0 0.0
        %1790 = vmatprep.subr.mxu0 0.0
        %1791 = vmatpush1.msra.mxu0 0.0
        %1792 = vmatprep.subr.mxu0 0.0
        %1793 = vmatpush1.msra.mxu0 0.0
        %1794 = vmatprep.subr.mxu0 0.0
        %1795 = vmatpush1.msra.mxu0 0.0
        %1796 = vmatprep.subr.mxu0 0.0
        %1797 = vmatpush1.msra.mxu0 0.0
        %1798 = vmatprep.subr.mxu0 0.0
        %1799 = vmatpush1.msra.mxu0 0.0
        %1800 = vmatprep.subr.mxu0 0.0
        %1801 = vmatpush1.msra.mxu0 0.0
        %1802 = vmatprep.subr.mxu0 0.0
        %1803 = vmatpush1.msra.mxu0 0.0
        %1804 = vmatprep.subr.mxu0 0.0
        %1805 = vmatpush1.msra.mxu0 0.0
        %1806 = vmatprep.subr.mxu0 0.0
        %1807 = vmatpush1.msra.mxu0 0.0
        %1808 = vmatprep.subr.mxu0 0.0
        %1809 = vmatpush1.msra.mxu0 %v1775
        %1810 = vmatprep.subr.mxu0 0.0
        %1811 = vmatpush1.msra.mxu0 %v1774
        %1812 = vmatprep.subr.mxu0 0.0
        %1813 = vmatpush1.msra.mxu0 %v1773
        %1814 = vmatprep.subr.mxu0 0.0
        %1815 = vmatpush1.msra.mxu0 %v1772
        %1816 = vmatprep.subr.mxu0 0.0
        %1817 = vmatpush1.msra.mxu0 %v1771
        %1818 = vmatprep.subr.mxu0 0.0
        %1819 = vmatpush1.msra.mxu0 %v1770
        %1820 = vmatprep.subr.mxu0 0.0
        %1821 = vmatpush2.msra.mxu0 0.0
        %1822 = vmatprep.subr.mxu0 0.0
        %1823 = vmatpush2.msra.mxu0 0.0
        %1824 = vmatprep.subr.mxu0 0.0
        %1825 = vmatpush2.msra.mxu0 0.0
        %1826 = vmatprep.subr.mxu0 0.0
        %1827 = vmatpush2.msra.mxu0 0.0
        %1828 = vmatprep.subr.mxu0 0.0
        %1829 = vmatpush2.msra.mxu0 0.0
        %1830 = vmatprep.subr.mxu0 0.0
        %1831 = vmatpush2.msra.mxu0 0.0
        %1832 = vmatprep.subr.mxu0 0.0
        %1833 = vmatpush2.msra.mxu0 0.0
        %1834 = vmatprep.subr.mxu0 0.0
        %1835 = vmatpush2.msra.mxu0 0.0
        %1836 = vmatprep.subr.mxu0 0.0
        %1837 = vmatpush2.msra.mxu0 0.0
        %1838 = vmatprep.subr.mxu0 0.0
        %1839 = vmatpush2.msra.mxu0 0.0
        %1840 = vmatprep.subr.mxu0 0.0
        %1841 = vmatpush2.msra.mxu0 0.0
        %1842 = vmatprep.subr.mxu0 0.0
        %1843 = vmatpush2.msra.mxu0 0.0
        %1844 = vmatprep.subr.mxu0 0.0
        %1845 = vmatpush2.msra.mxu0 0.0
        %1846 = vmatprep.subr.mxu0 0.0
        %1847 = vmatpush2.msra.mxu0 0.0
        %1848 = vmatprep.subr.mxu0 0.0
        %1849 = vmatpush2.msra.mxu0 0.0
        %1850 = vmatprep.subr.mxu0 0.0
        %1851 = vmatpush2.msra.mxu0 0.0
        %1852 = vmatprep.mubr.f32.mxu0 0.0
        %1853 = vmatmul.mubr.f32.gmra.mxu0 %v1777
        %v1854 = vpop.f32.mrf.mxu0
        %v1855 = vadd.f32 0.0, %v1854
        %v1856 = vpop.f32.mrf.mxu0
        %1857 = vmatprep.mubr.f32.mxu0 0.0
        %1858 = vmatmul.mubr.f32.gmra.mxu0 %v1780
        %v1859 = vpop.f32.mrf.mxu0
        %v1860 = vadd.f32 0.0, %v1859
        %v1861 = vpop.f32.mrf.mxu0
        %1862 = vmatprep.mubr.f32.mxu0 0.0
        %1863 = vmatmul.mubr.f32.gmra.mxu0 %v1783
        %v1864 = vpop.f32.mrf.mxu0
        %v1865 = vadd.f32 0.0, %v1864
        %v1866 = vpop.f32.mrf.mxu0
        %1867 = vmatprep.mubr.f32.mxu0 0.0
        %1868 = vmatmul.mubr.f32.gmra.mxu0 %v1786
        %v1869 = vpop.f32.mrf.mxu0
        %v1870 = vadd.f32 0.0, %v1869
        %v1871 = vpop.f32.mrf.mxu0
        %1872 = vdwg.mxu0
        %v1873 = vadd.f32 %v1761, %v1855
        %v1874 = vadd.f32 %v1762, %v1860
        %v1875 = vadd.f32 %v1763, %v1865
        %v1876 = vadd.f32 %v1764, %v1870
        %v1877 = vld [vmem:[%s297] sm:$0xff]
        %v1878 = vld [vmem:[%s297 + $0x10] sm:$0xff]
        %v1879 = vld [vmem:[%s297 + $0x20] sm:$0xff]
        %v1880 = vld [vmem:[%s297 + $0x30] sm:$0xff]
        %s1881 = scalar_lea.vmem [#allocation2], 240
        %v1882 = vld [vmem:[%s1881] sm:$0xff]
        %v1883 = vld [vmem:[%s1881 + $0x8] sm:$0xff]
        %v1884 = vld [vmem:[%s1881 + $0x10] sm:$0xff]
        %v1885 = vld [vmem:[%s1881 + $0x18] sm:$0xff]
        %v1886 = vld [vmem:[%s1881 + $0x20] sm:$0xff]
        %v1887 = vld [vmem:[%s1881 + $0x28] sm:$0xff]
        %v1889 = vsel %vm319, %v1877, 0
        %v1892 = vsel %vm319, %v1878, 0
        %v1895 = vsel %vm319, %v1879, 0
        %v1898 = vsel %vm319, %v1880, 0
        %1900 = vmatprep.subr.mxu0 0.0
        %1901 = vmatpush1.msra.mxu0 0.0
        %1902 = vmatprep.subr.mxu0 0.0
        %1903 = vmatpush1.msra.mxu0 0.0
        %1904 = vmatprep.subr.mxu0 0.0
        %1905 = vmatpush1.msra.mxu0 0.0
        %1906 = vmatprep.subr.mxu0 0.0
        %1907 = vmatpush1.msra.mxu0 0.0
        %1908 = vmatprep.subr.mxu0 0.0
        %1909 = vmatpush1.msra.mxu0 0.0
        %1910 = vmatprep.subr.mxu0 0.0
        %1911 = vmatpush1.msra.mxu0 0.0
        %1912 = vmatprep.subr.mxu0 0.0
        %1913 = vmatpush1.msra.mxu0 0.0
        %1914 = vmatprep.subr.mxu0 0.0
        %1915 = vmatpush1.msra.mxu0 0.0
        %1916 = vmatprep.subr.mxu0 0.0
        %1917 = vmatpush1.msra.mxu0 0.0
        %1918 = vmatprep.subr.mxu0 0.0
        %1919 = vmatpush1.msra.mxu0 0.0
        %1920 = vmatprep.subr.mxu0 0.0
        %1921 = vmatpush1.msra.mxu0 %v1887
        %1922 = vmatprep.subr.mxu0 0.0
        %1923 = vmatpush1.msra.mxu0 %v1886
        %1924 = vmatprep.subr.mxu0 0.0
        %1925 = vmatpush1.msra.mxu0 %v1885
        %1926 = vmatprep.subr.mxu0 0.0
        %1927 = vmatpush1.msra.mxu0 %v1884
        %1928 = vmatprep.subr.mxu0 0.0
        %1929 = vmatpush1.msra.mxu0 %v1883
        %1930 = vmatprep.subr.mxu0 0.0
        %1931 = vmatpush1.msra.mxu0 %v1882
        %1932 = vmatprep.subr.mxu0 0.0
        %1933 = vmatpush2.msra.mxu0 0.0
        %1934 = vmatprep.subr.mxu0 0.0
        %1935 = vmatpush2.msra.mxu0 0.0
        %1936 = vmatprep.subr.mxu0 0.0
        %1937 = vmatpush2.msra.mxu0 0.0
        %1938 = vmatprep.subr.mxu0 0.0
        %1939 = vmatpush2.msra.mxu0 0.0
        %1940 = vmatprep.subr.mxu0 0.0
        %1941 = vmatpush2.msra.mxu0 0.0
        %1942 = vmatprep.subr.mxu0 0.0
        %1943 = vmatpush2.msra.mxu0 0.0
        %1944 = vmatprep.subr.mxu0 0.0
        %1945 = vmatpush2.msra.mxu0 0.0
        %1946 = vmatprep.subr.mxu0 0.0
        %1947 = vmatpush2.msra.mxu0 0.0
        %1948 = vmatprep.subr.mxu0 0.0
        %1949 = vmatpush2.msra.mxu0 0.0
        %1950 = vmatprep.subr.mxu0 0.0
        %1951 = vmatpush2.msra.mxu0 0.0
        %1952 = vmatprep.subr.mxu0 0.0
        %1953 = vmatpush2.msra.mxu0 0.0
        %1954 = vmatprep.subr.mxu0 0.0
        %1955 = vmatpush2.msra.mxu0 0.0
        %1956 = vmatprep.subr.mxu0 0.0
        %1957 = vmatpush2.msra.mxu0 0.0
        %1958 = vmatprep.subr.mxu0 0.0
        %1959 = vmatpush2.msra.mxu0 0.0
        %1960 = vmatprep.subr.mxu0 0.0
        %1961 = vmatpush2.msra.mxu0 0.0
        %1962 = vmatprep.subr.mxu0 0.0
        %1963 = vmatpush2.msra.mxu0 0.0
        %1964 = vmatprep.mubr.f32.mxu0 0.0
        %1965 = vmatmul.mubr.f32.gmra.mxu0 %v1889
        %v1966 = vpop.f32.mrf.mxu0
        %v1967 = vadd.f32 0.0, %v1966
        %v1968 = vpop.f32.mrf.mxu0
        %1969 = vmatprep.mubr.f32.mxu0 0.0
        %1970 = vmatmul.mubr.f32.gmra.mxu0 %v1892
        %v1971 = vpop.f32.mrf.mxu0
        %v1972 = vadd.f32 0.0, %v1971
        %v1973 = vpop.f32.mrf.mxu0
        %1974 = vmatprep.mubr.f32.mxu0 0.0
        %1975 = vmatmul.mubr.f32.gmra.mxu0 %v1895
        %v1976 = vpop.f32.mrf.mxu0
        %v1977 = vadd.f32 0.0, %v1976
        %v1978 = vpop.f32.mrf.mxu0
        %1979 = vmatprep.mubr.f32.mxu0 0.0
        %1980 = vmatmul.mubr.f32.gmra.mxu0 %v1898
        %v1981 = vpop.f32.mrf.mxu0
        %v1982 = vadd.f32 0.0, %v1981
        %v1983 = vpop.f32.mrf.mxu0
        %1984 = vdwg.mxu0
        %v1985 = vadd.f32 %v1873, %v1967
        %v1986 = vadd.f32 %v1874, %v1972
        %v1987 = vadd.f32 %v1875, %v1977
        %v1988 = vadd.f32 %v1876, %v1982
        %v1989 = vld [vmem:[%s297 + $0x1] sm:$0xff]
        %v1990 = vld [vmem:[%s297 + $0x11] sm:$0xff]
        %v1991 = vld [vmem:[%s297 + $0x21] sm:$0xff]
        %v1992 = vld [vmem:[%s297 + $0x31] sm:$0xff]
        %s1993 = scalar_lea.vmem [#allocation2], 288
        %v1994 = vld [vmem:[%s1993] sm:$0xff]
        %v1995 = vld [vmem:[%s1993 + $0x8] sm:$0xff]
        %v1996 = vld [vmem:[%s1993 + $0x10] sm:$0xff]
        %v1997 = vld [vmem:[%s1993 + $0x18] sm:$0xff]
        %v1998 = vld [vmem:[%s1993 + $0x20] sm:$0xff]
        %v1999 = vld [vmem:[%s1993 + $0x28] sm:$0xff]
        %v2001 = vsel %vm319, %v1989, 0
        %v2004 = vsel %vm319, %v1990, 0
        %v2007 = vsel %vm319, %v1991, 0
        %v2010 = vsel %vm319, %v1992, 0
        %2012 = vmatprep.subr.mxu0 0.0
        %2013 = vmatpush1.msra.mxu0 0.0
        %2014 = vmatprep.subr.mxu0 0.0
        %2015 = vmatpush1.msra.mxu0 0.0
        %2016 = vmatprep.subr.mxu0 0.0
        %2017 = vmatpush1.msra.mxu0 0.0
        %2018 = vmatprep.subr.mxu0 0.0
        %2019 = vmatpush1.msra.mxu0 0.0
        %2020 = vmatprep.subr.mxu0 0.0
        %2021 = vmatpush1.msra.mxu0 0.0
        %2022 = vmatprep.subr.mxu0 0.0
        %2023 = vmatpush1.msra.mxu0 0.0
        %2024 = vmatprep.subr.mxu0 0.0
        %2025 = vmatpush1.msra.mxu0 0.0
        %2026 = vmatprep.subr.mxu0 0.0
        %2027 = vmatpush1.msra.mxu0 0.0
        %2028 = vmatprep.subr.mxu0 0.0
        %2029 = vmatpush1.msra.mxu0 0.0
        %2030 = vmatprep.subr.mxu0 0.0
        %2031 = vmatpush1.msra.mxu0 0.0
        %2032 = vmatprep.subr.mxu0 0.0
        %2033 = vmatpush1.msra.mxu0 %v1999
        %2034 = vmatprep.subr.mxu0 0.0
        %2035 = vmatpush1.msra.mxu0 %v1998
        %2036 = vmatprep.subr.mxu0 0.0
        %2037 = vmatpush1.msra.mxu0 %v1997
        %2038 = vmatprep.subr.mxu0 0.0
        %2039 = vmatpush1.msra.mxu0 %v1996
        %2040 = vmatprep.subr.mxu0 0.0
        %2041 = vmatpush1.msra.mxu0 %v1995
        %2042 = vmatprep.subr.mxu0 0.0
        %2043 = vmatpush1.msra.mxu0 %v1994
        %2044 = vmatprep.subr.mxu0 0.0
        %2045 = vmatpush2.msra.mxu0 0.0
        %2046 = vmatprep.subr.mxu0 0.0
        %2047 = vmatpush2.msra.mxu0 0.0
        %2048 = vmatprep.subr.mxu0 0.0
        %2049 = vmatpush2.msra.mxu0 0.0
        %2050 = vmatprep.subr.mxu0 0.0
        %2051 = vmatpush2.msra.mxu0 0.0
        %2052 = vmatprep.subr.mxu0 0.0
        %2053 = vmatpush2.msra.mxu0 0.0
        %2054 = vmatprep.subr.mxu0 0.0
        %2055 = vmatpush2.msra.mxu0 0.0
        %2056 = vmatprep.subr.mxu0 0.0
        %2057 = vmatpush2.msra.mxu0 0.0
        %2058 = vmatprep.subr.mxu0 0.0
        %2059 = vmatpush2.msra.mxu0 0.0
        %2060 = vmatprep.subr.mxu0 0.0
        %2061 = vmatpush2.msra.mxu0 0.0
        %2062 = vmatprep.subr.mxu0 0.0
        %2063 = vmatpush2.msra.mxu0 0.0
        %2064 = vmatprep.subr.mxu0 0.0
        %2065 = vmatpush2.msra.mxu0 0.0
        %2066 = vmatprep.subr.mxu0 0.0
        %2067 = vmatpush2.msra.mxu0 0.0
        %2068 = vmatprep.subr.mxu0 0.0
        %2069 = vmatpush2.msra.mxu0 0.0
        %2070 = vmatprep.subr.mxu0 0.0
        %2071 = vmatpush2.msra.mxu0 0.0
        %2072 = vmatprep.subr.mxu0 0.0
        %2073 = vmatpush2.msra.mxu0 0.0
        %2074 = vmatprep.subr.mxu0 0.0
        %2075 = vmatpush2.msra.mxu0 0.0
        %2076 = vmatprep.mubr.f32.mxu0 0.0
        %2077 = vmatmul.mubr.f32.gmra.mxu0 %v2001
        %v2078 = vpop.f32.mrf.mxu0
        %v2079 = vadd.f32 0.0, %v2078
        %v2080 = vpop.f32.mrf.mxu0
        %2081 = vmatprep.mubr.f32.mxu0 0.0
        %2082 = vmatmul.mubr.f32.gmra.mxu0 %v2004
        %v2083 = vpop.f32.mrf.mxu0
        %v2084 = vadd.f32 0.0, %v2083
        %v2085 = vpop.f32.mrf.mxu0
        %2086 = vmatprep.mubr.f32.mxu0 0.0
        %2087 = vmatmul.mubr.f32.gmra.mxu0 %v2007
        %v2088 = vpop.f32.mrf.mxu0
        %v2089 = vadd.f32 0.0, %v2088
        %v2090 = vpop.f32.mrf.mxu0
        %2091 = vmatprep.mubr.f32.mxu0 0.0
        %2092 = vmatmul.mubr.f32.gmra.mxu0 %v2010
        %v2093 = vpop.f32.mrf.mxu0
        %v2094 = vadd.f32 0.0, %v2093
        %v2095 = vpop.f32.mrf.mxu0
        %2096 = vdwg.mxu0
        %v2097 = vadd.f32 %v1985, %v2079
        %v2098 = vadd.f32 %v1986, %v2084
        %v2099 = vadd.f32 %v1987, %v2089
        %v2100 = vadd.f32 %v1988, %v2094
        %v2101 = vld [vmem:[%s297 + $0x2] sm:$0xff]
        %v2102 = vld [vmem:[%s297 + $0x12] sm:$0xff]
        %v2103 = vld [vmem:[%s297 + $0x22] sm:$0xff]
        %v2104 = vld [vmem:[%s297 + $0x32] sm:$0xff]
        %s2105 = scalar_lea.vmem [#allocation2], 336
        %v2106 = vld [vmem:[%s2105] sm:$0xff]
        %v2107 = vld [vmem:[%s2105 + $0x8] sm:$0xff]
        %v2108 = vld [vmem:[%s2105 + $0x10] sm:$0xff]
        %v2109 = vld [vmem:[%s2105 + $0x18] sm:$0xff]
        %v2110 = vld [vmem:[%s2105 + $0x20] sm:$0xff]
        %v2111 = vld [vmem:[%s2105 + $0x28] sm:$0xff]
        %v2113 = vsel %vm319, %v2101, 0
        %v2116 = vsel %vm319, %v2102, 0
        %v2119 = vsel %vm319, %v2103, 0
        %v2122 = vsel %vm319, %v2104, 0
        %2124 = vmatprep.subr.mxu0 0.0
        %2125 = vmatpush1.msra.mxu0 0.0
        %2126 = vmatprep.subr.mxu0 0.0
        %2127 = vmatpush1.msra.mxu0 0.0
        %2128 = vmatprep.subr.mxu0 0.0
        %2129 = vmatpush1.msra.mxu0 0.0
        %2130 = vmatprep.subr.mxu0 0.0
        %2131 = vmatpush1.msra.mxu0 0.0
        %2132 = vmatprep.subr.mxu0 0.0
        %2133 = vmatpush1.msra.mxu0 0.0
        %2134 = vmatprep.subr.mxu0 0.0
        %2135 = vmatpush1.msra.mxu0 0.0
        %2136 = vmatprep.subr.mxu0 0.0
        %2137 = vmatpush1.msra.mxu0 0.0
        %2138 = vmatprep.subr.mxu0 0.0
        %2139 = vmatpush1.msra.mxu0 0.0
        %2140 = vmatprep.subr.mxu0 0.0
        %2141 = vmatpush1.msra.mxu0 0.0
        %2142 = vmatprep.subr.mxu0 0.0
        %2143 = vmatpush1.msra.mxu0 0.0
        %2144 = vmatprep.subr.mxu0 0.0
        %2145 = vmatpush1.msra.mxu0 %v2111
        %2146 = vmatprep.subr.mxu0 0.0
        %2147 = vmatpush1.msra.mxu0 %v2110
        %2148 = vmatprep.subr.mxu0 0.0
        %2149 = vmatpush1.msra.mxu0 %v2109
        %2150 = vmatprep.subr.mxu0 0.0
        %2151 = vmatpush1.msra.mxu0 %v2108
        %2152 = vmatprep.subr.mxu0 0.0
        %2153 = vmatpush1.msra.mxu0 %v2107
        %2154 = vmatprep.subr.mxu0 0.0
        %2155 = vmatpush1.msra.mxu0 %v2106
        %2156 = vmatprep.subr.mxu0 0.0
        %2157 = vmatpush2.msra.mxu0 0.0
        %2158 = vmatprep.subr.mxu0 0.0
        %2159 = vmatpush2.msra.mxu0 0.0
        %2160 = vmatprep.subr.mxu0 0.0
        %2161 = vmatpush2.msra.mxu0 0.0
        %2162 = vmatprep.subr.mxu0 0.0
        %2163 = vmatpush2.msra.mxu0 0.0
        %2164 = vmatprep.subr.mxu0 0.0
        %2165 = vmatpush2.msra.mxu0 0.0
        %2166 = vmatprep.subr.mxu0 0.0
        %2167 = vmatpush2.msra.mxu0 0.0
        %2168 = vmatprep.subr.mxu0 0.0
        %2169 = vmatpush2.msra.mxu0 0.0
        %2170 = vmatprep.subr.mxu0 0.0
        %2171 = vmatpush2.msra.mxu0 0.0
        %2172 = vmatprep.subr.mxu0 0.0
        %2173 = vmatpush2.msra.mxu0 0.0
        %2174 = vmatprep.subr.mxu0 0.0
        %2175 = vmatpush2.msra.mxu0 0.0
        %2176 = vmatprep.subr.mxu0 0.0
        %2177 = vmatpush2.msra.mxu0 0.0
        %2178 = vmatprep.subr.mxu0 0.0
        %2179 = vmatpush2.msra.mxu0 0.0
        %2180 = vmatprep.subr.mxu0 0.0
        %2181 = vmatpush2.msra.mxu0 0.0
        %2182 = vmatprep.subr.mxu0 0.0
        %2183 = vmatpush2.msra.mxu0 0.0
        %2184 = vmatprep.subr.mxu0 0.0
        %2185 = vmatpush2.msra.mxu0 0.0
        %2186 = vmatprep.subr.mxu0 0.0
        %2187 = vmatpush2.msra.mxu0 0.0
        %2188 = vmatprep.mubr.f32.mxu0 0.0
        %2189 = vmatmul.mubr.f32.gmra.mxu0 %v2113
        %v2190 = vpop.f32.mrf.mxu0
        %v2191 = vadd.f32 0.0, %v2190
        %v2192 = vpop.f32.mrf.mxu0
        %2193 = vmatprep.mubr.f32.mxu0 0.0
        %2194 = vmatmul.mubr.f32.gmra.mxu0 %v2116
        %v2195 = vpop.f32.mrf.mxu0
        %v2196 = vadd.f32 0.0, %v2195
        %v2197 = vpop.f32.mrf.mxu0
        %2198 = vmatprep.mubr.f32.mxu0 0.0
        %2199 = vmatmul.mubr.f32.gmra.mxu0 %v2119
        %v2200 = vpop.f32.mrf.mxu0
        %v2201 = vadd.f32 0.0, %v2200
        %v2202 = vpop.f32.mrf.mxu0
        %2203 = vmatprep.mubr.f32.mxu0 0.0
        %2204 = vmatmul.mubr.f32.gmra.mxu0 %v2122
        %v2205 = vpop.f32.mrf.mxu0
        %v2206 = vadd.f32 0.0, %v2205
        %v2207 = vpop.f32.mrf.mxu0
        %2208 = vdwg.mxu0
        %v2209 = vadd.f32 %v2097, %v2191
        %v2210 = vadd.f32 %v2098, %v2196
        %v2211 = vadd.f32 %v2099, %v2201
        %v2212 = vadd.f32 %v2100, %v2206
        %v2213 = vld [vmem:[%s297 + $0x3] sm:$0xff]
        %v2214 = vld [vmem:[%s297 + $0x13] sm:$0xff]
        %v2215 = vld [vmem:[%s297 + $0x23] sm:$0xff]
        %v2216 = vld [vmem:[%s297 + $0x33] sm:$0xff]
        %s2217 = scalar_lea.vmem [#allocation2], 384
        %v2218 = vld [vmem:[%s2217] sm:$0xff]
        %v2219 = vld [vmem:[%s2217 + $0x8] sm:$0xff]
        %v2220 = vld [vmem:[%s2217 + $0x10] sm:$0xff]
        %v2221 = vld [vmem:[%s2217 + $0x18] sm:$0xff]
        %v2222 = vld [vmem:[%s2217 + $0x20] sm:$0xff]
        %v2223 = vld [vmem:[%s2217 + $0x28] sm:$0xff]
        %v2225 = vsel %vm319, %v2213, 0
        %v2228 = vsel %vm319, %v2214, 0
        %v2231 = vsel %vm319, %v2215, 0
        %v2234 = vsel %vm319, %v2216, 0
        %2236 = vmatprep.subr.mxu0 0.0
        %2237 = vmatpush1.msra.mxu0 0.0
        %2238 = vmatprep.subr.mxu0 0.0
        %2239 = vmatpush1.msra.mxu0 0.0
        %2240 = vmatprep.subr.mxu0 0.0
        %2241 = vmatpush1.msra.mxu0 0.0
        %2242 = vmatprep.subr.mxu0 0.0
        %2243 = vmatpush1.msra.mxu0 0.0
        %2244 = vmatprep.subr.mxu0 0.0
        %2245 = vmatpush1.msra.mxu0 0.0
        %2246 = vmatprep.subr.mxu0 0.0
        %2247 = vmatpush1.msra.mxu0 0.0
        %2248 = vmatprep.subr.mxu0 0.0
        %2249 = vmatpush1.msra.mxu0 0.0
        %2250 = vmatprep.subr.mxu0 0.0
        %2251 = vmatpush1.msra.mxu0 0.0
        %2252 = vmatprep.subr.mxu0 0.0
        %2253 = vmatpush1.msra.mxu0 0.0
        %2254 = vmatprep.subr.mxu0 0.0
        %2255 = vmatpush1.msra.mxu0 0.0
        %2256 = vmatprep.subr.mxu0 0.0
        %2257 = vmatpush1.msra.mxu0 %v2223
        %2258 = vmatprep.subr.mxu0 0.0
        %2259 = vmatpush1.msra.mxu0 %v2222
        %2260 = vmatprep.subr.mxu0 0.0
        %2261 = vmatpush1.msra.mxu0 %v2221
        %2262 = vmatprep.subr.mxu0 0.0
        %2263 = vmatpush1.msra.mxu0 %v2220
        %2264 = vmatprep.subr.mxu0 0.0
        %2265 = vmatpush1.msra.mxu0 %v2219
        %2266 = vmatprep.subr.mxu0 0.0
        %2267 = vmatpush1.msra.mxu0 %v2218
        %2268 = vmatprep.subr.mxu0 0.0
        %2269 = vmatpush2.msra.mxu0 0.0
        %2270 = vmatprep.subr.mxu0 0.0
        %2271 = vmatpush2.msra.mxu0 0.0
        %2272 = vmatprep.subr.mxu0 0.0
        %2273 = vmatpush2.msra.mxu0 0.0
        %2274 = vmatprep.subr.mxu0 0.0
        %2275 = vmatpush2.msra.mxu0 0.0
        %2276 = vmatprep.subr.mxu0 0.0
        %2277 = vmatpush2.msra.mxu0 0.0
        %2278 = vmatprep.subr.mxu0 0.0
        %2279 = vmatpush2.msra.mxu0 0.0
        %2280 = vmatprep.subr.mxu0 0.0
        %2281 = vmatpush2.msra.mxu0 0.0
        %2282 = vmatprep.subr.mxu0 0.0
        %2283 = vmatpush2.msra.mxu0 0.0
        %2284 = vmatprep.subr.mxu0 0.0
        %2285 = vmatpush2.msra.mxu0 0.0
        %2286 = vmatprep.subr.mxu0 0.0
        %2287 = vmatpush2.msra.mxu0 0.0
        %2288 = vmatprep.subr.mxu0 0.0
        %2289 = vmatpush2.msra.mxu0 0.0
        %2290 = vmatprep.subr.mxu0 0.0
        %2291 = vmatpush2.msra.mxu0 0.0
        %2292 = vmatprep.subr.mxu0 0.0
        %2293 = vmatpush2.msra.mxu0 0.0
        %2294 = vmatprep.subr.mxu0 0.0
        %2295 = vmatpush2.msra.mxu0 0.0
        %2296 = vmatprep.subr.mxu0 0.0
        %2297 = vmatpush2.msra.mxu0 0.0
        %2298 = vmatprep.subr.mxu0 0.0
        %2299 = vmatpush2.msra.mxu0 0.0
        %2300 = vmatprep.mubr.f32.mxu0 0.0
        %2301 = vmatmul.mubr.f32.gmra.mxu0 %v2225
        %v2302 = vpop.f32.mrf.mxu0
        %v2303 = vadd.f32 0.0, %v2302
        %v2304 = vpop.f32.mrf.mxu0
        %2305 = vmatprep.mubr.f32.mxu0 0.0
        %2306 = vmatmul.mubr.f32.gmra.mxu0 %v2228
        %v2307 = vpop.f32.mrf.mxu0
        %v2308 = vadd.f32 0.0, %v2307
        %v2309 = vpop.f32.mrf.mxu0
        %2310 = vmatprep.mubr.f32.mxu0 0.0
        %2311 = vmatmul.mubr.f32.gmra.mxu0 %v2231
        %v2312 = vpop.f32.mrf.mxu0
        %v2313 = vadd.f32 0.0, %v2312
        %v2314 = vpop.f32.mrf.mxu0
        %2315 = vmatprep.mubr.f32.mxu0 0.0
        %2316 = vmatmul.mubr.f32.gmra.mxu0 %v2234
        %v2317 = vpop.f32.mrf.mxu0
        %v2318 = vadd.f32 0.0, %v2317
        %v2319 = vpop.f32.mrf.mxu0
        %2320 = vdwg.mxu0
        %v2321 = vadd.f32 %v2209, %v2303
        %v2322 = vadd.f32 %v2210, %v2308
        %v2323 = vadd.f32 %v2211, %v2313
        %v2324 = vadd.f32 %v2212, %v2318
        %v2325 = vld [vmem:[%s297 + $0x4] sm:$0xff]
        %v2326 = vld [vmem:[%s297 + $0x14] sm:$0xff]
        %v2327 = vld [vmem:[%s297 + $0x24] sm:$0xff]
        %v2328 = vld [vmem:[%s297 + $0x34] sm:$0xff]
        %s2329 = scalar_lea.vmem [#allocation2], 432
        %v2330 = vld [vmem:[%s2329] sm:$0xff]
        %v2331 = vld [vmem:[%s2329 + $0x8] sm:$0xff]
        %v2332 = vld [vmem:[%s2329 + $0x10] sm:$0xff]
        %v2333 = vld [vmem:[%s2329 + $0x18] sm:$0xff]
        %v2334 = vld [vmem:[%s2329 + $0x20] sm:$0xff]
        %v2335 = vld [vmem:[%s2329 + $0x28] sm:$0xff]
        %v2337 = vsel %vm319, %v2325, 0
        %v2340 = vsel %vm319, %v2326, 0
        %v2343 = vsel %vm319, %v2327, 0
        %v2346 = vsel %vm319, %v2328, 0
        %2348 = vmatprep.subr.mxu0 0.0
        %2349 = vmatpush1.msra.mxu0 0.0
        %2350 = vmatprep.subr.mxu0 0.0
        %2351 = vmatpush1.msra.mxu0 0.0
        %2352 = vmatprep.subr.mxu0 0.0
        %2353 = vmatpush1.msra.mxu0 0.0
        %2354 = vmatprep.subr.mxu0 0.0
        %2355 = vmatpush1.msra.mxu0 0.0
        %2356 = vmatprep.subr.mxu0 0.0
        %2357 = vmatpush1.msra.mxu0 0.0
        %2358 = vmatprep.subr.mxu0 0.0
        %2359 = vmatpush1.msra.mxu0 0.0
        %2360 = vmatprep.subr.mxu0 0.0
        %2361 = vmatpush1.msra.mxu0 0.0
        %2362 = vmatprep.subr.mxu0 0.0
        %2363 = vmatpush1.msra.mxu0 0.0
        %2364 = vmatprep.subr.mxu0 0.0
        %2365 = vmatpush1.msra.mxu0 0.0
        %2366 = vmatprep.subr.mxu0 0.0
        %2367 = vmatpush1.msra.mxu0 0.0
        %2368 = vmatprep.subr.mxu0 0.0
        %2369 = vmatpush1.msra.mxu0 %v2335
        %2370 = vmatprep.subr.mxu0 0.0
        %2371 = vmatpush1.msra.mxu0 %v2334
        %2372 = vmatprep.subr.mxu0 0.0
        %2373 = vmatpush1.msra.mxu0 %v2333
        %2374 = vmatprep.subr.mxu0 0.0
        %2375 = vmatpush1.msra.mxu0 %v2332
        %2376 = vmatprep.subr.mxu0 0.0
        %2377 = vmatpush1.msra.mxu0 %v2331
        %2378 = vmatprep.subr.mxu0 0.0
        %2379 = vmatpush1.msra.mxu0 %v2330
        %2380 = vmatprep.subr.mxu0 0.0
        %2381 = vmatpush2.msra.mxu0 0.0
        %2382 = vmatprep.subr.mxu0 0.0
        %2383 = vmatpush2.msra.mxu0 0.0
        %2384 = vmatprep.subr.mxu0 0.0
        %2385 = vmatpush2.msra.mxu0 0.0
        %2386 = vmatprep.subr.mxu0 0.0
        %2387 = vmatpush2.msra.mxu0 0.0
        %2388 = vmatprep.subr.mxu0 0.0
        %2389 = vmatpush2.msra.mxu0 0.0
        %2390 = vmatprep.subr.mxu0 0.0
        %2391 = vmatpush2.msra.mxu0 0.0
        %2392 = vmatprep.subr.mxu0 0.0
        %2393 = vmatpush2.msra.mxu0 0.0
        %2394 = vmatprep.subr.mxu0 0.0
        %2395 = vmatpush2.msra.mxu0 0.0
        %2396 = vmatprep.subr.mxu0 0.0
        %2397 = vmatpush2.msra.mxu0 0.0
        %2398 = vmatprep.subr.mxu0 0.0
        %2399 = vmatpush2.msra.mxu0 0.0
        %2400 = vmatprep.subr.mxu0 0.0
        %2401 = vmatpush2.msra.mxu0 0.0
        %2402 = vmatprep.subr.mxu0 0.0
        %2403 = vmatpush2.msra.mxu0 0.0
        %2404 = vmatprep.subr.mxu0 0.0
        %2405 = vmatpush2.msra.mxu0 0.0
        %2406 = vmatprep.subr.mxu0 0.0
        %2407 = vmatpush2.msra.mxu0 0.0
        %2408 = vmatprep.subr.mxu0 0.0
        %2409 = vmatpush2.msra.mxu0 0.0
        %2410 = vmatprep.subr.mxu0 0.0
        %2411 = vmatpush2.msra.mxu0 0.0
        %2412 = vmatprep.mubr.f32.mxu0 0.0
        %2413 = vmatmul.mubr.f32.gmra.mxu0 %v2337
        %v2414 = vpop.f32.mrf.mxu0
        %v2415 = vadd.f32 0.0, %v2414
        %v2416 = vpop.f32.mrf.mxu0
        %2417 = vmatprep.mubr.f32.mxu0 0.0
        %2418 = vmatmul.mubr.f32.gmra.mxu0 %v2340
        %v2419 = vpop.f32.mrf.mxu0
        %v2420 = vadd.f32 0.0, %v2419
        %v2421 = vpop.f32.mrf.mxu0
        %2422 = vmatprep.mubr.f32.mxu0 0.0
        %2423 = vmatmul.mubr.f32.gmra.mxu0 %v2343
        %v2424 = vpop.f32.mrf.mxu0
        %v2425 = vadd.f32 0.0, %v2424
        %v2426 = vpop.f32.mrf.mxu0
        %2427 = vmatprep.mubr.f32.mxu0 0.0
        %2428 = vmatmul.mubr.f32.gmra.mxu0 %v2346
        %v2429 = vpop.f32.mrf.mxu0
        %v2430 = vadd.f32 0.0, %v2429
        %v2431 = vpop.f32.mrf.mxu0
        %2432 = vdwg.mxu0
        %v2433 = vadd.f32 %v2321, %v2415
        %v2434 = vadd.f32 %v2322, %v2420
        %v2435 = vadd.f32 %v2323, %v2425
        %v2436 = vadd.f32 %v2324, %v2430
        %v2437 = vld [vmem:[%s628] sm:$0xff]
        %v2438 = vld [vmem:[%s628 + $0x10] sm:$0xff]
        %v2439 = vld [vmem:[%s628 + $0x20] sm:$0xff]
        %v2440 = vld [vmem:[%s628 + $0x30] sm:$0xff]
        %s2441 = scalar_lea.vmem [#allocation2], 480
        %v2442 = vld [vmem:[%s2441] sm:$0xff]
        %v2443 = vld [vmem:[%s2441 + $0x8] sm:$0xff]
        %v2444 = vld [vmem:[%s2441 + $0x10] sm:$0xff]
        %v2445 = vld [vmem:[%s2441 + $0x18] sm:$0xff]
        %v2446 = vld [vmem:[%s2441 + $0x20] sm:$0xff]
        %v2447 = vld [vmem:[%s2441 + $0x28] sm:$0xff]
        %v2449 = vsel %vm319, %v2437, 0
        %v2452 = vsel %vm319, %v2438, 0
        %v2455 = vsel %vm319, %v2439, 0
        %v2458 = vsel %vm319, %v2440, 0
        %2460 = vmatprep.subr.mxu0 0.0
        %2461 = vmatpush1.msra.mxu0 0.0
        %2462 = vmatprep.subr.mxu0 0.0
        %2463 = vmatpush1.msra.mxu0 0.0
        %2464 = vmatprep.subr.mxu0 0.0
        %2465 = vmatpush1.msra.mxu0 0.0
        %2466 = vmatprep.subr.mxu0 0.0
        %2467 = vmatpush1.msra.mxu0 0.0
        %2468 = vmatprep.subr.mxu0 0.0
        %2469 = vmatpush1.msra.mxu0 0.0
        %2470 = vmatprep.subr.mxu0 0.0
        %2471 = vmatpush1.msra.mxu0 0.0
        %2472 = vmatprep.subr.mxu0 0.0
        %2473 = vmatpush1.msra.mxu0 0.0
        %2474 = vmatprep.subr.mxu0 0.0
        %2475 = vmatpush1.msra.mxu0 0.0
        %2476 = vmatprep.subr.mxu0 0.0
        %2477 = vmatpush1.msra.mxu0 0.0
        %2478 = vmatprep.subr.mxu0 0.0
        %2479 = vmatpush1.msra.mxu0 0.0
        %2480 = vmatprep.subr.mxu0 0.0
        %2481 = vmatpush1.msra.mxu0 %v2447
        %2482 = vmatprep.subr.mxu0 0.0
        %2483 = vmatpush1.msra.mxu0 %v2446
        %2484 = vmatprep.subr.mxu0 0.0
        %2485 = vmatpush1.msra.mxu0 %v2445
        %2486 = vmatprep.subr.mxu0 0.0
        %2487 = vmatpush1.msra.mxu0 %v2444
        %2488 = vmatprep.subr.mxu0 0.0
        %2489 = vmatpush1.msra.mxu0 %v2443
        %2490 = vmatprep.subr.mxu0 0.0
        %2491 = vmatpush1.msra.mxu0 %v2442
        %2492 = vmatprep.subr.mxu0 0.0
        %2493 = vmatpush2.msra.mxu0 0.0
        %2494 = vmatprep.subr.mxu0 0.0
        %2495 = vmatpush2.msra.mxu0 0.0
        %2496 = vmatprep.subr.mxu0 0.0
        %2497 = vmatpush2.msra.mxu0 0.0
        %2498 = vmatprep.subr.mxu0 0.0
        %2499 = vmatpush2.msra.mxu0 0.0
        %2500 = vmatprep.subr.mxu0 0.0
        %2501 = vmatpush2.msra.mxu0 0.0
        %2502 = vmatprep.subr.mxu0 0.0
        %2503 = vmatpush2.msra.mxu0 0.0
        %2504 = vmatprep.subr.mxu0 0.0
        %2505 = vmatpush2.msra.mxu0 0.0
        %2506 = vmatprep.subr.mxu0 0.0
        %2507 = vmatpush2.msra.mxu0 0.0
        %2508 = vmatprep.subr.mxu0 0.0
        %2509 = vmatpush2.msra.mxu0 0.0
        %2510 = vmatprep.subr.mxu0 0.0
        %2511 = vmatpush2.msra.mxu0 0.0
        %2512 = vmatprep.subr.mxu0 0.0
        %2513 = vmatpush2.msra.mxu0 0.0
        %2514 = vmatprep.subr.mxu0 0.0
        %2515 = vmatpush2.msra.mxu0 0.0
        %2516 = vmatprep.subr.mxu0 0.0
        %2517 = vmatpush2.msra.mxu0 0.0
        %2518 = vmatprep.subr.mxu0 0.0
        %2519 = vmatpush2.msra.mxu0 0.0
        %2520 = vmatprep.subr.mxu0 0.0
        %2521 = vmatpush2.msra.mxu0 0.0
        %2522 = vmatprep.subr.mxu0 0.0
        %2523 = vmatpush2.msra.mxu0 0.0
        %2524 = vmatprep.mubr.f32.mxu0 0.0
        %2525 = vmatmul.mubr.f32.gmra.mxu0 %v2449
        %v2526 = vpop.f32.mrf.mxu0
        %v2527 = vadd.f32 0.0, %v2526
        %v2528 = vpop.f32.mrf.mxu0
        %2529 = vmatprep.mubr.f32.mxu0 0.0
        %2530 = vmatmul.mubr.f32.gmra.mxu0 %v2452
        %v2531 = vpop.f32.mrf.mxu0
        %v2532 = vadd.f32 0.0, %v2531
        %v2533 = vpop.f32.mrf.mxu0
        %2534 = vmatprep.mubr.f32.mxu0 0.0
        %2535 = vmatmul.mubr.f32.gmra.mxu0 %v2455
        %v2536 = vpop.f32.mrf.mxu0
        %v2537 = vadd.f32 0.0, %v2536
        %v2538 = vpop.f32.mrf.mxu0
        %2539 = vmatprep.mubr.f32.mxu0 0.0
        %2540 = vmatmul.mubr.f32.gmra.mxu0 %v2458
        %v2541 = vpop.f32.mrf.mxu0
        %v2542 = vadd.f32 0.0, %v2541
        %v2543 = vpop.f32.mrf.mxu0
        %2544 = vdwg.mxu0
        %v2545 = vadd.f32 %v2433, %v2527
        %v2546 = vadd.f32 %v2434, %v2532
        %v2547 = vadd.f32 %v2435, %v2537
        %v2548 = vadd.f32 %v2436, %v2542
        %v2549 = vld [vmem:[%s628 + $0x1] sm:$0xff]
        %v2550 = vld [vmem:[%s628 + $0x11] sm:$0xff]
        %v2551 = vld [vmem:[%s628 + $0x21] sm:$0xff]
        %v2552 = vld [vmem:[%s628 + $0x31] sm:$0xff]
        %s2553 = scalar_lea.vmem [#allocation2], 528
        %v2554 = vld [vmem:[%s2553] sm:$0xff]
        %v2555 = vld [vmem:[%s2553 + $0x8] sm:$0xff]
        %v2556 = vld [vmem:[%s2553 + $0x10] sm:$0xff]
        %v2557 = vld [vmem:[%s2553 + $0x18] sm:$0xff]
        %v2558 = vld [vmem:[%s2553 + $0x20] sm:$0xff]
        %v2559 = vld [vmem:[%s2553 + $0x28] sm:$0xff]
        %v2561 = vsel %vm319, %v2549, 0
        %v2564 = vsel %vm319, %v2550, 0
        %v2567 = vsel %vm319, %v2551, 0
        %v2570 = vsel %vm319, %v2552, 0
        %2572 = vmatprep.subr.mxu0 0.0
        %2573 = vmatpush1.msra.mxu0 0.0
        %2574 = vmatprep.subr.mxu0 0.0
        %2575 = vmatpush1.msra.mxu0 0.0
        %2576 = vmatprep.subr.mxu0 0.0
        %2577 = vmatpush1.msra.mxu0 0.0
        %2578 = vmatprep.subr.mxu0 0.0
        %2579 = vmatpush1.msra.mxu0 0.0
        %2580 = vmatprep.subr.mxu0 0.0
        %2581 = vmatpush1.msra.mxu0 0.0
        %2582 = vmatprep.subr.mxu0 0.0
        %2583 = vmatpush1.msra.mxu0 0.0
        %2584 = vmatprep.subr.mxu0 0.0
        %2585 = vmatpush1.msra.mxu0 0.0
        %2586 = vmatprep.subr.mxu0 0.0
        %2587 = vmatpush1.msra.mxu0 0.0
        %2588 = vmatprep.subr.mxu0 0.0
        %2589 = vmatpush1.msra.mxu0 0.0
        %2590 = vmatprep.subr.mxu0 0.0
        %2591 = vmatpush1.msra.mxu0 0.0
        %2592 = vmatprep.subr.mxu0 0.0
        %2593 = vmatpush1.msra.mxu0 %v2559
        %2594 = vmatprep.subr.mxu0 0.0
        %2595 = vmatpush1.msra.mxu0 %v2558
        %2596 = vmatprep.subr.mxu0 0.0
        %2597 = vmatpush1.msra.mxu0 %v2557
        %2598 = vmatprep.subr.mxu0 0.0
        %2599 = vmatpush1.msra.mxu0 %v2556
        %2600 = vmatprep.subr.mxu0 0.0
        %2601 = vmatpush1.msra.mxu0 %v2555
        %2602 = vmatprep.subr.mxu0 0.0
        %2603 = vmatpush1.msra.mxu0 %v2554
        %2604 = vmatprep.subr.mxu0 0.0
        %2605 = vmatpush2.msra.mxu0 0.0
        %2606 = vmatprep.subr.mxu0 0.0
        %2607 = vmatpush2.msra.mxu0 0.0
        %2608 = vmatprep.subr.mxu0 0.0
        %2609 = vmatpush2.msra.mxu0 0.0
        %2610 = vmatprep.subr.mxu0 0.0
        %2611 = vmatpush2.msra.mxu0 0.0
        %2612 = vmatprep.subr.mxu0 0.0
        %2613 = vmatpush2.msra.mxu0 0.0
        %2614 = vmatprep.subr.mxu0 0.0
        %2615 = vmatpush2.msra.mxu0 0.0
        %2616 = vmatprep.subr.mxu0 0.0
        %2617 = vmatpush2.msra.mxu0 0.0
        %2618 = vmatprep.subr.mxu0 0.0
        %2619 = vmatpush2.msra.mxu0 0.0
        %2620 = vmatprep.subr.mxu0 0.0
        %2621 = vmatpush2.msra.mxu0 0.0
        %2622 = vmatprep.subr.mxu0 0.0
        %2623 = vmatpush2.msra.mxu0 0.0
        %2624 = vmatprep.subr.mxu0 0.0
        %2625 = vmatpush2.msra.mxu0 0.0
        %2626 = vmatprep.subr.mxu0 0.0
        %2627 = vmatpush2.msra.mxu0 0.0
        %2628 = vmatprep.subr.mxu0 0.0
        %2629 = vmatpush2.msra.mxu0 0.0
        %2630 = vmatprep.subr.mxu0 0.0
        %2631 = vmatpush2.msra.mxu0 0.0
        %2632 = vmatprep.subr.mxu0 0.0
        %2633 = vmatpush2.msra.mxu0 0.0
        %2634 = vmatprep.subr.mxu0 0.0
        %2635 = vmatpush2.msra.mxu0 0.0
        %2636 = vmatprep.mubr.f32.mxu0 0.0
        %2637 = vmatmul.mubr.f32.gmra.mxu0 %v2561
        %v2638 = vpop.f32.mrf.mxu0
        %v2639 = vadd.f32 0.0, %v2638
        %v2640 = vpop.f32.mrf.mxu0
        %2641 = vmatprep.mubr.f32.mxu0 0.0
        %2642 = vmatmul.mubr.f32.gmra.mxu0 %v2564
        %v2643 = vpop.f32.mrf.mxu0
        %v2644 = vadd.f32 0.0, %v2643
        %v2645 = vpop.f32.mrf.mxu0
        %2646 = vmatprep.mubr.f32.mxu0 0.0
        %2647 = vmatmul.mubr.f32.gmra.mxu0 %v2567
        %v2648 = vpop.f32.mrf.mxu0
        %v2649 = vadd.f32 0.0, %v2648
        %v2650 = vpop.f32.mrf.mxu0
        %2651 = vmatprep.mubr.f32.mxu0 0.0
        %2652 = vmatmul.mubr.f32.gmra.mxu0 %v2570
        %v2653 = vpop.f32.mrf.mxu0
        %v2654 = vadd.f32 0.0, %v2653
        %v2655 = vpop.f32.mrf.mxu0
        %2656 = vdwg.mxu0
        %v2657 = vadd.f32 %v2545, %v2639
        %v2658 = vadd.f32 %v2546, %v2644
        %v2659 = vadd.f32 %v2547, %v2649
        %v2660 = vadd.f32 %v2548, %v2654
        %v2661 = vld [vmem:[%s628 + $0x2] sm:$0xff]
        %v2662 = vld [vmem:[%s628 + $0x12] sm:$0xff]
        %v2663 = vld [vmem:[%s628 + $0x22] sm:$0xff]
        %v2664 = vld [vmem:[%s628 + $0x32] sm:$0xff]
        %s2665 = scalar_lea.vmem [#allocation2], 576
        %v2666 = vld [vmem:[%s2665] sm:$0xff]
        %v2667 = vld [vmem:[%s2665 + $0x8] sm:$0xff]
        %v2668 = vld [vmem:[%s2665 + $0x10] sm:$0xff]
        %v2669 = vld [vmem:[%s2665 + $0x18] sm:$0xff]
        %v2670 = vld [vmem:[%s2665 + $0x20] sm:$0xff]
        %v2671 = vld [vmem:[%s2665 + $0x28] sm:$0xff]
        %v2673 = vsel %vm319, %v2661, 0
        %v2676 = vsel %vm319, %v2662, 0
        %v2679 = vsel %vm319, %v2663, 0
        %v2682 = vsel %vm319, %v2664, 0
        %2684 = vmatprep.subr.mxu0 0.0
        %2685 = vmatpush1.msra.mxu0 0.0
        %2686 = vmatprep.subr.mxu0 0.0
        %2687 = vmatpush1.msra.mxu0 0.0
        %2688 = vmatprep.subr.mxu0 0.0
        %2689 = vmatpush1.msra.mxu0 0.0
        %2690 = vmatprep.subr.mxu0 0.0
        %2691 = vmatpush1.msra.mxu0 0.0
        %2692 = vmatprep.subr.mxu0 0.0
        %2693 = vmatpush1.msra.mxu0 0.0
        %2694 = vmatprep.subr.mxu0 0.0
        %2695 = vmatpush1.msra.mxu0 0.0
        %2696 = vmatprep.subr.mxu0 0.0
        %2697 = vmatpush1.msra.mxu0 0.0
        %2698 = vmatprep.subr.mxu0 0.0
        %2699 = vmatpush1.msra.mxu0 0.0
        %2700 = vmatprep.subr.mxu0 0.0
        %2701 = vmatpush1.msra.mxu0 0.0
        %2702 = vmatprep.subr.mxu0 0.0
        %2703 = vmatpush1.msra.mxu0 0.0
        %2704 = vmatprep.subr.mxu0 0.0
        %2705 = vmatpush1.msra.mxu0 %v2671
        %2706 = vmatprep.subr.mxu0 0.0
        %2707 = vmatpush1.msra.mxu0 %v2670
        %2708 = vmatprep.subr.mxu0 0.0
        %2709 = vmatpush1.msra.mxu0 %v2669
        %2710 = vmatprep.subr.mxu0 0.0
        %2711 = vmatpush1.msra.mxu0 %v2668
        %2712 = vmatprep.subr.mxu0 0.0
        %2713 = vmatpush1.msra.mxu0 %v2667
        %2714 = vmatprep.subr.mxu0 0.0
        %2715 = vmatpush1.msra.mxu0 %v2666
        %2716 = vmatprep.subr.mxu0 0.0
        %2717 = vmatpush2.msra.mxu0 0.0
        %2718 = vmatprep.subr.mxu0 0.0
        %2719 = vmatpush2.msra.mxu0 0.0
        %2720 = vmatprep.subr.mxu0 0.0
        %2721 = vmatpush2.msra.mxu0 0.0
        %2722 = vmatprep.subr.mxu0 0.0
        %2723 = vmatpush2.msra.mxu0 0.0
        %2724 = vmatprep.subr.mxu0 0.0
        %2725 = vmatpush2.msra.mxu0 0.0
        %2726 = vmatprep.subr.mxu0 0.0
        %2727 = vmatpush2.msra.mxu0 0.0
        %2728 = vmatprep.subr.mxu0 0.0
        %2729 = vmatpush2.msra.mxu0 0.0
        %2730 = vmatprep.subr.mxu0 0.0
        %2731 = vmatpush2.msra.mxu0 0.0
        %2732 = vmatprep.subr.mxu0 0.0
        %2733 = vmatpush2.msra.mxu0 0.0
        %2734 = vmatprep.subr.mxu0 0.0
        %2735 = vmatpush2.msra.mxu0 0.0
        %2736 = vmatprep.subr.mxu0 0.0
        %2737 = vmatpush2.msra.mxu0 0.0
        %2738 = vmatprep.subr.mxu0 0.0
        %2739 = vmatpush2.msra.mxu0 0.0
        %2740 = vmatprep.subr.mxu0 0.0
        %2741 = vmatpush2.msra.mxu0 0.0
        %2742 = vmatprep.subr.mxu0 0.0
        %2743 = vmatpush2.msra.mxu0 0.0
        %2744 = vmatprep.subr.mxu0 0.0
        %2745 = vmatpush2.msra.mxu0 0.0
        %2746 = vmatprep.subr.mxu0 0.0
        %2747 = vmatpush2.msra.mxu0 0.0
        %2748 = vmatprep.mubr.f32.mxu0 0.0
        %2749 = vmatmul.mubr.f32.gmra.mxu0 %v2673
        %v2750 = vpop.f32.mrf.mxu0
        %v2751 = vadd.f32 0.0, %v2750
        %v2752 = vpop.f32.mrf.mxu0
        %2753 = vmatprep.mubr.f32.mxu0 0.0
        %2754 = vmatmul.mubr.f32.gmra.mxu0 %v2676
        %v2755 = vpop.f32.mrf.mxu0
        %v2756 = vadd.f32 0.0, %v2755
        %v2757 = vpop.f32.mrf.mxu0
        %2758 = vmatprep.mubr.f32.mxu0 0.0
        %2759 = vmatmul.mubr.f32.gmra.mxu0 %v2679
        %v2760 = vpop.f32.mrf.mxu0
        %v2761 = vadd.f32 0.0, %v2760
        %v2762 = vpop.f32.mrf.mxu0
        %2763 = vmatprep.mubr.f32.mxu0 0.0
        %2764 = vmatmul.mubr.f32.gmra.mxu0 %v2682
        %v2765 = vpop.f32.mrf.mxu0
        %v2766 = vadd.f32 0.0, %v2765
        %v2767 = vpop.f32.mrf.mxu0
        %2768 = vdwg.mxu0
        %v2769 = vadd.f32 %v2657, %v2751
        %v2770 = vadd.f32 %v2658, %v2756
        %v2771 = vadd.f32 %v2659, %v2761
        %v2772 = vadd.f32 %v2660, %v2766
        %v2773 = vld [vmem:[%s628 + $0x3] sm:$0xff]
        %v2774 = vld [vmem:[%s628 + $0x13] sm:$0xff]
        %v2775 = vld [vmem:[%s628 + $0x23] sm:$0xff]
        %v2776 = vld [vmem:[%s628 + $0x33] sm:$0xff]
        %s2777 = scalar_lea.vmem [#allocation2], 624
        %v2778 = vld [vmem:[%s2777] sm:$0xff]
        %v2779 = vld [vmem:[%s2777 + $0x8] sm:$0xff]
        %v2780 = vld [vmem:[%s2777 + $0x10] sm:$0xff]
        %v2781 = vld [vmem:[%s2777 + $0x18] sm:$0xff]
        %v2782 = vld [vmem:[%s2777 + $0x20] sm:$0xff]
        %v2783 = vld [vmem:[%s2777 + $0x28] sm:$0xff]
        %v2785 = vsel %vm319, %v2773, 0
        %v2788 = vsel %vm319, %v2774, 0
        %v2791 = vsel %vm319, %v2775, 0
        %v2794 = vsel %vm319, %v2776, 0
        %2796 = vmatprep.subr.mxu0 0.0
        %2797 = vmatpush1.msra.mxu0 0.0
        %2798 = vmatprep.subr.mxu0 0.0
        %2799 = vmatpush1.msra.mxu0 0.0
        %2800 = vmatprep.subr.mxu0 0.0
        %2801 = vmatpush1.msra.mxu0 0.0
        %2802 = vmatprep.subr.mxu0 0.0
        %2803 = vmatpush1.msra.mxu0 0.0
        %2804 = vmatprep.subr.mxu0 0.0
        %2805 = vmatpush1.msra.mxu0 0.0
        %2806 = vmatprep.subr.mxu0 0.0
        %2807 = vmatpush1.msra.mxu0 0.0
        %2808 = vmatprep.subr.mxu0 0.0
        %2809 = vmatpush1.msra.mxu0 0.0
        %2810 = vmatprep.subr.mxu0 0.0
        %2811 = vmatpush1.msra.mxu0 0.0
        %2812 = vmatprep.subr.mxu0 0.0
        %2813 = vmatpush1.msra.mxu0 0.0
        %2814 = vmatprep.subr.mxu0 0.0
        %2815 = vmatpush1.msra.mxu0 0.0
        %2816 = vmatprep.subr.mxu0 0.0
        %2817 = vmatpush1.msra.mxu0 %v2783
        %2818 = vmatprep.subr.mxu0 0.0
        %2819 = vmatpush1.msra.mxu0 %v2782
        %2820 = vmatprep.subr.mxu0 0.0
        %2821 = vmatpush1.msra.mxu0 %v2781
        %2822 = vmatprep.subr.mxu0 0.0
        %2823 = vmatpush1.msra.mxu0 %v2780
        %2824 = vmatprep.subr.mxu0 0.0
        %2825 = vmatpush1.msra.mxu0 %v2779
        %2826 = vmatprep.subr.mxu0 0.0
        %2827 = vmatpush1.msra.mxu0 %v2778
        %2828 = vmatprep.subr.mxu0 0.0
        %2829 = vmatpush2.msra.mxu0 0.0
        %2830 = vmatprep.subr.mxu0 0.0
        %2831 = vmatpush2.msra.mxu0 0.0
        %2832 = vmatprep.subr.mxu0 0.0
        %2833 = vmatpush2.msra.mxu0 0.0
        %2834 = vmatprep.subr.mxu0 0.0
        %2835 = vmatpush2.msra.mxu0 0.0
        %2836 = vmatprep.subr.mxu0 0.0
        %2837 = vmatpush2.msra.mxu0 0.0
        %2838 = vmatprep.subr.mxu0 0.0
        %2839 = vmatpush2.msra.mxu0 0.0
        %2840 = vmatprep.subr.mxu0 0.0
        %2841 = vmatpush2.msra.mxu0 0.0
        %2842 = vmatprep.subr.mxu0 0.0
        %2843 = vmatpush2.msra.mxu0 0.0
        %2844 = vmatprep.subr.mxu0 0.0
        %2845 = vmatpush2.msra.mxu0 0.0
        %2846 = vmatprep.subr.mxu0 0.0
        %2847 = vmatpush2.msra.mxu0 0.0
        %2848 = vmatprep.subr.mxu0 0.0
        %2849 = vmatpush2.msra.mxu0 0.0
        %2850 = vmatprep.subr.mxu0 0.0
        %2851 = vmatpush2.msra.mxu0 0.0
        %2852 = vmatprep.subr.mxu0 0.0
        %2853 = vmatpush2.msra.mxu0 0.0
        %2854 = vmatprep.subr.mxu0 0.0
        %2855 = vmatpush2.msra.mxu0 0.0
        %2856 = vmatprep.subr.mxu0 0.0
        %2857 = vmatpush2.msra.mxu0 0.0
        %2858 = vmatprep.subr.mxu0 0.0
        %2859 = vmatpush2.msra.mxu0 0.0
        %2860 = vmatprep.mubr.f32.mxu0 0.0
        %2861 = vmatmul.mubr.f32.gmra.mxu0 %v2785
        %v2862 = vpop.f32.mrf.mxu0
        %v2863 = vadd.f32 0.0, %v2862
        %v2864 = vpop.f32.mrf.mxu0
        %2865 = vmatprep.mubr.f32.mxu0 0.0
        %2866 = vmatmul.mubr.f32.gmra.mxu0 %v2788
        %v2867 = vpop.f32.mrf.mxu0
        %v2868 = vadd.f32 0.0, %v2867
        %v2869 = vpop.f32.mrf.mxu0
        %2870 = vmatprep.mubr.f32.mxu0 0.0
        %2871 = vmatmul.mubr.f32.gmra.mxu0 %v2791
        %v2872 = vpop.f32.mrf.mxu0
        %v2873 = vadd.f32 0.0, %v2872
        %v2874 = vpop.f32.mrf.mxu0
        %2875 = vmatprep.mubr.f32.mxu0 0.0
        %2876 = vmatmul.mubr.f32.gmra.mxu0 %v2794
        %v2877 = vpop.f32.mrf.mxu0
        %v2878 = vadd.f32 0.0, %v2877
        %v2879 = vpop.f32.mrf.mxu0
        %2880 = vdwg.mxu0
        %v2881 = vadd.f32 %v2769, %v2863
        %v2882 = vadd.f32 %v2770, %v2868
        %v2883 = vadd.f32 %v2771, %v2873
        %v2884 = vadd.f32 %v2772, %v2878
        %v2885 = vld [vmem:[%s628 + $0x4] sm:$0xff]
        %v2886 = vld [vmem:[%s628 + $0x14] sm:$0xff]
        %v2887 = vld [vmem:[%s628 + $0x24] sm:$0xff]
        %v2888 = vld [vmem:[%s628 + $0x34] sm:$0xff]
        %s2889 = scalar_lea.vmem [#allocation2], 672
        %v2890 = vld [vmem:[%s2889] sm:$0xff]
        %v2891 = vld [vmem:[%s2889 + $0x8] sm:$0xff]
        %v2892 = vld [vmem:[%s2889 + $0x10] sm:$0xff]
        %v2893 = vld [vmem:[%s2889 + $0x18] sm:$0xff]
        %v2894 = vld [vmem:[%s2889 + $0x20] sm:$0xff]
        %v2895 = vld [vmem:[%s2889 + $0x28] sm:$0xff]
        %v2897 = vsel %vm319, %v2885, 0
        %v2900 = vsel %vm319, %v2886, 0
        %v2903 = vsel %vm319, %v2887, 0
        %v2906 = vsel %vm319, %v2888, 0
        %2908 = vmatprep.subr.mxu0 0.0
        %2909 = vmatpush1.msra.mxu0 0.0
        %2910 = vmatprep.subr.mxu0 0.0
        %2911 = vmatpush1.msra.mxu0 0.0
        %2912 = vmatprep.subr.mxu0 0.0
        %2913 = vmatpush1.msra.mxu0 0.0
        %2914 = vmatprep.subr.mxu0 0.0
        %2915 = vmatpush1.msra.mxu0 0.0
        %2916 = vmatprep.subr.mxu0 0.0
        %2917 = vmatpush1.msra.mxu0 0.0
        %2918 = vmatprep.subr.mxu0 0.0
        %2919 = vmatpush1.msra.mxu0 0.0
        %2920 = vmatprep.subr.mxu0 0.0
        %2921 = vmatpush1.msra.mxu0 0.0
        %2922 = vmatprep.subr.mxu0 0.0
        %2923 = vmatpush1.msra.mxu0 0.0
        %2924 = vmatprep.subr.mxu0 0.0
        %2925 = vmatpush1.msra.mxu0 0.0
        %2926 = vmatprep.subr.mxu0 0.0
        %2927 = vmatpush1.msra.mxu0 0.0
        %2928 = vmatprep.subr.mxu0 0.0
        %2929 = vmatpush1.msra.mxu0 %v2895
        %2930 = vmatprep.subr.mxu0 0.0
        %2931 = vmatpush1.msra.mxu0 %v2894
        %2932 = vmatprep.subr.mxu0 0.0
        %2933 = vmatpush1.msra.mxu0 %v2893
        %2934 = vmatprep.subr.mxu0 0.0
        %2935 = vmatpush1.msra.mxu0 %v2892
        %2936 = vmatprep.subr.mxu0 0.0
        %2937 = vmatpush1.msra.mxu0 %v2891
        %2938 = vmatprep.subr.mxu0 0.0
        %2939 = vmatpush1.msra.mxu0 %v2890
        %2940 = vmatprep.subr.mxu0 0.0
        %2941 = vmatpush2.msra.mxu0 0.0
        %2942 = vmatprep.subr.mxu0 0.0
        %2943 = vmatpush2.msra.mxu0 0.0
        %2944 = vmatprep.subr.mxu0 0.0
        %2945 = vmatpush2.msra.mxu0 0.0
        %2946 = vmatprep.subr.mxu0 0.0
        %2947 = vmatpush2.msra.mxu0 0.0
        %2948 = vmatprep.subr.mxu0 0.0
        %2949 = vmatpush2.msra.mxu0 0.0
        %2950 = vmatprep.subr.mxu0 0.0
        %2951 = vmatpush2.msra.mxu0 0.0
        %2952 = vmatprep.subr.mxu0 0.0
        %2953 = vmatpush2.msra.mxu0 0.0
        %2954 = vmatprep.subr.mxu0 0.0
        %2955 = vmatpush2.msra.mxu0 0.0
        %2956 = vmatprep.subr.mxu0 0.0
        %2957 = vmatpush2.msra.mxu0 0.0
        %2958 = vmatprep.subr.mxu0 0.0
        %2959 = vmatpush2.msra.mxu0 0.0
        %2960 = vmatprep.subr.mxu0 0.0
        %2961 = vmatpush2.msra.mxu0 0.0
        %2962 = vmatprep.subr.mxu0 0.0
        %2963 = vmatpush2.msra.mxu0 0.0
        %2964 = vmatprep.subr.mxu0 0.0
        %2965 = vmatpush2.msra.mxu0 0.0
        %2966 = vmatprep.subr.mxu0 0.0
        %2967 = vmatpush2.msra.mxu0 0.0
        %2968 = vmatprep.subr.mxu0 0.0
        %2969 = vmatpush2.msra.mxu0 0.0
        %2970 = vmatprep.subr.mxu0 0.0
        %2971 = vmatpush2.msra.mxu0 0.0
        %2972 = vmatprep.mubr.f32.mxu0 0.0
        %2973 = vmatmul.mubr.f32.gmra.mxu0 %v2897
        %v2974 = vpop.f32.mrf.mxu0
        %v2975 = vadd.f32 0.0, %v2974
        %v2976 = vpop.f32.mrf.mxu0
        %2977 = vmatprep.mubr.f32.mxu0 0.0
        %2978 = vmatmul.mubr.f32.gmra.mxu0 %v2900
        %v2979 = vpop.f32.mrf.mxu0
        %v2980 = vadd.f32 0.0, %v2979
        %v2981 = vpop.f32.mrf.mxu0
        %2982 = vmatprep.mubr.f32.mxu0 0.0
        %2983 = vmatmul.mubr.f32.gmra.mxu0 %v2903
        %v2984 = vpop.f32.mrf.mxu0
        %v2985 = vadd.f32 0.0, %v2984
        %v2986 = vpop.f32.mrf.mxu0
        %2987 = vmatprep.mubr.f32.mxu0 0.0
        %2988 = vmatmul.mubr.f32.gmra.mxu0 %v2906
        %v2989 = vpop.f32.mrf.mxu0
        %v2990 = vadd.f32 0.0, %v2989
        %v2991 = vpop.f32.mrf.mxu0
        %2992 = vdwg.mxu0
        %v2993 = vadd.f32 %v2881, %v2975
        %v2994 = vadd.f32 %v2882, %v2980
        %v2995 = vadd.f32 %v2883, %v2985
        %v2996 = vadd.f32 %v2884, %v2990
        %v2997 = vld [vmem:[%s967] sm:$0xff]
        %v2998 = vld [vmem:[%s967 + $0x10] sm:$0xff]
        %v2999 = vld [vmem:[%s967 + $0x20] sm:$0xff]
        %v3000 = vld [vmem:[%s967 + $0x30] sm:$0xff]
        %s3001 = scalar_lea.vmem [#allocation2], 720
        %v3002 = vld [vmem:[%s3001] sm:$0xff]
        %v3003 = vld [vmem:[%s3001 + $0x8] sm:$0xff]
        %v3004 = vld [vmem:[%s3001 + $0x10] sm:$0xff]
        %v3005 = vld [vmem:[%s3001 + $0x18] sm:$0xff]
        %v3006 = vld [vmem:[%s3001 + $0x20] sm:$0xff]
        %v3007 = vld [vmem:[%s3001 + $0x28] sm:$0xff]
        %v3009 = vsel %vm319, %v2997, 0
        %v3012 = vsel %vm319, %v2998, 0
        %v3015 = vsel %vm319, %v2999, 0
        %v3018 = vsel %vm319, %v3000, 0
        %3020 = vmatprep.subr.mxu0 0.0
        %3021 = vmatpush1.msra.mxu0 0.0
        %3022 = vmatprep.subr.mxu0 0.0
        %3023 = vmatpush1.msra.mxu0 0.0
        %3024 = vmatprep.subr.mxu0 0.0
        %3025 = vmatpush1.msra.mxu0 0.0
        %3026 = vmatprep.subr.mxu0 0.0
        %3027 = vmatpush1.msra.mxu0 0.0
        %3028 = vmatprep.subr.mxu0 0.0
        %3029 = vmatpush1.msra.mxu0 0.0
        %3030 = vmatprep.subr.mxu0 0.0
        %3031 = vmatpush1.msra.mxu0 0.0
        %3032 = vmatprep.subr.mxu0 0.0
        %3033 = vmatpush1.msra.mxu0 0.0
        %3034 = vmatprep.subr.mxu0 0.0
        %3035 = vmatpush1.msra.mxu0 0.0
        %3036 = vmatprep.subr.mxu0 0.0
        %3037 = vmatpush1.msra.mxu0 0.0
        %3038 = vmatprep.subr.mxu0 0.0
        %3039 = vmatpush1.msra.mxu0 0.0
        %3040 = vmatprep.subr.mxu0 0.0
        %3041 = vmatpush1.msra.mxu0 %v3007
        %3042 = vmatprep.subr.mxu0 0.0
        %3043 = vmatpush1.msra.mxu0 %v3006
        %3044 = vmatprep.subr.mxu0 0.0
        %3045 = vmatpush1.msra.mxu0 %v3005
        %3046 = vmatprep.subr.mxu0 0.0
        %3047 = vmatpush1.msra.mxu0 %v3004
        %3048 = vmatprep.subr.mxu0 0.0
        %3049 = vmatpush1.msra.mxu0 %v3003
        %3050 = vmatprep.subr.mxu0 0.0
        %3051 = vmatpush1.msra.mxu0 %v3002
        %3052 = vmatprep.subr.mxu0 0.0
        %3053 = vmatpush2.msra.mxu0 0.0
        %3054 = vmatprep.subr.mxu0 0.0
        %3055 = vmatpush2.msra.mxu0 0.0
        %3056 = vmatprep.subr.mxu0 0.0
        %3057 = vmatpush2.msra.mxu0 0.0
        %3058 = vmatprep.subr.mxu0 0.0
        %3059 = vmatpush2.msra.mxu0 0.0
        %3060 = vmatprep.subr.mxu0 0.0
        %3061 = vmatpush2.msra.mxu0 0.0
        %3062 = vmatprep.subr.mxu0 0.0
        %3063 = vmatpush2.msra.mxu0 0.0
        %3064 = vmatprep.subr.mxu0 0.0
        %3065 = vmatpush2.msra.mxu0 0.0
        %3066 = vmatprep.subr.mxu0 0.0
        %3067 = vmatpush2.msra.mxu0 0.0
        %3068 = vmatprep.subr.mxu0 0.0
        %3069 = vmatpush2.msra.mxu0 0.0
        %3070 = vmatprep.subr.mxu0 0.0
        %3071 = vmatpush2.msra.mxu0 0.0
        %3072 = vmatprep.subr.mxu0 0.0
        %3073 = vmatpush2.msra.mxu0 0.0
        %3074 = vmatprep.subr.mxu0 0.0
        %3075 = vmatpush2.msra.mxu0 0.0
        %3076 = vmatprep.subr.mxu0 0.0
        %3077 = vmatpush2.msra.mxu0 0.0
        %3078 = vmatprep.subr.mxu0 0.0
        %3079 = vmatpush2.msra.mxu0 0.0
        %3080 = vmatprep.subr.mxu0 0.0
        %3081 = vmatpush2.msra.mxu0 0.0
        %3082 = vmatprep.subr.mxu0 0.0
        %3083 = vmatpush2.msra.mxu0 0.0
        %3084 = vmatprep.mubr.f32.mxu0 0.0
        %3085 = vmatmul.mubr.f32.gmra.mxu0 %v3009
        %v3086 = vpop.f32.mrf.mxu0
        %v3087 = vadd.f32 0.0, %v3086
        %v3088 = vpop.f32.mrf.mxu0
        %3089 = vmatprep.mubr.f32.mxu0 0.0
        %3090 = vmatmul.mubr.f32.gmra.mxu0 %v3012
        %v3091 = vpop.f32.mrf.mxu0
        %v3092 = vadd.f32 0.0, %v3091
        %v3093 = vpop.f32.mrf.mxu0
        %3094 = vmatprep.mubr.f32.mxu0 0.0
        %3095 = vmatmul.mubr.f32.gmra.mxu0 %v3015
        %v3096 = vpop.f32.mrf.mxu0
        %v3097 = vadd.f32 0.0, %v3096
        %v3098 = vpop.f32.mrf.mxu0
        %3099 = vmatprep.mubr.f32.mxu0 0.0
        %3100 = vmatmul.mubr.f32.gmra.mxu0 %v3018
        %v3101 = vpop.f32.mrf.mxu0
        %v3102 = vadd.f32 0.0, %v3101
        %v3103 = vpop.f32.mrf.mxu0
        %3104 = vdwg.mxu0
        %v3105 = vadd.f32 %v2993, %v3087
        %v3106 = vadd.f32 %v2994, %v3092
        %v3107 = vadd.f32 %v2995, %v3097
        %v3108 = vadd.f32 %v2996, %v3102
        %v3109 = vld [vmem:[%s967 + $0x1] sm:$0xff]
        %v3110 = vld [vmem:[%s967 + $0x11] sm:$0xff]
        %v3111 = vld [vmem:[%s967 + $0x21] sm:$0xff]
        %v3112 = vld [vmem:[%s967 + $0x31] sm:$0xff]
        %s3113 = scalar_lea.vmem [#allocation2], 768
        %v3114 = vld [vmem:[%s3113] sm:$0xff]
        %v3115 = vld [vmem:[%s3113 + $0x8] sm:$0xff]
        %v3116 = vld [vmem:[%s3113 + $0x10] sm:$0xff]
        %v3117 = vld [vmem:[%s3113 + $0x18] sm:$0xff]
        %v3118 = vld [vmem:[%s3113 + $0x20] sm:$0xff]
        %v3119 = vld [vmem:[%s3113 + $0x28] sm:$0xff]
        %v3121 = vsel %vm319, %v3109, 0
        %v3124 = vsel %vm319, %v3110, 0
        %v3127 = vsel %vm319, %v3111, 0
        %v3130 = vsel %vm319, %v3112, 0
        %3132 = vmatprep.subr.mxu0 0.0
        %3133 = vmatpush1.msra.mxu0 0.0
        %3134 = vmatprep.subr.mxu0 0.0
        %3135 = vmatpush1.msra.mxu0 0.0
        %3136 = vmatprep.subr.mxu0 0.0
        %3137 = vmatpush1.msra.mxu0 0.0
        %3138 = vmatprep.subr.mxu0 0.0
        %3139 = vmatpush1.msra.mxu0 0.0
        %3140 = vmatprep.subr.mxu0 0.0
        %3141 = vmatpush1.msra.mxu0 0.0
        %3142 = vmatprep.subr.mxu0 0.0
        %3143 = vmatpush1.msra.mxu0 0.0
        %3144 = vmatprep.subr.mxu0 0.0
        %3145 = vmatpush1.msra.mxu0 0.0
        %3146 = vmatprep.subr.mxu0 0.0
        %3147 = vmatpush1.msra.mxu0 0.0
        %3148 = vmatprep.subr.mxu0 0.0
        %3149 = vmatpush1.msra.mxu0 0.0
        %3150 = vmatprep.subr.mxu0 0.0
        %3151 = vmatpush1.msra.mxu0 0.0
        %3152 = vmatprep.subr.mxu0 0.0
        %3153 = vmatpush1.msra.mxu0 %v3119
        %3154 = vmatprep.subr.mxu0 0.0
        %3155 = vmatpush1.msra.mxu0 %v3118
        %3156 = vmatprep.subr.mxu0 0.0
        %3157 = vmatpush1.msra.mxu0 %v3117
        %3158 = vmatprep.subr.mxu0 0.0
        %3159 = vmatpush1.msra.mxu0 %v3116
        %3160 = vmatprep.subr.mxu0 0.0
        %3161 = vmatpush1.msra.mxu0 %v3115
        %3162 = vmatprep.subr.mxu0 0.0
        %3163 = vmatpush1.msra.mxu0 %v3114
        %3164 = vmatprep.subr.mxu0 0.0
        %3165 = vmatpush2.msra.mxu0 0.0
        %3166 = vmatprep.subr.mxu0 0.0
        %3167 = vmatpush2.msra.mxu0 0.0
        %3168 = vmatprep.subr.mxu0 0.0
        %3169 = vmatpush2.msra.mxu0 0.0
        %3170 = vmatprep.subr.mxu0 0.0
        %3171 = vmatpush2.msra.mxu0 0.0
        %3172 = vmatprep.subr.mxu0 0.0
        %3173 = vmatpush2.msra.mxu0 0.0
        %3174 = vmatprep.subr.mxu0 0.0
        %3175 = vmatpush2.msra.mxu0 0.0
        %3176 = vmatprep.subr.mxu0 0.0
        %3177 = vmatpush2.msra.mxu0 0.0
        %3178 = vmatprep.subr.mxu0 0.0
        %3179 = vmatpush2.msra.mxu0 0.0
        %3180 = vmatprep.subr.mxu0 0.0
        %3181 = vmatpush2.msra.mxu0 0.0
        %3182 = vmatprep.subr.mxu0 0.0
        %3183 = vmatpush2.msra.mxu0 0.0
        %3184 = vmatprep.subr.mxu0 0.0
        %3185 = vmatpush2.msra.mxu0 0.0
        %3186 = vmatprep.subr.mxu0 0.0
        %3187 = vmatpush2.msra.mxu0 0.0
        %3188 = vmatprep.subr.mxu0 0.0
        %3189 = vmatpush2.msra.mxu0 0.0
        %3190 = vmatprep.subr.mxu0 0.0
        %3191 = vmatpush2.msra.mxu0 0.0
        %3192 = vmatprep.subr.mxu0 0.0
        %3193 = vmatpush2.msra.mxu0 0.0
        %3194 = vmatprep.subr.mxu0 0.0
        %3195 = vmatpush2.msra.mxu0 0.0
        %3196 = vmatprep.mubr.f32.mxu0 0.0
        %3197 = vmatmul.mubr.f32.gmra.mxu0 %v3121
        %v3198 = vpop.f32.mrf.mxu0
        %v3199 = vadd.f32 0.0, %v3198
        %v3200 = vpop.f32.mrf.mxu0
        %3201 = vmatprep.mubr.f32.mxu0 0.0
        %3202 = vmatmul.mubr.f32.gmra.mxu0 %v3124
        %v3203 = vpop.f32.mrf.mxu0
        %v3204 = vadd.f32 0.0, %v3203
        %v3205 = vpop.f32.mrf.mxu0
        %3206 = vmatprep.mubr.f32.mxu0 0.0
        %3207 = vmatmul.mubr.f32.gmra.mxu0 %v3127
        %v3208 = vpop.f32.mrf.mxu0
        %v3209 = vadd.f32 0.0, %v3208
        %v3210 = vpop.f32.mrf.mxu0
        %3211 = vmatprep.mubr.f32.mxu0 0.0
        %3212 = vmatmul.mubr.f32.gmra.mxu0 %v3130
        %v3213 = vpop.f32.mrf.mxu0
        %v3214 = vadd.f32 0.0, %v3213
        %v3215 = vpop.f32.mrf.mxu0
        %3216 = vdwg.mxu0
        %v3217 = vadd.f32 %v3105, %v3199
        %v3218 = vadd.f32 %v3106, %v3204
        %v3219 = vadd.f32 %v3107, %v3209
        %v3220 = vadd.f32 %v3108, %v3214
        %v3221 = vld [vmem:[%s967 + $0x2] sm:$0xff]
        %v3222 = vld [vmem:[%s967 + $0x12] sm:$0xff]
        %v3223 = vld [vmem:[%s967 + $0x22] sm:$0xff]
        %v3224 = vld [vmem:[%s967 + $0x32] sm:$0xff]
        %s3225 = scalar_lea.vmem [#allocation2], 816
        %v3226 = vld [vmem:[%s3225] sm:$0xff]
        %v3227 = vld [vmem:[%s3225 + $0x8] sm:$0xff]
        %v3228 = vld [vmem:[%s3225 + $0x10] sm:$0xff]
        %v3229 = vld [vmem:[%s3225 + $0x18] sm:$0xff]
        %v3230 = vld [vmem:[%s3225 + $0x20] sm:$0xff]
        %v3231 = vld [vmem:[%s3225 + $0x28] sm:$0xff]
        %v3233 = vsel %vm319, %v3221, 0
        %v3236 = vsel %vm319, %v3222, 0
        %v3239 = vsel %vm319, %v3223, 0
        %v3242 = vsel %vm319, %v3224, 0
        %3244 = vmatprep.subr.mxu0 0.0
        %3245 = vmatpush1.msra.mxu0 0.0
        %3246 = vmatprep.subr.mxu0 0.0
        %3247 = vmatpush1.msra.mxu0 0.0
        %3248 = vmatprep.subr.mxu0 0.0
        %3249 = vmatpush1.msra.mxu0 0.0
        %3250 = vmatprep.subr.mxu0 0.0
        %3251 = vmatpush1.msra.mxu0 0.0
        %3252 = vmatprep.subr.mxu0 0.0
        %3253 = vmatpush1.msra.mxu0 0.0
        %3254 = vmatprep.subr.mxu0 0.0
        %3255 = vmatpush1.msra.mxu0 0.0
        %3256 = vmatprep.subr.mxu0 0.0
        %3257 = vmatpush1.msra.mxu0 0.0
        %3258 = vmatprep.subr.mxu0 0.0
        %3259 = vmatpush1.msra.mxu0 0.0
        %3260 = vmatprep.subr.mxu0 0.0
        %3261 = vmatpush1.msra.mxu0 0.0
        %3262 = vmatprep.subr.mxu0 0.0
        %3263 = vmatpush1.msra.mxu0 0.0
        %3264 = vmatprep.subr.mxu0 0.0
        %3265 = vmatpush1.msra.mxu0 %v3231
        %3266 = vmatprep.subr.mxu0 0.0
        %3267 = vmatpush1.msra.mxu0 %v3230
        %3268 = vmatprep.subr.mxu0 0.0
        %3269 = vmatpush1.msra.mxu0 %v3229
        %3270 = vmatprep.subr.mxu0 0.0
        %3271 = vmatpush1.msra.mxu0 %v3228
        %3272 = vmatprep.subr.mxu0 0.0
        %3273 = vmatpush1.msra.mxu0 %v3227
        %3274 = vmatprep.subr.mxu0 0.0
        %3275 = vmatpush1.msra.mxu0 %v3226
        %3276 = vmatprep.subr.mxu0 0.0
        %3277 = vmatpush2.msra.mxu0 0.0
        %3278 = vmatprep.subr.mxu0 0.0
        %3279 = vmatpush2.msra.mxu0 0.0
        %3280 = vmatprep.subr.mxu0 0.0
        %3281 = vmatpush2.msra.mxu0 0.0
        %3282 = vmatprep.subr.mxu0 0.0
        %3283 = vmatpush2.msra.mxu0 0.0
        %3284 = vmatprep.subr.mxu0 0.0
        %3285 = vmatpush2.msra.mxu0 0.0
        %3286 = vmatprep.subr.mxu0 0.0
        %3287 = vmatpush2.msra.mxu0 0.0
        %3288 = vmatprep.subr.mxu0 0.0
        %3289 = vmatpush2.msra.mxu0 0.0
        %3290 = vmatprep.subr.mxu0 0.0
        %3291 = vmatpush2.msra.mxu0 0.0
        %3292 = vmatprep.subr.mxu0 0.0
        %3293 = vmatpush2.msra.mxu0 0.0
        %3294 = vmatprep.subr.mxu0 0.0
        %3295 = vmatpush2.msra.mxu0 0.0
        %3296 = vmatprep.subr.mxu0 0.0
        %3297 = vmatpush2.msra.mxu0 0.0
        %3298 = vmatprep.subr.mxu0 0.0
        %3299 = vmatpush2.msra.mxu0 0.0
        %3300 = vmatprep.subr.mxu0 0.0
        %3301 = vmatpush2.msra.mxu0 0.0
        %3302 = vmatprep.subr.mxu0 0.0
        %3303 = vmatpush2.msra.mxu0 0.0
        %3304 = vmatprep.subr.mxu0 0.0
        %3305 = vmatpush2.msra.mxu0 0.0
        %3306 = vmatprep.subr.mxu0 0.0
        %3307 = vmatpush2.msra.mxu0 0.0
        %3308 = vmatprep.mubr.f32.mxu0 0.0
        %3309 = vmatmul.mubr.f32.gmra.mxu0 %v3233
        %v3310 = vpop.f32.mrf.mxu0
        %v3311 = vadd.f32 0.0, %v3310
        %v3312 = vpop.f32.mrf.mxu0
        %3313 = vmatprep.mubr.f32.mxu0 0.0
        %3314 = vmatmul.mubr.f32.gmra.mxu0 %v3236
        %v3315 = vpop.f32.mrf.mxu0
        %v3316 = vadd.f32 0.0, %v3315
        %v3317 = vpop.f32.mrf.mxu0
        %3318 = vmatprep.mubr.f32.mxu0 0.0
        %3319 = vmatmul.mubr.f32.gmra.mxu0 %v3239
        %v3320 = vpop.f32.mrf.mxu0
        %v3321 = vadd.f32 0.0, %v3320
        %v3322 = vpop.f32.mrf.mxu0
        %3323 = vmatprep.mubr.f32.mxu0 0.0
        %3324 = vmatmul.mubr.f32.gmra.mxu0 %v3242
        %v3325 = vpop.f32.mrf.mxu0
        %v3326 = vadd.f32 0.0, %v3325
        %v3327 = vpop.f32.mrf.mxu0
        %3328 = vdwg.mxu0
        %v3329 = vadd.f32 %v3217, %v3311
        %v3330 = vadd.f32 %v3218, %v3316
        %v3331 = vadd.f32 %v3219, %v3321
        %v3332 = vadd.f32 %v3220, %v3326
        %v3333 = vld [vmem:[%s967 + $0x3] sm:$0xff]
        %v3334 = vld [vmem:[%s967 + $0x13] sm:$0xff]
        %v3335 = vld [vmem:[%s967 + $0x23] sm:$0xff]
        %v3336 = vld [vmem:[%s967 + $0x33] sm:$0xff]
        %s3337 = scalar_lea.vmem [#allocation2], 864
        %v3338 = vld [vmem:[%s3337] sm:$0xff]
        %v3339 = vld [vmem:[%s3337 + $0x8] sm:$0xff]
        %v3340 = vld [vmem:[%s3337 + $0x10] sm:$0xff]
        %v3341 = vld [vmem:[%s3337 + $0x18] sm:$0xff]
        %v3342 = vld [vmem:[%s3337 + $0x20] sm:$0xff]
        %v3343 = vld [vmem:[%s3337 + $0x28] sm:$0xff]
        %v3345 = vsel %vm319, %v3333, 0
        %v3348 = vsel %vm319, %v3334, 0
        %v3351 = vsel %vm319, %v3335, 0
        %v3354 = vsel %vm319, %v3336, 0
        %3356 = vmatprep.subr.mxu0 0.0
        %3357 = vmatpush1.msra.mxu0 0.0
        %3358 = vmatprep.subr.mxu0 0.0
        %3359 = vmatpush1.msra.mxu0 0.0
        %3360 = vmatprep.subr.mxu0 0.0
        %3361 = vmatpush1.msra.mxu0 0.0
        %3362 = vmatprep.subr.mxu0 0.0
        %3363 = vmatpush1.msra.mxu0 0.0
        %3364 = vmatprep.subr.mxu0 0.0
        %3365 = vmatpush1.msra.mxu0 0.0
        %3366 = vmatprep.subr.mxu0 0.0
        %3367 = vmatpush1.msra.mxu0 0.0
        %3368 = vmatprep.subr.mxu0 0.0
        %3369 = vmatpush1.msra.mxu0 0.0
        %3370 = vmatprep.subr.mxu0 0.0
        %3371 = vmatpush1.msra.mxu0 0.0
        %3372 = vmatprep.subr.mxu0 0.0
        %3373 = vmatpush1.msra.mxu0 0.0
        %3374 = vmatprep.subr.mxu0 0.0
        %3375 = vmatpush1.msra.mxu0 0.0
        %3376 = vmatprep.subr.mxu0 0.0
        %3377 = vmatpush1.msra.mxu0 %v3343
        %3378 = vmatprep.subr.mxu0 0.0
        %3379 = vmatpush1.msra.mxu0 %v3342
        %3380 = vmatprep.subr.mxu0 0.0
        %3381 = vmatpush1.msra.mxu0 %v3341
        %3382 = vmatprep.subr.mxu0 0.0
        %3383 = vmatpush1.msra.mxu0 %v3340
        %3384 = vmatprep.subr.mxu0 0.0
        %3385 = vmatpush1.msra.mxu0 %v3339
        %3386 = vmatprep.subr.mxu0 0.0
        %3387 = vmatpush1.msra.mxu0 %v3338
        %3388 = vmatprep.subr.mxu0 0.0
        %3389 = vmatpush2.msra.mxu0 0.0
        %3390 = vmatprep.subr.mxu0 0.0
        %3391 = vmatpush2.msra.mxu0 0.0
        %3392 = vmatprep.subr.mxu0 0.0
        %3393 = vmatpush2.msra.mxu0 0.0
        %3394 = vmatprep.subr.mxu0 0.0
        %3395 = vmatpush2.msra.mxu0 0.0
        %3396 = vmatprep.subr.mxu0 0.0
        %3397 = vmatpush2.msra.mxu0 0.0
        %3398 = vmatprep.subr.mxu0 0.0
        %3399 = vmatpush2.msra.mxu0 0.0
        %3400 = vmatprep.subr.mxu0 0.0
        %3401 = vmatpush2.msra.mxu0 0.0
        %3402 = vmatprep.subr.mxu0 0.0
        %3403 = vmatpush2.msra.mxu0 0.0
        %3404 = vmatprep.subr.mxu0 0.0
        %3405 = vmatpush2.msra.mxu0 0.0
        %3406 = vmatprep.subr.mxu0 0.0
        %3407 = vmatpush2.msra.mxu0 0.0
        %3408 = vmatprep.subr.mxu0 0.0
        %3409 = vmatpush2.msra.mxu0 0.0
        %3410 = vmatprep.subr.mxu0 0.0
        %3411 = vmatpush2.msra.mxu0 0.0
        %3412 = vmatprep.subr.mxu0 0.0
        %3413 = vmatpush2.msra.mxu0 0.0
        %3414 = vmatprep.subr.mxu0 0.0
        %3415 = vmatpush2.msra.mxu0 0.0
        %3416 = vmatprep.subr.mxu0 0.0
        %3417 = vmatpush2.msra.mxu0 0.0
        %3418 = vmatprep.subr.mxu0 0.0
        %3419 = vmatpush2.msra.mxu0 0.0
        %3420 = vmatprep.mubr.f32.mxu0 0.0
        %3421 = vmatmul.mubr.f32.gmra.mxu0 %v3345
        %v3422 = vpop.f32.mrf.mxu0
        %v3423 = vadd.f32 0.0, %v3422
        %v3424 = vpop.f32.mrf.mxu0
        %3425 = vmatprep.mubr.f32.mxu0 0.0
        %3426 = vmatmul.mubr.f32.gmra.mxu0 %v3348
        %v3427 = vpop.f32.mrf.mxu0
        %v3428 = vadd.f32 0.0, %v3427
        %v3429 = vpop.f32.mrf.mxu0
        %3430 = vmatprep.mubr.f32.mxu0 0.0
        %3431 = vmatmul.mubr.f32.gmra.mxu0 %v3351
        %v3432 = vpop.f32.mrf.mxu0
        %v3433 = vadd.f32 0.0, %v3432
        %v3434 = vpop.f32.mrf.mxu0
        %3435 = vmatprep.mubr.f32.mxu0 0.0
        %3436 = vmatmul.mubr.f32.gmra.mxu0 %v3354
        %v3437 = vpop.f32.mrf.mxu0
        %v3438 = vadd.f32 0.0, %v3437
        %v3439 = vpop.f32.mrf.mxu0
        %3440 = vdwg.mxu0
        %v3441 = vadd.f32 %v3329, %v3423
        %v3442 = vadd.f32 %v3330, %v3428
        %v3443 = vadd.f32 %v3331, %v3433
        %v3444 = vadd.f32 %v3332, %v3438
        %v3445 = vld [vmem:[%s967 + $0x4] sm:$0xff]
        %v3446 = vld [vmem:[%s967 + $0x14] sm:$0xff]
        %v3447 = vld [vmem:[%s967 + $0x24] sm:$0xff]
        %v3448 = vld [vmem:[%s967 + $0x34] sm:$0xff]
        %s3449 = scalar_lea.vmem [#allocation2], 912
        %v3450 = vld [vmem:[%s3449] sm:$0xff]
        %v3451 = vld [vmem:[%s3449 + $0x8] sm:$0xff]
        %v3452 = vld [vmem:[%s3449 + $0x10] sm:$0xff]
        %v3453 = vld [vmem:[%s3449 + $0x18] sm:$0xff]
        %v3454 = vld [vmem:[%s3449 + $0x20] sm:$0xff]
        %v3455 = vld [vmem:[%s3449 + $0x28] sm:$0xff]
        %v3457 = vsel %vm319, %v3445, 0
        %v3460 = vsel %vm319, %v3446, 0
        %v3463 = vsel %vm319, %v3447, 0
        %v3466 = vsel %vm319, %v3448, 0
        %3468 = vmatprep.subr.mxu0 0.0
        %3469 = vmatpush1.msra.mxu0 0.0
        %3470 = vmatprep.subr.mxu0 0.0
        %3471 = vmatpush1.msra.mxu0 0.0
        %3472 = vmatprep.subr.mxu0 0.0
        %3473 = vmatpush1.msra.mxu0 0.0
        %3474 = vmatprep.subr.mxu0 0.0
        %3475 = vmatpush1.msra.mxu0 0.0
        %3476 = vmatprep.subr.mxu0 0.0
        %3477 = vmatpush1.msra.mxu0 0.0
        %3478 = vmatprep.subr.mxu0 0.0
        %3479 = vmatpush1.msra.mxu0 0.0
        %3480 = vmatprep.subr.mxu0 0.0
        %3481 = vmatpush1.msra.mxu0 0.0
        %3482 = vmatprep.subr.mxu0 0.0
        %3483 = vmatpush1.msra.mxu0 0.0
        %3484 = vmatprep.subr.mxu0 0.0
        %3485 = vmatpush1.msra.mxu0 0.0
        %3486 = vmatprep.subr.mxu0 0.0
        %3487 = vmatpush1.msra.mxu0 0.0
        %3488 = vmatprep.subr.mxu0 0.0
        %3489 = vmatpush1.msra.mxu0 %v3455
        %3490 = vmatprep.subr.mxu0 0.0
        %3491 = vmatpush1.msra.mxu0 %v3454
        %3492 = vmatprep.subr.mxu0 0.0
        %3493 = vmatpush1.msra.mxu0 %v3453
        %3494 = vmatprep.subr.mxu0 0.0
        %3495 = vmatpush1.msra.mxu0 %v3452
        %3496 = vmatprep.subr.mxu0 0.0
        %3497 = vmatpush1.msra.mxu0 %v3451
        %3498 = vmatprep.subr.mxu0 0.0
        %3499 = vmatpush1.msra.mxu0 %v3450
        %3500 = vmatprep.subr.mxu0 0.0
        %3501 = vmatpush2.msra.mxu0 0.0
        %3502 = vmatprep.subr.mxu0 0.0
        %3503 = vmatpush2.msra.mxu0 0.0
        %3504 = vmatprep.subr.mxu0 0.0
        %3505 = vmatpush2.msra.mxu0 0.0
        %3506 = vmatprep.subr.mxu0 0.0
        %3507 = vmatpush2.msra.mxu0 0.0
        %3508 = vmatprep.subr.mxu0 0.0
        %3509 = vmatpush2.msra.mxu0 0.0
        %3510 = vmatprep.subr.mxu0 0.0
        %3511 = vmatpush2.msra.mxu0 0.0
        %3512 = vmatprep.subr.mxu0 0.0
        %3513 = vmatpush2.msra.mxu0 0.0
        %3514 = vmatprep.subr.mxu0 0.0
        %3515 = vmatpush2.msra.mxu0 0.0
        %3516 = vmatprep.subr.mxu0 0.0
        %3517 = vmatpush2.msra.mxu0 0.0
        %3518 = vmatprep.subr.mxu0 0.0
        %3519 = vmatpush2.msra.mxu0 0.0
        %3520 = vmatprep.subr.mxu0 0.0
        %3521 = vmatpush2.msra.mxu0 0.0
        %3522 = vmatprep.subr.mxu0 0.0
        %3523 = vmatpush2.msra.mxu0 0.0
        %3524 = vmatprep.subr.mxu0 0.0
        %3525 = vmatpush2.msra.mxu0 0.0
        %3526 = vmatprep.subr.mxu0 0.0
        %3527 = vmatpush2.msra.mxu0 0.0
        %3528 = vmatprep.subr.mxu0 0.0
        %3529 = vmatpush2.msra.mxu0 0.0
        %3530 = vmatprep.subr.mxu0 0.0
        %3531 = vmatpush2.msra.mxu0 0.0
        %3532 = vmatprep.mubr.f32.mxu0 0.0
        %3533 = vmatmul.mubr.f32.gmra.mxu0 %v3457
        %v3534 = vpop.f32.mrf.mxu0
        %v3535 = vadd.f32 0.0, %v3534
        %v3536 = vpop.f32.mrf.mxu0
        %3537 = vmatprep.mubr.f32.mxu0 0.0
        %3538 = vmatmul.mubr.f32.gmra.mxu0 %v3460
        %v3539 = vpop.f32.mrf.mxu0
        %v3540 = vadd.f32 0.0, %v3539
        %v3541 = vpop.f32.mrf.mxu0
        %3542 = vmatprep.mubr.f32.mxu0 0.0
        %3543 = vmatmul.mubr.f32.gmra.mxu0 %v3463
        %v3544 = vpop.f32.mrf.mxu0
        %v3545 = vadd.f32 0.0, %v3544
        %v3546 = vpop.f32.mrf.mxu0
        %3547 = vmatprep.mubr.f32.mxu0 0.0
        %3548 = vmatmul.mubr.f32.gmra.mxu0 %v3466
        %v3549 = vpop.f32.mrf.mxu0
        %v3550 = vadd.f32 0.0, %v3549
        %v3551 = vpop.f32.mrf.mxu0
        %3552 = vdwg.mxu0
        %v3553 = vadd.f32 %v3441, %v3535
        %v3554 = vadd.f32 %v3442, %v3540
        %v3555 = vadd.f32 %v3443, %v3545
        %v3556 = vadd.f32 %v3444, %v3550
        %s3557 = sadd.s32 %s294, 4
        %s3558 = smul.u32 %s3557, 16
        %s3559 = scalar_lea.vmem %s291, %s3558
        %v3560 = vld [vmem:[%s3559] sm:$0xff]
        %v3561 = vld [vmem:[%s3559 + $0x10] sm:$0xff]
        %v3562 = vld [vmem:[%s3559 + $0x20] sm:$0xff]
        %v3563 = vld [vmem:[%s3559 + $0x30] sm:$0xff]
        %s3564 = scalar_lea.vmem [#allocation2], 960
        %v3565 = vld [vmem:[%s3564] sm:$0xff]
        %v3566 = vld [vmem:[%s3564 + $0x8] sm:$0xff]
        %v3567 = vld [vmem:[%s3564 + $0x10] sm:$0xff]
        %v3568 = vld [vmem:[%s3564 + $0x18] sm:$0xff]
        %v3569 = vld [vmem:[%s3564 + $0x20] sm:$0xff]
        %v3570 = vld [vmem:[%s3564 + $0x28] sm:$0xff]
        %v3572 = vsel %vm319, %v3560, 0
        %v3575 = vsel %vm319, %v3561, 0
        %v3578 = vsel %vm319, %v3562, 0
        %v3581 = vsel %vm319, %v3563, 0
        %3583 = vmatprep.subr.mxu0 0.0
        %3584 = vmatpush1.msra.mxu0 0.0
        %3585 = vmatprep.subr.mxu0 0.0
        %3586 = vmatpush1.msra.mxu0 0.0
        %3587 = vmatprep.subr.mxu0 0.0
        %3588 = vmatpush1.msra.mxu0 0.0
        %3589 = vmatprep.subr.mxu0 0.0
        %3590 = vmatpush1.msra.mxu0 0.0
        %3591 = vmatprep.subr.mxu0 0.0
        %3592 = vmatpush1.msra.mxu0 0.0
        %3593 = vmatprep.subr.mxu0 0.0
        %3594 = vmatpush1.msra.mxu0 0.0
        %3595 = vmatprep.subr.mxu0 0.0
        %3596 = vmatpush1.msra.mxu0 0.0
        %3597 = vmatprep.subr.mxu0 0.0
        %3598 = vmatpush1.msra.mxu0 0.0
        %3599 = vmatprep.subr.mxu0 0.0
        %3600 = vmatpush1.msra.mxu0 0.0
        %3601 = vmatprep.subr.mxu0 0.0
        %3602 = vmatpush1.msra.mxu0 0.0
        %3603 = vmatprep.subr.mxu0 0.0
        %3604 = vmatpush1.msra.mxu0 %v3570
        %3605 = vmatprep.subr.mxu0 0.0
        %3606 = vmatpush1.msra.mxu0 %v3569
        %3607 = vmatprep.subr.mxu0 0.0
        %3608 = vmatpush1.msra.mxu0 %v3568
        %3609 = vmatprep.subr.mxu0 0.0
        %3610 = vmatpush1.msra.mxu0 %v3567
        %3611 = vmatprep.subr.mxu0 0.0
        %3612 = vmatpush1.msra.mxu0 %v3566
        %3613 = vmatprep.subr.mxu0 0.0
        %3614 = vmatpush1.msra.mxu0 %v3565
        %3615 = vmatprep.subr.mxu0 0.0
        %3616 = vmatpush2.msra.mxu0 0.0
        %3617 = vmatprep.subr.mxu0 0.0
        %3618 = vmatpush2.msra.mxu0 0.0
        %3619 = vmatprep.subr.mxu0 0.0
        %3620 = vmatpush2.msra.mxu0 0.0
        %3621 = vmatprep.subr.mxu0 0.0
        %3622 = vmatpush2.msra.mxu0 0.0
        %3623 = vmatprep.subr.mxu0 0.0
        %3624 = vmatpush2.msra.mxu0 0.0
        %3625 = vmatprep.subr.mxu0 0.0
        %3626 = vmatpush2.msra.mxu0 0.0
        %3627 = vmatprep.subr.mxu0 0.0
        %3628 = vmatpush2.msra.mxu0 0.0
        %3629 = vmatprep.subr.mxu0 0.0
        %3630 = vmatpush2.msra.mxu0 0.0
        %3631 = vmatprep.subr.mxu0 0.0
        %3632 = vmatpush2.msra.mxu0 0.0
        %3633 = vmatprep.subr.mxu0 0.0
        %3634 = vmatpush2.msra.mxu0 0.0
        %3635 = vmatprep.subr.mxu0 0.0
        %3636 = vmatpush2.msra.mxu0 0.0
        %3637 = vmatprep.subr.mxu0 0.0
        %3638 = vmatpush2.msra.mxu0 0.0
        %3639 = vmatprep.subr.mxu0 0.0
        %3640 = vmatpush2.msra.mxu0 0.0
        %3641 = vmatprep.subr.mxu0 0.0
        %3642 = vmatpush2.msra.mxu0 0.0
        %3643 = vmatprep.subr.mxu0 0.0
        %3644 = vmatpush2.msra.mxu0 0.0
        %3645 = vmatprep.subr.mxu0 0.0
        %3646 = vmatpush2.msra.mxu0 0.0
        %3647 = vmatprep.mubr.f32.mxu0 0.0
        %3648 = vmatmul.mubr.f32.gmra.mxu0 %v3572
        %v3649 = vpop.f32.mrf.mxu0
        %v3650 = vadd.f32 0.0, %v3649
        %v3651 = vpop.f32.mrf.mxu0
        %3652 = vmatprep.mubr.f32.mxu0 0.0
        %3653 = vmatmul.mubr.f32.gmra.mxu0 %v3575
        %v3654 = vpop.f32.mrf.mxu0
        %v3655 = vadd.f32 0.0, %v3654
        %v3656 = vpop.f32.mrf.mxu0
        %3657 = vmatprep.mubr.f32.mxu0 0.0
        %3658 = vmatmul.mubr.f32.gmra.mxu0 %v3578
        %v3659 = vpop.f32.mrf.mxu0
        %v3660 = vadd.f32 0.0, %v3659
        %v3661 = vpop.f32.mrf.mxu0
        %3662 = vmatprep.mubr.f32.mxu0 0.0
        %3663 = vmatmul.mubr.f32.gmra.mxu0 %v3581
        %v3664 = vpop.f32.mrf.mxu0
        %v3665 = vadd.f32 0.0, %v3664
        %v3666 = vpop.f32.mrf.mxu0
        %3667 = vdwg.mxu0
        %v3668 = vadd.f32 %v3553, %v3650
        %v3669 = vadd.f32 %v3554, %v3655
        %v3670 = vadd.f32 %v3555, %v3660
        %v3671 = vadd.f32 %v3556, %v3665
        %v3672 = vld [vmem:[%s3559 + $0x1] sm:$0xff]
        %v3673 = vld [vmem:[%s3559 + $0x11] sm:$0xff]
        %v3674 = vld [vmem:[%s3559 + $0x21] sm:$0xff]
        %v3675 = vld [vmem:[%s3559 + $0x31] sm:$0xff]
        %s3676 = scalar_lea.vmem [#allocation2], 1008
        %v3677 = vld [vmem:[%s3676] sm:$0xff]
        %v3678 = vld [vmem:[%s3676 + $0x8] sm:$0xff]
        %v3679 = vld [vmem:[%s3676 + $0x10] sm:$0xff]
        %v3680 = vld [vmem:[%s3676 + $0x18] sm:$0xff]
        %v3681 = vld [vmem:[%s3676 + $0x20] sm:$0xff]
        %v3682 = vld [vmem:[%s3676 + $0x28] sm:$0xff]
        %v3684 = vsel %vm319, %v3672, 0
        %v3687 = vsel %vm319, %v3673, 0
        %v3690 = vsel %vm319, %v3674, 0
        %v3693 = vsel %vm319, %v3675, 0
        %3695 = vmatprep.subr.mxu0 0.0
        %3696 = vmatpush1.msra.mxu0 0.0
        %3697 = vmatprep.subr.mxu0 0.0
        %3698 = vmatpush1.msra.mxu0 0.0
        %3699 = vmatprep.subr.mxu0 0.0
        %3700 = vmatpush1.msra.mxu0 0.0
        %3701 = vmatprep.subr.mxu0 0.0
        %3702 = vmatpush1.msra.mxu0 0.0
        %3703 = vmatprep.subr.mxu0 0.0
        %3704 = vmatpush1.msra.mxu0 0.0
        %3705 = vmatprep.subr.mxu0 0.0
        %3706 = vmatpush1.msra.mxu0 0.0
        %3707 = vmatprep.subr.mxu0 0.0
        %3708 = vmatpush1.msra.mxu0 0.0
        %3709 = vmatprep.subr.mxu0 0.0
        %3710 = vmatpush1.msra.mxu0 0.0
        %3711 = vmatprep.subr.mxu0 0.0
        %3712 = vmatpush1.msra.mxu0 0.0
        %3713 = vmatprep.subr.mxu0 0.0
        %3714 = vmatpush1.msra.mxu0 0.0
        %3715 = vmatprep.subr.mxu0 0.0
        %3716 = vmatpush1.msra.mxu0 %v3682
        %3717 = vmatprep.subr.mxu0 0.0
        %3718 = vmatpush1.msra.mxu0 %v3681
        %3719 = vmatprep.subr.mxu0 0.0
        %3720 = vmatpush1.msra.mxu0 %v3680
        %3721 = vmatprep.subr.mxu0 0.0
        %3722 = vmatpush1.msra.mxu0 %v3679
        %3723 = vmatprep.subr.mxu0 0.0
        %3724 = vmatpush1.msra.mxu0 %v3678
        %3725 = vmatprep.subr.mxu0 0.0
        %3726 = vmatpush1.msra.mxu0 %v3677
        %3727 = vmatprep.subr.mxu0 0.0
        %3728 = vmatpush2.msra.mxu0 0.0
        %3729 = vmatprep.subr.mxu0 0.0
        %3730 = vmatpush2.msra.mxu0 0.0
        %3731 = vmatprep.subr.mxu0 0.0
        %3732 = vmatpush2.msra.mxu0 0.0
        %3733 = vmatprep.subr.mxu0 0.0
        %3734 = vmatpush2.msra.mxu0 0.0
        %3735 = vmatprep.subr.mxu0 0.0
        %3736 = vmatpush2.msra.mxu0 0.0
        %3737 = vmatprep.subr.mxu0 0.0
        %3738 = vmatpush2.msra.mxu0 0.0
        %3739 = vmatprep.subr.mxu0 0.0
        %3740 = vmatpush2.msra.mxu0 0.0
        %3741 = vmatprep.subr.mxu0 0.0
        %3742 = vmatpush2.msra.mxu0 0.0
        %3743 = vmatprep.subr.mxu0 0.0
        %3744 = vmatpush2.msra.mxu0 0.0
        %3745 = vmatprep.subr.mxu0 0.0
        %3746 = vmatpush2.msra.mxu0 0.0
        %3747 = vmatprep.subr.mxu0 0.0
        %3748 = vmatpush2.msra.mxu0 0.0
        %3749 = vmatprep.subr.mxu0 0.0
        %3750 = vmatpush2.msra.mxu0 0.0
        %3751 = vmatprep.subr.mxu0 0.0
        %3752 = vmatpush2.msra.mxu0 0.0
        %3753 = vmatprep.subr.mxu0 0.0
        %3754 = vmatpush2.msra.mxu0 0.0
        %3755 = vmatprep.subr.mxu0 0.0
        %3756 = vmatpush2.msra.mxu0 0.0
        %3757 = vmatprep.subr.mxu0 0.0
        %3758 = vmatpush2.msra.mxu0 0.0
        %3759 = vmatprep.mubr.f32.mxu0 0.0
        %3760 = vmatmul.mubr.f32.gmra.mxu0 %v3684
        %v3761 = vpop.f32.mrf.mxu0
        %v3762 = vadd.f32 0.0, %v3761
        %v3763 = vpop.f32.mrf.mxu0
        %3764 = vmatprep.mubr.f32.mxu0 0.0
        %3765 = vmatmul.mubr.f32.gmra.mxu0 %v3687
        %v3766 = vpop.f32.mrf.mxu0
        %v3767 = vadd.f32 0.0, %v3766
        %v3768 = vpop.f32.mrf.mxu0
        %3769 = vmatprep.mubr.f32.mxu0 0.0
        %3770 = vmatmul.mubr.f32.gmra.mxu0 %v3690
        %v3771 = vpop.f32.mrf.mxu0
        %v3772 = vadd.f32 0.0, %v3771
        %v3773 = vpop.f32.mrf.mxu0
        %3774 = vmatprep.mubr.f32.mxu0 0.0
        %3775 = vmatmul.mubr.f32.gmra.mxu0 %v3693
        %v3776 = vpop.f32.mrf.mxu0
        %v3777 = vadd.f32 0.0, %v3776
        %v3778 = vpop.f32.mrf.mxu0
        %3779 = vdwg.mxu0
        %v3780 = vadd.f32 %v3668, %v3762
        %v3781 = vadd.f32 %v3669, %v3767
        %v3782 = vadd.f32 %v3670, %v3772
        %v3783 = vadd.f32 %v3671, %v3777
        %v3784 = vld [vmem:[%s3559 + $0x2] sm:$0xff]
        %v3785 = vld [vmem:[%s3559 + $0x12] sm:$0xff]
        %v3786 = vld [vmem:[%s3559 + $0x22] sm:$0xff]
        %v3787 = vld [vmem:[%s3559 + $0x32] sm:$0xff]
        %s3788 = scalar_lea.vmem [#allocation2], 1056
        %v3789 = vld [vmem:[%s3788] sm:$0xff]
        %v3790 = vld [vmem:[%s3788 + $0x8] sm:$0xff]
        %v3791 = vld [vmem:[%s3788 + $0x10] sm:$0xff]
        %v3792 = vld [vmem:[%s3788 + $0x18] sm:$0xff]
        %v3793 = vld [vmem:[%s3788 + $0x20] sm:$0xff]
        %v3794 = vld [vmem:[%s3788 + $0x28] sm:$0xff]
        %v3796 = vsel %vm319, %v3784, 0
        %v3799 = vsel %vm319, %v3785, 0
        %v3802 = vsel %vm319, %v3786, 0
        %v3805 = vsel %vm319, %v3787, 0
        %3807 = vmatprep.subr.mxu0 0.0
        %3808 = vmatpush1.msra.mxu0 0.0
        %3809 = vmatprep.subr.mxu0 0.0
        %3810 = vmatpush1.msra.mxu0 0.0
        %3811 = vmatprep.subr.mxu0 0.0
        %3812 = vmatpush1.msra.mxu0 0.0
        %3813 = vmatprep.subr.mxu0 0.0
        %3814 = vmatpush1.msra.mxu0 0.0
        %3815 = vmatprep.subr.mxu0 0.0
        %3816 = vmatpush1.msra.mxu0 0.0
        %3817 = vmatprep.subr.mxu0 0.0
        %3818 = vmatpush1.msra.mxu0 0.0
        %3819 = vmatprep.subr.mxu0 0.0
        %3820 = vmatpush1.msra.mxu0 0.0
        %3821 = vmatprep.subr.mxu0 0.0
        %3822 = vmatpush1.msra.mxu0 0.0
        %3823 = vmatprep.subr.mxu0 0.0
        %3824 = vmatpush1.msra.mxu0 0.0
        %3825 = vmatprep.subr.mxu0 0.0
        %3826 = vmatpush1.msra.mxu0 0.0
        %3827 = vmatprep.subr.mxu0 0.0
        %3828 = vmatpush1.msra.mxu0 %v3794
        %3829 = vmatprep.subr.mxu0 0.0
        %3830 = vmatpush1.msra.mxu0 %v3793
        %3831 = vmatprep.subr.mxu0 0.0
        %3832 = vmatpush1.msra.mxu0 %v3792
        %3833 = vmatprep.subr.mxu0 0.0
        %3834 = vmatpush1.msra.mxu0 %v3791
        %3835 = vmatprep.subr.mxu0 0.0
        %3836 = vmatpush1.msra.mxu0 %v3790
        %3837 = vmatprep.subr.mxu0 0.0
        %3838 = vmatpush1.msra.mxu0 %v3789
        %3839 = vmatprep.subr.mxu0 0.0
        %3840 = vmatpush2.msra.mxu0 0.0
        %3841 = vmatprep.subr.mxu0 0.0
        %3842 = vmatpush2.msra.mxu0 0.0
        %3843 = vmatprep.subr.mxu0 0.0
        %3844 = vmatpush2.msra.mxu0 0.0
        %3845 = vmatprep.subr.mxu0 0.0
        %3846 = vmatpush2.msra.mxu0 0.0
        %3847 = vmatprep.subr.mxu0 0.0
        %3848 = vmatpush2.msra.mxu0 0.0
        %3849 = vmatprep.subr.mxu0 0.0
        %3850 = vmatpush2.msra.mxu0 0.0
        %3851 = vmatprep.subr.mxu0 0.0
        %3852 = vmatpush2.msra.mxu0 0.0
        %3853 = vmatprep.subr.mxu0 0.0
        %3854 = vmatpush2.msra.mxu0 0.0
        %3855 = vmatprep.subr.mxu0 0.0
        %3856 = vmatpush2.msra.mxu0 0.0
        %3857 = vmatprep.subr.mxu0 0.0
        %3858 = vmatpush2.msra.mxu0 0.0
        %3859 = vmatprep.subr.mxu0 0.0
        %3860 = vmatpush2.msra.mxu0 0.0
        %3861 = vmatprep.subr.mxu0 0.0
        %3862 = vmatpush2.msra.mxu0 0.0
        %3863 = vmatprep.subr.mxu0 0.0
        %3864 = vmatpush2.msra.mxu0 0.0
        %3865 = vmatprep.subr.mxu0 0.0
        %3866 = vmatpush2.msra.mxu0 0.0
        %3867 = vmatprep.subr.mxu0 0.0
        %3868 = vmatpush2.msra.mxu0 0.0
        %3869 = vmatprep.subr.mxu0 0.0
        %3870 = vmatpush2.msra.mxu0 0.0
        %3871 = vmatprep.mubr.f32.mxu0 0.0
        %3872 = vmatmul.mubr.f32.gmra.mxu0 %v3796
        %v3873 = vpop.f32.mrf.mxu0
        %v3874 = vadd.f32 0.0, %v3873
        %v3875 = vpop.f32.mrf.mxu0
        %3876 = vmatprep.mubr.f32.mxu0 0.0
        %3877 = vmatmul.mubr.f32.gmra.mxu0 %v3799
        %v3878 = vpop.f32.mrf.mxu0
        %v3879 = vadd.f32 0.0, %v3878
        %v3880 = vpop.f32.mrf.mxu0
        %3881 = vmatprep.mubr.f32.mxu0 0.0
        %3882 = vmatmul.mubr.f32.gmra.mxu0 %v3802
        %v3883 = vpop.f32.mrf.mxu0
        %v3884 = vadd.f32 0.0, %v3883
        %v3885 = vpop.f32.mrf.mxu0
        %3886 = vmatprep.mubr.f32.mxu0 0.0
        %3887 = vmatmul.mubr.f32.gmra.mxu0 %v3805
        %v3888 = vpop.f32.mrf.mxu0
        %v3889 = vadd.f32 0.0, %v3888
        %v3890 = vpop.f32.mrf.mxu0
        %3891 = vdwg.mxu0
        %v3892 = vadd.f32 %v3780, %v3874
        %v3893 = vadd.f32 %v3781, %v3879
        %v3894 = vadd.f32 %v3782, %v3884
        %v3895 = vadd.f32 %v3783, %v3889
        %v3896 = vld [vmem:[%s3559 + $0x3] sm:$0xff]
        %v3897 = vld [vmem:[%s3559 + $0x13] sm:$0xff]
        %v3898 = vld [vmem:[%s3559 + $0x23] sm:$0xff]
        %v3899 = vld [vmem:[%s3559 + $0x33] sm:$0xff]
        %s3900 = scalar_lea.vmem [#allocation2], 1104
        %v3901 = vld [vmem:[%s3900] sm:$0xff]
        %v3902 = vld [vmem:[%s3900 + $0x8] sm:$0xff]
        %v3903 = vld [vmem:[%s3900 + $0x10] sm:$0xff]
        %v3904 = vld [vmem:[%s3900 + $0x18] sm:$0xff]
        %v3905 = vld [vmem:[%s3900 + $0x20] sm:$0xff]
        %v3906 = vld [vmem:[%s3900 + $0x28] sm:$0xff]
        %v3908 = vsel %vm319, %v3896, 0
        %v3911 = vsel %vm319, %v3897, 0
        %v3914 = vsel %vm319, %v3898, 0
        %v3917 = vsel %vm319, %v3899, 0
        %3919 = vmatprep.subr.mxu0 0.0
        %3920 = vmatpush1.msra.mxu0 0.0
        %3921 = vmatprep.subr.mxu0 0.0
        %3922 = vmatpush1.msra.mxu0 0.0
        %3923 = vmatprep.subr.mxu0 0.0
        %3924 = vmatpush1.msra.mxu0 0.0
        %3925 = vmatprep.subr.mxu0 0.0
        %3926 = vmatpush1.msra.mxu0 0.0
        %3927 = vmatprep.subr.mxu0 0.0
        %3928 = vmatpush1.msra.mxu0 0.0
        %3929 = vmatprep.subr.mxu0 0.0
        %3930 = vmatpush1.msra.mxu0 0.0
        %3931 = vmatprep.subr.mxu0 0.0
        %3932 = vmatpush1.msra.mxu0 0.0
        %3933 = vmatprep.subr.mxu0 0.0
        %3934 = vmatpush1.msra.mxu0 0.0
        %3935 = vmatprep.subr.mxu0 0.0
        %3936 = vmatpush1.msra.mxu0 0.0
        %3937 = vmatprep.subr.mxu0 0.0
        %3938 = vmatpush1.msra.mxu0 0.0
        %3939 = vmatprep.subr.mxu0 0.0
        %3940 = vmatpush1.msra.mxu0 %v3906
        %3941 = vmatprep.subr.mxu0 0.0
        %3942 = vmatpush1.msra.mxu0 %v3905
        %3943 = vmatprep.subr.mxu0 0.0
        %3944 = vmatpush1.msra.mxu0 %v3904
        %3945 = vmatprep.subr.mxu0 0.0
        %3946 = vmatpush1.msra.mxu0 %v3903
        %3947 = vmatprep.subr.mxu0 0.0
        %3948 = vmatpush1.msra.mxu0 %v3902
        %3949 = vmatprep.subr.mxu0 0.0
        %3950 = vmatpush1.msra.mxu0 %v3901
        %3951 = vmatprep.subr.mxu0 0.0
        %3952 = vmatpush2.msra.mxu0 0.0
        %3953 = vmatprep.subr.mxu0 0.0
        %3954 = vmatpush2.msra.mxu0 0.0
        %3955 = vmatprep.subr.mxu0 0.0
        %3956 = vmatpush2.msra.mxu0 0.0
        %3957 = vmatprep.subr.mxu0 0.0
        %3958 = vmatpush2.msra.mxu0 0.0
        %3959 = vmatprep.subr.mxu0 0.0
        %3960 = vmatpush2.msra.mxu0 0.0
        %3961 = vmatprep.subr.mxu0 0.0
        %3962 = vmatpush2.msra.mxu0 0.0
        %3963 = vmatprep.subr.mxu0 0.0
        %3964 = vmatpush2.msra.mxu0 0.0
        %3965 = vmatprep.subr.mxu0 0.0
        %3966 = vmatpush2.msra.mxu0 0.0
        %3967 = vmatprep.subr.mxu0 0.0
        %3968 = vmatpush2.msra.mxu0 0.0
        %3969 = vmatprep.subr.mxu0 0.0
        %3970 = vmatpush2.msra.mxu0 0.0
        %3971 = vmatprep.subr.mxu0 0.0
        %3972 = vmatpush2.msra.mxu0 0.0
        %3973 = vmatprep.subr.mxu0 0.0
        %3974 = vmatpush2.msra.mxu0 0.0
        %3975 = vmatprep.subr.mxu0 0.0
        %3976 = vmatpush2.msra.mxu0 0.0
        %3977 = vmatprep.subr.mxu0 0.0
        %3978 = vmatpush2.msra.mxu0 0.0
        %3979 = vmatprep.subr.mxu0 0.0
        %3980 = vmatpush2.msra.mxu0 0.0
        %3981 = vmatprep.subr.mxu0 0.0
        %3982 = vmatpush2.msra.mxu0 0.0
        %3983 = vmatprep.mubr.f32.mxu0 0.0
        %3984 = vmatmul.mubr.f32.gmra.mxu0 %v3908
        %v3985 = vpop.f32.mrf.mxu0
        %v3986 = vadd.f32 0.0, %v3985
        %v3987 = vpop.f32.mrf.mxu0
        %3988 = vmatprep.mubr.f32.mxu0 0.0
        %3989 = vmatmul.mubr.f32.gmra.mxu0 %v3911
        %v3990 = vpop.f32.mrf.mxu0
        %v3991 = vadd.f32 0.0, %v3990
        %v3992 = vpop.f32.mrf.mxu0
        %3993 = vmatprep.mubr.f32.mxu0 0.0
        %3994 = vmatmul.mubr.f32.gmra.mxu0 %v3914
        %v3995 = vpop.f32.mrf.mxu0
        %v3996 = vadd.f32 0.0, %v3995
        %v3997 = vpop.f32.mrf.mxu0
        %3998 = vmatprep.mubr.f32.mxu0 0.0
        %3999 = vmatmul.mubr.f32.gmra.mxu0 %v3917
        %v4000 = vpop.f32.mrf.mxu0
        %v4001 = vadd.f32 0.0, %v4000
        %v4002 = vpop.f32.mrf.mxu0
        %4003 = vdwg.mxu0
        %v4004 = vadd.f32 %v3892, %v3986
        %v4005 = vadd.f32 %v3893, %v3991
        %v4006 = vadd.f32 %v3894, %v3996
        %v4007 = vadd.f32 %v3895, %v4001
        %v4008 = vld [vmem:[%s3559 + $0x4] sm:$0xff]
        %v4009 = vld [vmem:[%s3559 + $0x14] sm:$0xff]
        %v4010 = vld [vmem:[%s3559 + $0x24] sm:$0xff]
        %v4011 = vld [vmem:[%s3559 + $0x34] sm:$0xff]
        %s4012 = scalar_lea.vmem [#allocation2], 1152
        %v4013 = vld [vmem:[%s4012] sm:$0xff]
        %v4014 = vld [vmem:[%s4012 + $0x8] sm:$0xff]
        %v4015 = vld [vmem:[%s4012 + $0x10] sm:$0xff]
        %v4016 = vld [vmem:[%s4012 + $0x18] sm:$0xff]
        %v4017 = vld [vmem:[%s4012 + $0x20] sm:$0xff]
        %v4018 = vld [vmem:[%s4012 + $0x28] sm:$0xff]
        %v4020 = vsel %vm319, %v4008, 0
        %v4023 = vsel %vm319, %v4009, 0
        %v4026 = vsel %vm319, %v4010, 0
        %v4029 = vsel %vm319, %v4011, 0
        %4031 = vmatprep.subr.mxu0 0.0
        %4032 = vmatpush1.msra.mxu0 0.0
        %4033 = vmatprep.subr.mxu0 0.0
        %4034 = vmatpush1.msra.mxu0 0.0
        %4035 = vmatprep.subr.mxu0 0.0
        %4036 = vmatpush1.msra.mxu0 0.0
        %4037 = vmatprep.subr.mxu0 0.0
        %4038 = vmatpush1.msra.mxu0 0.0
        %4039 = vmatprep.subr.mxu0 0.0
        %4040 = vmatpush1.msra.mxu0 0.0
        %4041 = vmatprep.subr.mxu0 0.0
        %4042 = vmatpush1.msra.mxu0 0.0
        %4043 = vmatprep.subr.mxu0 0.0
        %4044 = vmatpush1.msra.mxu0 0.0
        %4045 = vmatprep.subr.mxu0 0.0
        %4046 = vmatpush1.msra.mxu0 0.0
        %4047 = vmatprep.subr.mxu0 0.0
        %4048 = vmatpush1.msra.mxu0 0.0
        %4049 = vmatprep.subr.mxu0 0.0
        %4050 = vmatpush1.msra.mxu0 0.0
        %4051 = vmatprep.subr.mxu0 0.0
        %4052 = vmatpush1.msra.mxu0 %v4018
        %4053 = vmatprep.subr.mxu0 0.0
        %4054 = vmatpush1.msra.mxu0 %v4017
        %4055 = vmatprep.subr.mxu0 0.0
        %4056 = vmatpush1.msra.mxu0 %v4016
        %4057 = vmatprep.subr.mxu0 0.0
        %4058 = vmatpush1.msra.mxu0 %v4015
        %4059 = vmatprep.subr.mxu0 0.0
        %4060 = vmatpush1.msra.mxu0 %v4014
        %4061 = vmatprep.subr.mxu0 0.0
        %4062 = vmatpush1.msra.mxu0 %v4013
        %4063 = vmatprep.subr.mxu0 0.0
        %4064 = vmatpush2.msra.mxu0 0.0
        %4065 = vmatprep.subr.mxu0 0.0
        %4066 = vmatpush2.msra.mxu0 0.0
        %4067 = vmatprep.subr.mxu0 0.0
        %4068 = vmatpush2.msra.mxu0 0.0
        %4069 = vmatprep.subr.mxu0 0.0
        %4070 = vmatpush2.msra.mxu0 0.0
        %4071 = vmatprep.subr.mxu0 0.0
        %4072 = vmatpush2.msra.mxu0 0.0
        %4073 = vmatprep.subr.mxu0 0.0
        %4074 = vmatpush2.msra.mxu0 0.0
        %4075 = vmatprep.subr.mxu0 0.0
        %4076 = vmatpush2.msra.mxu0 0.0
        %4077 = vmatprep.subr.mxu0 0.0
        %4078 = vmatpush2.msra.mxu0 0.0
        %4079 = vmatprep.subr.mxu0 0.0
        %4080 = vmatpush2.msra.mxu0 0.0
        %4081 = vmatprep.subr.mxu0 0.0
        %4082 = vmatpush2.msra.mxu0 0.0
        %4083 = vmatprep.subr.mxu0 0.0
        %4084 = vmatpush2.msra.mxu0 0.0
        %4085 = vmatprep.subr.mxu0 0.0
        %4086 = vmatpush2.msra.mxu0 0.0
        %4087 = vmatprep.subr.mxu0 0.0
        %4088 = vmatpush2.msra.mxu0 0.0
        %4089 = vmatprep.subr.mxu0 0.0
        %4090 = vmatpush2.msra.mxu0 0.0
        %4091 = vmatprep.subr.mxu0 0.0
        %4092 = vmatpush2.msra.mxu0 0.0
        %4093 = vmatprep.subr.mxu0 0.0
        %4094 = vmatpush2.msra.mxu0 0.0
        %4095 = vmatprep.mubr.f32.mxu0 0.0
        %4096 = vmatmul.mubr.f32.gmra.mxu0 %v4020
        %v4097 = vpop.f32.mrf.mxu0
        %v4098 = vadd.f32 0.0, %v4097
        %v4099 = vpop.f32.mrf.mxu0
        %4100 = vmatprep.mubr.f32.mxu0 0.0
        %4101 = vmatmul.mubr.f32.gmra.mxu0 %v4023
        %v4102 = vpop.f32.mrf.mxu0
        %v4103 = vadd.f32 0.0, %v4102
        %v4104 = vpop.f32.mrf.mxu0
        %4105 = vmatprep.mubr.f32.mxu0 0.0
        %4106 = vmatmul.mubr.f32.gmra.mxu0 %v4026
        %v4107 = vpop.f32.mrf.mxu0
        %v4108 = vadd.f32 0.0, %v4107
        %v4109 = vpop.f32.mrf.mxu0
        %4110 = vmatprep.mubr.f32.mxu0 0.0
        %4111 = vmatmul.mubr.f32.gmra.mxu0 %v4029
        %v4112 = vpop.f32.mrf.mxu0
        %v4113 = vadd.f32 0.0, %v4112
        %v4114 = vpop.f32.mrf.mxu0
        %4115 = vdwg.mxu0
        %v4116 = vadd.f32 %v4004, %v4098
        %v4117 = vadd.f32 %v4005, %v4103
        %v4118 = vadd.f32 %v4006, %v4108
        %v4119 = vadd.f32 %v4007, %v4113
        %v4120 = vld [vmem:[%s4] sm:$0x1]
        %v4122 = vlaneseq
        %v4123 = vshrl.u32 %v4122, 7
        %v4124 = vsub.s32 0, %v4123
        %v4125 = vrot.slane %v4120, %v4124
        %v4127 = vadd.f32 %v4116, %v4125
        %v4128 = vadd.f32 %v4117, %v4125
        %v4129 = vadd.f32 %v4118, %v4125
        %v4130 = vadd.f32 %v4119, %v4125
        %4131 = vst.msk [vmem:[%s286] sm:$0xff] %vm1319, %v4127
        %4132 = vst.msk [vmem:[%s286 + $0x8] sm:$0xff] %vm1319, %v4128
        %4133 = vst.msk [vmem:[%s286 + $0x10] sm:$0xff] %vm1319, %v4129
        %4134 = vst.msk [vmem:[%s286 + $0x18] sm:$0xff] %vm1319, %v4130
        %s4135 = sand.u32 %s157, 1
        %s4136 = scalar_lea.sflag [#allocation4], %s4135
        %s4137 = sand.u32 %s157, 1
        %s4138 = smul.addr %s4137, 32
        %s4139 = scalar_lea.vmem [#allocation5], %s4138
        %s4140 = sand.u32 %s185, 1
        %s4141 = scalar_lea.sflag [#allocation7], %s4140
        %s4142 = sand.u32 %s185, 1
        %s4143 = smul.addr %s4142, 32
        %s4144 = scalar_lea.vmem [#allocation6], %s4143
        // Predicated region
        $region45: #{tpu_custom_call.1} parent=39 // pred_check
          %p4145 = pneg %p167
        $region46: #{tpu_custom_call.1} parent=39 // pred_check_branch
          %4147 = sbr.rel (%p4145) target = $region48
        $region47: #{tpu_custom_call.1} parent=39 // pred_region
          %s4148 = smul.u32 4, %s30
          %s4150 = ssub.s32 512, 512
          %4151 = vsyncadd %s4136, %s4150
          %s4152 = smul.addr %s29, 8
          %s4153 = sadd.s32 %s4148, %s4152
          %s4154 = smul.addr %s4153, 128
          %s4155 = scalar_lea.hbm %s5, %s4154
          %s4156 = sshll.u32 %s4139, 4
          %s4157 = int_to_ptr.vmem [resolvable:$true] %s4156
          %4162 = dma.vmem_to_hbm [thread:$0]  %s4157, 512, %s4155, %s4136, 128, 128, 8
        $region48: #{tpu_custom_call.1} parent=39 // pred_fallthru
          _
        // Predicated region
        $region49: #{tpu_custom_call.1} parent=39 // pred_check
          %p4163 = pneg %p195
        $region50: #{tpu_custom_call.1} parent=39 // pred_check_branch
          %4165 = sbr.rel (%p4163) target = $region52
        $region51: #{tpu_custom_call.1} parent=39 // pred_region
          %s4166 = smul.u32 4, %s30
          %s4168 = ssub.s32 512, 512
          %4169 = vsyncadd %s4141, %s4168
          %s4170 = smul.addr %s29, 8
          %s4171 = sadd.s32 %s4166, %s4170
          %s4172 = smul.addr %s4171, 128
          %s4173 = scalar_lea.hbm %s6, %s4172
          %s4174 = sshll.u32 %s4144, 4
          %s4175 = int_to_ptr.vmem [resolvable:$true] %s4174
          %4180 = dma.vmem_to_hbm [thread:$0]  %s4175, 512, %s4173, %s4141, 128, 128, 8
        $region52: #{tpu_custom_call.1} parent=39 // pred_fallthru
          _
      $region40: #{tpu_custom_call.1} parent=5 // pred_fallthru
        _
      %p4181 = scmp.le.s32.totalorder 2, %s20
      // Predicated region
      $region53: #{tpu_custom_call.1} parent=5 // pred_check
        %p4182 = pneg %p4181
      $region54: #{tpu_custom_call.1} parent=5 // pred_check_branch
        %4184 = sbr.rel (%p4182) target = $region56
      $region55: #{tpu_custom_call.1} parent=5 // pred_region
        %s4185 = ssub.s32 %s20, 2
        // Predicated region
        $region57: #{tpu_custom_call.1} parent=55 // pred_check
          %p4186 = pneg %p173
        $region58: #{tpu_custom_call.1} parent=55 // pred_check_branch
          %4188 = sbr.rel (%p4186) target = $region60
        $region59: #{tpu_custom_call.1} parent=55 // pred_region
          %s4189 = sand.u32 %s158, 1
          %s4190 = scalar_lea.sflag [#allocation4], %s4189
          %s4191 = sand.u32 %s158, 1
          %s4192 = smul.addr %s4191, 32
          %s4193 = scalar_lea.vmem [#allocation5], %s4192
          %4194 = dma.done %s4190, 512
        $region60: #{tpu_custom_call.1} parent=55 // pred_fallthru
          _
        // Predicated region
        $region61: #{tpu_custom_call.1} parent=55 // pred_check
          %p4195 = pneg %p201
        $region62: #{tpu_custom_call.1} parent=55 // pred_check_branch
          %4197 = sbr.rel (%p4195) target = $region64
        $region63: #{tpu_custom_call.1} parent=55 // pred_region
          %s4198 = sand.u32 %s186, 1
          %s4199 = scalar_lea.sflag [#allocation7], %s4198
          %s4200 = sand.u32 %s186, 1
          %s4201 = smul.addr %s4200, 32
          %s4202 = scalar_lea.vmem [#allocation6], %s4201
          %4203 = dma.done %s4199, 512
        $region64: #{tpu_custom_call.1} parent=55 // pred_fallthru
          _
      $region56: #{tpu_custom_call.1} parent=5 // pred_fallthru
        _
    $region6: #{tpu_custom_call.1} parent=1 // loop_footer
      %s24 = sadd.s32 1, %s20
    $region7: #{tpu_custom_call.1} parent=1 // loop_footer_branch
      %19 = sbr.rel target = $region3
    $region8: #{tpu_custom_call.1} parent=1 // loop_exit
      _
    %4204 = vsyncpa [#allocation3], 1
    %s4205 = scalar_lea.sflag [#allocation3], 1
    %4206 = vsyncpa %s4205, 1
    %4207 = vsyncpa [#allocation4], 1
    %s4208 = scalar_lea.sflag [#allocation4], 1
    %4209 = vsyncpa %s4208, 1
    %4210 = vsyncpa [#allocation7], 1
    %s4211 = scalar_lea.sflag [#allocation7], 1
    %4212 = vsyncpa %s4211, 1

</llo_original>
